<compile_context>
chip_gen: v5e
topology: v5e:2x2
jax: 0.10.0
libtpu: 0.0.40
codegen_flags: <defaults>
</compile_context>

<pallas_src>
import functools
import numpy as np
import jax
import jax.numpy as jnp
from jax.experimental import pallas as pl
from jax.experimental.pallas import tpu as pltpu


def _round_up(n, m):
    return (n + m - 1) // m * m


def _num_tensorcores():
    # v7x (and megacore v4/v5p) expose 2 TensorCores to one kernel; keeping
    # >= 2 grid steps lets dimension_semantics=("parallel",) use both.
    try:
        kind = str(getattr(jax.devices()[0], "device_kind", "")).lower()
    except Exception:
        return 1
    return 2 if any(t in kind for t in ("v7", "v4", "v5p")) else 1


# --------------------------------------------------------------------------
# Kernel
# --------------------------------------------------------------------------
def vqvae_kernel(x_ref, eps_ref, p_ref, pred_ref, sq_ref, idx_ref, *,
                 enc_specs, head_spec, embt2_row, emb2_row, e2_row, dec_specs,
                 num_emb, latent_dim, batch, block_b):
    f32 = jnp.float32
    K, L = num_emb, latent_dim
    bb2 = x_ref.shape[0]                      # packed rows = 2 samples per row

    def linear(h, spec):
        row, fin, fout = spec
        w = p_ref[row:row + fin, :fout]                  # [fin, fout] slab slice
        b = p_ref[row + fin:row + fin + 1, :fout]        # [1, fout]   bias row
        return jnp.dot(h, w, preferred_element_type=f32) + b

    # ---- Encoder MLP (block-diagonal weights process both packed samples) ----
    h = x_ref[...]                                        # [bb2, 2*input_dim]
    for spec in enc_specs:
        h = jnp.maximum(linear(h, spec), 0.0)

    # ---- Merged head: columns [mean_a, mean_b | logvar_a, logvar_b] ----
    head = linear(h, head_spec)                           # [bb2, 4L]
    mean = head[:, :2 * L]
    log_var = jnp.clip(head[:, 2 * L:4 * L], -10.0, 10.0)
    z = mean + jnp.exp(0.5 * log_var) * eps_ref[...]      # [bb2, 2L]

    # ---- Vector quantization (both packed samples at once) ----
    embt2 = p_ref[embt2_row:embt2_row + 2 * L, :2 * K]    # [2L, 2K] block-diag emb^T
    emb2 = p_ref[emb2_row:emb2_row + 2 * K, :2 * L]       # [2K, 2L] block-diag emb
    e2 = p_ref[e2_row:e2_row + 1, :2 * K]                 # [1, 2K]  hoisted |e_k|^2
    # argmin_k |z - e_k|^2 == argmin_k (|e_k|^2 - 2 z.e_k); |z|^2 is constant in k.
    # NOTE: NaN/Inf in z would fall through to the sentinel code K (finite inputs assumed).
    score = e2 - 2.0 * jnp.dot(z, embt2, preferred_element_type=f32)   # [bb2, 2K]
    lane = jax.lax.broadcasted_iota(jnp.int32, score.shape, 1)
    half_b = lane >= K                                    # True on sample-b columns
    code = lane - K * half_b.astype(jnp.int32)            # code index within each half
    min_a = jnp.min(jnp.where(half_b, jnp.inf, score), axis=1, keepdims=True)
    min_b = jnp.min(jnp.where(half_b, score, jnp.inf), axis=1, keepdims=True)
    # first-minimum index per sample (matches torch.argmin tie-breaking)
    idx_a = jnp.min(jnp.where((~half_b) & (score <= min_a), code, K),
                    axis=1, keepdims=True)
    idx_b = jnp.min(jnp.where(half_b & (score <= min_b), code, K),
                    axis=1, keepdims=True)
    idx_sel = jnp.where(half_b, idx_b, idx_a)
    onehot = (code == idx_sel).astype(f32)                              # [bb2, 2K]
    z_q = jnp.dot(onehot, emb2, preferred_element_type=f32)             # [bb2, 2L]

    pair = jax.lax.broadcasted_iota(jnp.int32, (bb2, 2), 1)
    idx_ref[...] = jnp.where(pair == 0, idx_a, idx_b)                   # [bb2, 2]

    # Per-block partial sum of |z_q - z|^2 (wrapper finishes mean / (1+cc) scale).
    diff = z_q - z
    if batch % block_b != 0:
        # Mask padded rows (can only exist in the last block; static condition).
        vlane = jax.lax.broadcasted_iota(jnp.int32, diff.shape, 1)
        row = jax.lax.broadcasted_iota(jnp.int32, diff.shape, 0)
        g = pl.program_id(0) * block_b + 2 * row + (vlane >= L).astype(jnp.int32)
        diff = jnp.where(g < batch, diff, 0.0)
    sq = jnp.sum(diff * diff, axis=1, keepdims=True)                    # [bb2, 1]
    sq_ref[0] = jnp.sum(sq, axis=0, keepdims=True)                      # (1, 1)

    # ---- Decoder MLP on z_q (straight-through forward value) ----
    h = z_q
    last = len(dec_specs) - 1
    for li, spec in enumerate(dec_specs):
        h = linear(h, spec)
        if li != last:
            h = jnp.maximum(h, 0.0)
    pred_ref[...] = h                                     # [bb2, 2*input_dim] lane-dense


# --------------------------------------------------------------------------
# Parameter packing: one lane-dense [rows, slab_w] f32 slab, static offsets.
# All weights are stored in 2-samples-per-row block-diagonal form.
# --------------------------------------------------------------------------
def _block_diag2(W):
    fin, fout = W.shape
    z = jnp.zeros((fin, fout), W.dtype)
    top = jnp.concatenate([W, z], axis=1)
    bot = jnp.concatenate([z, W], axis=1)
    return jnp.concatenate([top, bot], axis=0)


def _pack_params(enc_params, emb, dec_params, slab_w):
    parts, offset = [], 0

    def add_block(arr):
        nonlocal offset
        arr = jnp.asarray(arr, jnp.float32)
        rows = _round_up(arr.shape[0], 8)
        parts.append(jnp.pad(arr, ((0, rows - arr.shape[0]),
                                   (0, slab_w - arr.shape[1]))))
        start = offset
        offset += rows
        return start

    def add_linear(W, b):
        W = jnp.asarray(W, jnp.float32)
        b = jnp.reshape(jnp.asarray(b, jnp.float32), (1, -1))
        Wp = _block_diag2(W)
        bp = jnp.concatenate([b, b], axis=1)
        start = add_block(jnp.concatenate([Wp, bp], axis=0))
        return (start, Wp.shape[0], Wp.shape[1])

    K, L = emb.shape
    enc_specs = [add_linear(W, b) for W, b in enc_params[:3]]

    # Merged reparameterization head: columns [mean_a, mean_b, logvar_a, logvar_b].
    W4, b4 = enc_params[3]
    W4 = jnp.asarray(W4, jnp.float32)
    b4 = jnp.reshape(jnp.asarray(b4, jnp.float32), (1, -1))
    Wh = jnp.concatenate([_block_diag2(W4[:, :L]), _block_diag2(W4[:, L:])], axis=1)
    bh = jnp.concatenate([b4[:, :L], b4[:, :L], b4[:, L:], b4[:, L:]], axis=1)
    head_spec = (add_block(jnp.concatenate([Wh, bh], axis=0)),
                 Wh.shape[0], Wh.shape[1])

    emb = jnp.asarray(emb, jnp.float32)
    embt2_row = add_block(_block_diag2(emb.T))                      # [2L, 2K]
    emb2_row = add_block(_block_diag2(emb))                         # [2K, 2L]
    e2 = jnp.sum(emb * emb, axis=1)[None, :]                        # [1, K]
    e2_row = add_block(jnp.concatenate([e2, e2], axis=1))           # [1, 2K]

    dec_specs = [add_linear(W, b) for W, b in dec_params]

    slab = jnp.concatenate(parts, axis=0)
    layout = dict(enc_specs=tuple(enc_specs), head_spec=head_spec,
                  embt2_row=embt2_row, emb2_row=emb2_row, e2_row=e2_row,
                  dec_specs=tuple(dec_specs))
    return slab, layout


# --------------------------------------------------------------------------
# Wrapper
# --------------------------------------------------------------------------
def vqvae_forward(x, eps, enc_params, emb, dec_params, commitment_cost,
                  block_b=1024):
    """Fused VQVAE forward: returns (pred_x, vq_loss, indices)."""
    B, input_dim = x.shape
    K, L = emb.shape

    widths = [4 * L, 2 * K, 2 * L] + [2 * W.shape[1] for W, _ in enc_params] \
             + [2 * W.shape[1] for W, _ in dec_params]
    slab_w = _round_up(max(widths), 128)
    slab, layout = _pack_params(enc_params, emb, dec_params, slab_w)

    # --- batch tiling: block_b original rows == block_b // 2 packed rows ---
    block_b = max(16, (int(block_b) // 16) * 16)
    B_even = _round_up(B, 16)
    if _num_tensorcores() >= 2 and B_even >= 32:
        # keep >= 2 grid steps so both TensorCores get work (v7x / megacore)
        block_b = min(block_b, _round_up(B_even // 2, 16))
    else:
        # single TensorCore: let the grid collapse to one step when it fits
        block_b = min(block_b, B_even)
    B_pad = _round_up(B, block_b)
    nblk = B_pad // block_b
    bb2 = block_b // 2

    xp, ep = x, eps
    if B_pad != B:
        xp = jnp.pad(xp, ((0, B_pad - B), (0, 0)))
        ep = jnp.pad(ep, ((0, B_pad - B), (0, 0)))
    # contiguous "2 rows per 128-lane row" views
    xp = jnp.reshape(xp, (B_pad // 2, 2 * input_dim))
    ep = jnp.reshape(ep, (B_pad // 2, 2 * L))

    kernel = functools.partial(vqvae_kernel, num_emb=K, latent_dim=L,
                               batch=B, block_b=block_b, **layout)

    pred_p, sq, idx = pl.pallas_call(
        kernel,
        grid=(nblk,),
        in_specs=[
            pl.BlockSpec((bb2, 2 * input_dim), lambda i: (i, 0)),   # packed x tile
            pl.BlockSpec((bb2, 2 * L), lambda i: (i, 0)),           # packed eps tile
            pl.BlockSpec(slab.shape, lambda i: (0, 0)),             # resident param slab
        ],
        out_specs=(
            pl.BlockSpec((bb2, 2 * input_dim), lambda i: (i, 0)),   # packed pred (lane-dense)
            pl.BlockSpec((1, 1, 1), lambda i: (i, 0, 0)),           # per-block sum |z_q-z|^2
            pl.BlockSpec((bb2, 2), lambda i: (i, 0)),               # code indices
        ),
        out_shape=(
            jax.ShapeDtypeStruct((B_pad // 2, 2 * input_dim), jnp.float32),
            jax.ShapeDtypeStruct((nblk, 1, 1), jnp.float32),
            jax.ShapeDtypeStruct((B_pad // 2, 2), jnp.int32),
        ),
        compiler_params=pltpu.CompilerParams(
            dimension_semantics=("parallel",)),
    )(xp, ep, slab)

    pred = jnp.reshape(pred_p, (B_pad, input_dim))
    indices = jnp.reshape(idx, (-1,))
    if B_pad != B:
        pred = pred[:B]
        indices = indices[:B]
    # vq_loss = mse(z_q, z) + cc * mse(z, z_q) = (1 + cc) * mean(|z_q - z|^2)
    vq_loss = (1.0 + float(commitment_cost)) * jnp.sum(sq) / (B * L)
    return pred, vq_loss, indices


# ---------------- pure-JAX reference (mirrors the PyTorch forward) ----------------
def ref_forward(x, eps, enc_params, emb, dec_params, cc):
    h = x
    for i, (W, b) in enumerate(enc_params):
        h = h @ W + b
        if i < 3:
            h = jnp.maximum(h, 0.0)
    L = emb.shape[1]
    mean, log_var = h[:, :L], jnp.clip(h[:, L:], -10.0, 10.0)
    z = mean + jnp.exp(0.5 * log_var) * eps
    dist = jnp.sum((z[:, None, :] - emb[None, :, :]) ** 2, axis=2)
    idx = jnp.argmin(dist, axis=1)
    z_q = emb[idx]
    mse = jnp.mean((z_q - z) ** 2)
    vq_loss = mse + cc * mse
    h = z_q
    for i, (W, b) in enumerate(dec_params):
        h = h @ W + b
        if i < 3:
            h = jnp.maximum(h, 0.0)
    return h, vq_loss, idx, dist


def linear_params(key, fan_in, fan_out):
    k1, k2 = jax.random.split(key)
    bound = 1.0 / float(np.sqrt(fan_in))
    W = jax.random.uniform(k1, (fan_in, fan_out), jnp.float32, -bound, bound)
    b = jax.random.uniform(k2, (1, fan_out), jnp.float32, -bound, bound)
    return W, b


if __name__ == "__main__":
    # config: input_dim=64, latent_dim=embedding_dim=8, num_embeddings=16
    B, input_dim, latent_dim = 512, 64, 8
    num_embeddings, commitment_cost = 16, 0.25

    key = jax.random.PRNGKey(0)
    keys = jax.random.split(key, 12)

    x = jax.random.normal(keys[0], (B, input_dim), jnp.float32)
    eps = jax.random.normal(keys[1], (B, latent_dim), jnp.float32)

    enc_dims = [input_dim, input_dim // 2, input_dim // 4, input_dim // 8,
                latent_dim * 2]
    enc_params = [linear_params(keys[2 + i], enc_dims[i], enc_dims[i + 1])
                  for i in range(4)]

    emb = jax.random.uniform(keys[6], (num_embeddings, latent_dim), jnp.float32,
                             -1.0 / num_embeddings, 1.0 / num_embeddings)

    dec_dims = [latent_dim, latent_dim * 2, latent_dim * 4, latent_dim * 8,
                input_dim]
    dec_params = [linear_params(keys[7 + i], dec_dims[i], dec_dims[i + 1])
                  for i in range(4)]

    pred, vq_loss, indices = vqvae_forward(x, eps, enc_params, emb, dec_params,
                                           commitment_cost, block_b=1024)
    jax.block_until_ready((pred, vq_loss, indices))

    pred_r, loss_r, idx_r, dist_r = ref_forward(x, eps, enc_params, emb,
                                                dec_params, commitment_cost)

    idx_np = np.asarray(indices)
    idxr_np = np.asarray(idx_r)
    match = idx_np == idxr_np
    if not match.all():
        # Tolerate disagreements only at numerical near-ties of the reference
        # distances (kernel uses the expanded-distance form).
        d = np.asarray(dist_r)
        gap = np.take_along_axis(d, idx_np[:, None], axis=1)[:, 0] - d.min(axis=1)
        assert match.mean() > 0.9, "too many argmin mismatches"
        assert float(np.max(gap[~match])) < 5e-3, \
            "argmin mismatch beyond FP near-tie tolerance"
    np.testing.assert_allclose(np.asarray(pred)[match], np.asarray(pred_r)[match],
                               rtol=2e-3, atol=2e-4)
    np.testing.assert_allclose(float(vq_loss), float(loss_r),
                               rtol=1e-3, atol=1e-5)

    print("KERNEL_OK")
</pallas_src>

<mosaic_0001>
module attributes {stable_mosaic.version = 11 : i64} {
  func.func @vqvae_kernel(%arg0: i32, %arg1: memref<256x128xf32, #tpu.memory_space<vmem>>, %arg2: memref<256x16xf32, #tpu.memory_space<vmem>>, %arg3: memref<600x128xf32, #tpu.memory_space<vmem>>, %arg4: memref<256x128xf32, #tpu.memory_space<vmem>>, %arg5: memref<1x1x1xf32, #tpu.memory_space<vmem>>, %arg6: memref<256x2xi32, #tpu.memory_space<vmem>>) attributes {dimension_semantics = [#tpu.dimension_semantics<parallel>], iteration_bounds = array<i64: 1>, scalar_prefetch = 0 : i64, scratch_operands = 0 : i64, tpu.core_type = #tpu.core_type<tc>, window_params = [{transform_indices = @transform_0, window_bounds = array<i64: 256, 128>}, {transform_indices = @transform_1, window_bounds = array<i64: 256, 16>}, {pipeline_mode = #tpu.pipeline_mode<synchronous>, transform_indices = @transform_2, window_bounds = array<i64: 600, 128>}, {transform_indices = @transform_3, window_bounds = array<i64: 256, 128>}, {transform_indices = @transform_4, window_bounds = array<i64: 1, 1, 1>}, {transform_indices = @transform_5, window_bounds = array<i64: 256, 2>}]} {
    %c0 = arith.constant 0 : index
    %c0_0 = arith.constant 0 : index
    %0 = vector.load %arg1[%c0, %c0_0] : memref<256x128xf32, #tpu.memory_space<vmem>>, vector<256x128xf32>
    %c0_1 = arith.constant 0 : index
    %c0_2 = arith.constant 0 : index
    %1 = vector.load %arg3[%c0_1, %c0_2] : memref<600x128xf32, #tpu.memory_space<vmem>>, vector<128x64xf32>
    %c128 = arith.constant 128 : index
    %c0_3 = arith.constant 0 : index
    %2 = vector.load %arg3[%c128, %c0_3] : memref<600x128xf32, #tpu.memory_space<vmem>>, vector<1x64xf32>
    %cst = arith.constant dense<0.000000e+00> : vector<256x64xf32>
    %3 = tpu.matmul %0, %1, %cst {dimension_numbers = #tpu.dot_dimension_numbers<[1], [0], [0], [1], [0, 0, 1, 1], [], []>} : vector<256x128xf32>, vector<128x64xf32>, vector<256x64xf32> -> vector<256x64xf32>
    %4 = vector.broadcast %2 : vector<1x64xf32> to vector<256x64xf32>
    %5 = arith.addf %3, %4 : vector<256x64xf32>
    %cst_4 = arith.constant 0.000000e+00 : f32
    %6 = vector.broadcast %cst_4 : f32 to vector<256x64xf32>
    %7 = arith.maximumf %5, %6 : vector<256x64xf32>
    %c136 = arith.constant 136 : index
    %c0_5 = arith.constant 0 : index
    %8 = vector.load %arg3[%c136, %c0_5] : memref<600x128xf32, #tpu.memory_space<vmem>>, vector<64x32xf32>
    %c200 = arith.constant 200 : index
    %c0_6 = arith.constant 0 : index
    %9 = vector.load %arg3[%c200, %c0_6] : memref<600x128xf32, #tpu.memory_space<vmem>>, vector<1x32xf32>
    %cst_7 = arith.constant dense<0.000000e+00> : vector<256x32xf32>
    %10 = tpu.matmul %7, %8, %cst_7 {dimension_numbers = #tpu.dot_dimension_numbers<[1], [0], [0], [1], [0, 0, 1, 1], [], []>} : vector<256x64xf32>, vector<64x32xf32>, vector<256x32xf32> -> vector<256x32xf32>
    %11 = vector.broadcast %9 : vector<1x32xf32> to vector<256x32xf32>
    %12 = arith.addf %10, %11 : vector<256x32xf32>
    %cst_8 = arith.constant 0.000000e+00 : f32
    %13 = vector.broadcast %cst_8 : f32 to vector<256x32xf32>
    %14 = arith.maximumf %12, %13 : vector<256x32xf32>
    %c208 = arith.constant 208 : index
    %c0_9 = arith.constant 0 : index
    %15 = vector.load %arg3[%c208, %c0_9] : memref<600x128xf32, #tpu.memory_space<vmem>>, vector<32x16xf32>
    %c240 = arith.constant 240 : index
    %c0_10 = arith.constant 0 : index
    %16 = vector.load %arg3[%c240, %c0_10] : memref<600x128xf32, #tpu.memory_space<vmem>>, vector<1x16xf32>
    %cst_11 = arith.constant dense<0.000000e+00> : vector<256x16xf32>
    %17 = tpu.matmul %14, %15, %cst_11 {dimension_numbers = #tpu.dot_dimension_numbers<[1], [0], [0], [1], [0, 0, 1, 1], [], []>} : vector<256x32xf32>, vector<32x16xf32>, vector<256x16xf32> -> vector<256x16xf32>
    %18 = vector.broadcast %16 : vector<1x16xf32> to vector<256x16xf32>
    %19 = arith.addf %17, %18 : vector<256x16xf32>
    %cst_12 = arith.constant 0.000000e+00 : f32
    %20 = vector.broadcast %cst_12 : f32 to vector<256x16xf32>
    %21 = arith.maximumf %19, %20 : vector<256x16xf32>
    %c248 = arith.constant 248 : index
    %c0_13 = arith.constant 0 : index
    %22 = vector.load %arg3[%c248, %c0_13] : memref<600x128xf32, #tpu.memory_space<vmem>>, vector<16x32xf32>
    %c264 = arith.constant 264 : index
    %c0_14 = arith.constant 0 : index
    %23 = vector.load %arg3[%c264, %c0_14] : memref<600x128xf32, #tpu.memory_space<vmem>>, vector<1x32xf32>
    %cst_15 = arith.constant dense<0.000000e+00> : vector<256x32xf32>
    %24 = tpu.matmul %21, %22, %cst_15 {dimension_numbers = #tpu.dot_dimension_numbers<[1], [0], [0], [1], [0, 0, 1, 1], [], []>} : vector<256x16xf32>, vector<16x32xf32>, vector<256x32xf32> -> vector<256x32xf32>
    %25 = vector.broadcast %23 : vector<1x32xf32> to vector<256x32xf32>
    %26 = arith.addf %24, %25 : vector<256x32xf32>
    %27 = vector.extract_strided_slice %26 {offsets = [0, 0], sizes = [256, 16], strides = [1, 1]} : vector<256x32xf32> to vector<256x16xf32>
    %28 = vector.extract_strided_slice %26 {offsets = [0, 16], sizes = [256, 16], strides = [1, 1]} : vector<256x32xf32> to vector<256x16xf32>
    %cst_16 = arith.constant -1.000000e+01 : f32
    %cst_17 = arith.constant 1.000000e+01 : f32
    %29 = vector.broadcast %cst_16 : f32 to vector<256x16xf32>
    %30 = arith.maximumf %29, %28 : vector<256x16xf32>
    %31 = vector.broadcast %cst_17 : f32 to vector<256x16xf32>
    %32 = arith.minimumf %31, %30 : vector<256x16xf32>
    %cst_18 = arith.constant 5.000000e-01 : f32
    %33 = vector.broadcast %cst_18 : f32 to vector<256x16xf32>
    %34 = arith.mulf %33, %32 : vector<256x16xf32>
    %35 = math.exp %34 : vector<256x16xf32>
    %c0_19 = arith.constant 0 : index
    %c0_20 = arith.constant 0 : index
    %36 = vector.load %arg2[%c0_19, %c0_20] : memref<256x16xf32, #tpu.memory_space<vmem>>, vector<256x16xf32>
    %37 = arith.mulf %35, %36 : vector<256x16xf32>
    %38 = arith.addf %27, %37 : vector<256x16xf32>
    %c272 = arith.constant 272 : index
    %c0_21 = arith.constant 0 : index
    %39 = vector.load %arg3[%c272, %c0_21] : memref<600x128xf32, #tpu.memory_space<vmem>>, vector<16x32xf32>
    %c288 = arith.constant 288 : index
    %c0_22 = arith.constant 0 : index
    %40 = vector.load %arg3[%c288, %c0_22] : memref<600x128xf32, #tpu.memory_space<vmem>>, vector<32x16xf32>
    %c320 = arith.constant 320 : index
    %c0_23 = arith.constant 0 : index
    %41 = vector.load %arg3[%c320, %c0_23] : memref<600x128xf32, #tpu.memory_space<vmem>>, vector<1x32xf32>
    %cst_24 = arith.constant dense<0.000000e+00> : vector<256x32xf32>
    %42 = tpu.matmul %38, %39, %cst_24 {dimension_numbers = #tpu.dot_dimension_numbers<[1], [0], [0], [1], [0, 0, 1, 1], [], []>} : vector<256x16xf32>, vector<16x32xf32>, vector<256x32xf32> -> vector<256x32xf32>
    %cst_25 = arith.constant 2.000000e+00 : f32
    %43 = vector.broadcast %cst_25 : f32 to vector<256x32xf32>
    %44 = arith.mulf %43, %42 : vector<256x32xf32>
    %45 = vector.broadcast %41 : vector<1x32xf32> to vector<256x32xf32>
    %46 = arith.subf %45, %44 : vector<256x32xf32>
    %47 = tpu.iota {dimensions = array<i32: 1>} : vector<256x32xi32>
    %c16_i32 = arith.constant 16 : i32
    %48 = vector.broadcast %c16_i32 : i32 to vector<256x32xi32>
    %49 = arith.cmpi sge, %47, %48 : vector<256x32xi32>
    %50 = arith.extui %49 : vector<256x32xi1> to vector<256x32xi32>
    %c16_i32_26 = arith.constant 16 : i32
    %51 = vector.broadcast %c16_i32_26 : i32 to vector<256x32xi32>
    %52 = arith.muli %51, %50 : vector<256x32xi32>
    %53 = arith.subi %47, %52 : vector<256x32xi32>
    %cst_27 = arith.constant 0x7F800000 : f32
    %54 = vector.broadcast %cst_27 : f32 to vector<256x32xf32>
    %55 = arith.select %49, %54, %46 : vector<256x32xi1>, vector<256x32xf32>
    %cst_28 = arith.constant dense<0x7F800000> : vector<256xf32>
    %56 = vector.multi_reduction <minimumf>, %55, %cst_28 [1] : vector<256x32xf32> to vector<256xf32>
    %57 = vector.shape_cast %56 : vector<256xf32> to vector<256x1xf32>
    %cst_29 = arith.constant 0x7F800000 : f32
    %58 = vector.broadcast %cst_29 : f32 to vector<256x32xf32>
    %59 = arith.select %49, %46, %58 : vector<256x32xi1>, vector<256x32xf32>
    %cst_30 = arith.constant dense<0x7F800000> : vector<256xf32>
    %60 = vector.multi_reduction <minimumf>, %59, %cst_30 [1] : vector<256x32xf32> to vector<256xf32>
    %61 = vector.shape_cast %60 : vector<256xf32> to vector<256x1xf32>
    %cst_31 = arith.constant dense<true> : vector<256x32xi1>
    %62 = arith.xori %49, %cst_31 : vector<256x32xi1>
    %63 = vector.broadcast %57 : vector<256x1xf32> to vector<256x32xf32>
    %64 = arith.cmpf ole, %46, %63 : vector<256x32xf32>
    %65 = arith.andi %62, %64 : vector<256x32xi1>
    %c16_i32_32 = arith.constant 16 : i32
    %66 = vector.broadcast %c16_i32_32 : i32 to vector<256x32xi32>
    %67 = arith.select %65, %53, %66 : vector<256x32xi1>, vector<256x32xi32>
    %cst_33 = arith.constant dense<2147483647> : vector<256xi32>
    %68 = vector.multi_reduction <minsi>, %67, %cst_33 [1] : vector<256x32xi32> to vector<256xi32>
    %69 = vector.shape_cast %68 : vector<256xi32> to vector<256x1xi32>
    %70 = vector.broadcast %61 : vector<256x1xf32> to vector<256x32xf32>
    %71 = arith.cmpf ole, %46, %70 : vector<256x32xf32>
    %72 = arith.andi %49, %71 : vector<256x32xi1>
    %c16_i32_34 = arith.constant 16 : i32
    %73 = vector.broadcast %c16_i32_34 : i32 to vector<256x32xi32>
    %74 = arith.select %72, %53, %73 : vector<256x32xi1>, vector<256x32xi32>
    %cst_35 = arith.constant dense<2147483647> : vector<256xi32>
    %75 = vector.multi_reduction <minsi>, %74, %cst_35 [1] : vector<256x32xi32> to vector<256xi32>
    %76 = vector.shape_cast %75 : vector<256xi32> to vector<256x1xi32>
    %77 = vector.shape_cast %76 : vector<256x1xi32> to vector<256x1xi32>
    %78 = vector.broadcast %77 : vector<256x1xi32> to vector<256x32xi32>
    %79 = vector.shape_cast %69 : vector<256x1xi32> to vector<256x1xi32>
    %80 = vector.broadcast %79 : vector<256x1xi32> to vector<256x32xi32>
    %81 = arith.select %49, %78, %80 : vector<256x32xi1>, vector<256x32xi32>
    %82 = arith.cmpi eq, %53, %81 : vector<256x32xi32>
    %83 = arith.extui %82 : vector<256x32xi1> to vector<256x32xi32>
    %84 = arith.sitofp %83 : vector<256x32xi32> to vector<256x32xf32>
    %cst_36 = arith.constant dense<0.000000e+00> : vector<256x16xf32>
    %85 = tpu.matmul %84, %40, %cst_36 {dimension_numbers = #tpu.dot_dimension_numbers<[1], [0], [0], [1], [0, 0, 1, 1], [], []>} : vector<256x32xf32>, vector<32x16xf32>, vector<256x16xf32> -> vector<256x16xf32>
    %86 = tpu.iota {dimensions = array<i32: 1>} : vector<256x2xi32>
    %c0_i32 = arith.constant 0 : i32
    %87 = vector.broadcast %c0_i32 : i32 to vector<256x2xi32>
    %88 = arith.cmpi eq, %86, %87 : vector<256x2xi32>
    %89 = vector.shape_cast %69 : vector<256x1xi32> to vector<256x1xi32>
    %90 = vector.broadcast %89 : vector<256x1xi32> to vector<256x2xi32>
    %91 = vector.shape_cast %76 : vector<256x1xi32> to vector<256x1xi32>
    %92 = vector.broadcast %91 : vector<256x1xi32> to vector<256x2xi32>
    %93 = arith.select %88, %90, %92 : vector<256x2xi1>, vector<256x2xi32>
    %c0_37 = arith.constant 0 : index
    %c0_38 = arith.constant 0 : index
    %94 = vector.load %arg6[%c0_37, %c0_38] : memref<256x2xi32, #tpu.memory_space<vmem>>, vector<256x2xi32>
    tpu.vector_store %arg6[%c0_37, %c0_38], %93 {strides = array<i32>} : memref<256x2xi32, #tpu.memory_space<vmem>>, vector<256x2xi32>,
    %95 = arith.subf %85, %38 : vector<256x16xf32>
    %96 = arith.mulf %95, %95 : vector<256x16xf32>
    %cst_39 = arith.constant dense<0.000000e+00> : vector<256xf32>
    %97 = vector.multi_reduction <add>, %96, %cst_39 [1] : vector<256x16xf32> to vector<256xf32>
    %98 = vector.shape_cast %97 : vector<256xf32> to vector<256x1xf32>
    %cst_40 = arith.constant dense<0.000000e+00> : vector<1xf32>
    %99 = vector.multi_reduction <add>, %98, %cst_40 [0] : vector<256x1xf32> to vector<1xf32>
    %100 = vector.shape_cast %99 : vector<1xf32> to vector<1x1xf32>
    %c0_41 = arith.constant 0 : index
    %c0_42 = arith.constant 0 : index
    %c0_43 = arith.constant 0 : index
    %101 = vector.load %arg5[%c0_41, %c0_42, %c0_43] : memref<1x1x1xf32, #tpu.memory_space<vmem>>, vector<1x1x1xf32>
    %102 = vector.shape_cast %101 : vector<1x1x1xf32> to vector<1x1xf32>
    %103 = vector.shape_cast %100 : vector<1x1xf32> to vector<1x1x1xf32>
    tpu.vector_store %arg5[%c0_41, %c0_42, %c0_43], %103 {strides = array<i32>} : memref<1x1x1xf32, #tpu.memory_space<vmem>>, vector<1x1x1xf32>,
    %c328 = arith.constant 328 : index
    %c0_44 = arith.constant 0 : index
    %104 = vector.load %arg3[%c328, %c0_44] : memref<600x128xf32, #tpu.memory_space<vmem>>, vector<16x32xf32>
    %c344 = arith.constant 344 : index
    %c0_45 = arith.constant 0 : index
    %105 = vector.load %arg3[%c344, %c0_45] : memref<600x128xf32, #tpu.memory_space<vmem>>, vector<1x32xf32>
    %cst_46 = arith.constant dense<0.000000e+00> : vector<256x32xf32>
    %106 = tpu.matmul %85, %104, %cst_46 {dimension_numbers = #tpu.dot_dimension_numbers<[1], [0], [0], [1], [0, 0, 1, 1], [], []>} : vector<256x16xf32>, vector<16x32xf32>, vector<256x32xf32> -> vector<256x32xf32>
    %107 = vector.broadcast %105 : vector<1x32xf32> to vector<256x32xf32>
    %108 = arith.addf %106, %107 : vector<256x32xf32>
    %cst_47 = arith.constant 0.000000e+00 : f32
    %109 = vector.broadcast %cst_47 : f32 to vector<256x32xf32>
    %110 = arith.maximumf %108, %109 : vector<256x32xf32>
    %c352 = arith.constant 352 : index
    %c0_48 = arith.constant 0 : index
    %111 = vector.load %arg3[%c352, %c0_48] : memref<600x128xf32, #tpu.memory_space<vmem>>, vector<32x64xf32>
    %c384 = arith.constant 384 : index
    %c0_49 = arith.constant 0 : index
    %112 = vector.load %arg3[%c384, %c0_49] : memref<600x128xf32, #tpu.memory_space<vmem>>, vector<1x64xf32>
    %cst_50 = arith.constant dense<0.000000e+00> : vector<256x64xf32>
    %113 = tpu.matmul %110, %111, %cst_50 {dimension_numbers = #tpu.dot_dimension_numbers<[1], [0], [0], [1], [0, 0, 1, 1], [], []>} : vector<256x32xf32>, vector<32x64xf32>, vector<256x64xf32> -> vector<256x64xf32>
    %114 = vector.broadcast %112 : vector<1x64xf32> to vector<256x64xf32>
    %115 = arith.addf %113, %114 : vector<256x64xf32>
    %cst_51 = arith.constant 0.000000e+00 : f32
    %116 = vector.broadcast %cst_51 : f32 to vector<256x64xf32>
    %117 = arith.maximumf %115, %116 : vector<256x64xf32>
    %c392 = arith.constant 392 : index
    %c0_52 = arith.constant 0 : index
    %118 = vector.load %arg3[%c392, %c0_52] : memref<600x128xf32, #tpu.memory_space<vmem>>, vector<64x128xf32>
    %c456 = arith.constant 456 : index
    %c0_53 = arith.constant 0 : index
    %119 = vector.load %arg3[%c456, %c0_53] : memref<600x128xf32, #tpu.memory_space<vmem>>, vector<1x128xf32>
    %cst_54 = arith.constant dense<0.000000e+00> : vector<256x128xf32>
    %120 = tpu.matmul %117, %118, %cst_54 {dimension_numbers = #tpu.dot_dimension_numbers<[1], [0], [0], [1], [0, 0, 1, 1], [], []>} : vector<256x64xf32>, vector<64x128xf32>, vector<256x128xf32> -> vector<256x128xf32>
    %121 = vector.broadcast %119 : vector<1x128xf32> to vector<256x128xf32>
    %122 = arith.addf %120, %121 : vector<256x128xf32>
    %cst_55 = arith.constant 0.000000e+00 : f32
    %123 = vector.broadcast %cst_55 : f32 to vector<256x128xf32>
    %124 = arith.maximumf %122, %123 : vector<256x128xf32>
    %c464 = arith.constant 464 : index
    %c0_56 = arith.constant 0 : index
    %125 = vector.load %arg3[%c464, %c0_56] : memref<600x128xf32, #tpu.memory_space<vmem>>, vector<128x128xf32>
    %c592 = arith.constant 592 : index
    %c0_57 = arith.constant 0 : index
    %126 = vector.load %arg3[%c592, %c0_57] : memref<600x128xf32, #tpu.memory_space<vmem>>, vector<1x128xf32>
    %cst_58 = arith.constant dense<0.000000e+00> : vector<256x128xf32>
    %127 = tpu.matmul %124, %125, %cst_58 {dimension_numbers = #tpu.dot_dimension_numbers<[1], [0], [0], [1], [0, 0, 1, 1], [], []>} : vector<256x128xf32>, vector<128x128xf32>, vector<256x128xf32> -> vector<256x128xf32>
    %128 = vector.broadcast %126 : vector<1x128xf32> to vector<256x128xf32>
    %129 = arith.addf %127, %128 : vector<256x128xf32>
    %c0_59 = arith.constant 0 : index
    %c0_60 = arith.constant 0 : index
    %130 = vector.load %arg4[%c0_59, %c0_60] : memref<256x128xf32, #tpu.memory_space<vmem>>, vector<256x128xf32>
    tpu.vector_store %arg4[%c0_59, %c0_60], %129 {strides = array<i32>} : memref<256x128xf32, #tpu.memory_space<vmem>>, vector<256x128xf32>,
    return
  }
  func.func @transform_0(%arg0: i32) -> (i32, i32) {
    %c0_i32 = arith.constant 0 : i32
    %c0_i32_0 = arith.constant 0 : i32
    return %arg0, %c0_i32 : i32, i32
  }
  func.func @transform_1(%arg0: i32) -> (i32, i32) {
    %c0_i32 = arith.constant 0 : i32
    %c0_i32_0 = arith.constant 0 : i32
    return %arg0, %c0_i32 : i32, i32
  }
  func.func @transform_2(%arg0: i32) -> (i32, i32) {
    %c0_i32 = arith.constant 0 : i32
    %c0_i32_0 = arith.constant 0 : i32
    %c0_i32_1 = arith.constant 0 : i32
    return %c0_i32, %c0_i32_0 : i32, i32
  }
  func.func @transform_3(%arg0: i32) -> (i32, i32) {
    %c0_i32 = arith.constant 0 : i32
    %c0_i32_0 = arith.constant 0 : i32
    return %arg0, %c0_i32 : i32, i32
  }
  func.func @transform_4(%arg0: i32) -> (i32, i32, i32) {
    %c0_i32 = arith.constant 0 : i32
    %c0_i32_0 = arith.constant 0 : i32
    %c0_i32_1 = arith.constant 0 : i32
    return %arg0, %c0_i32, %c0_i32_0 : i32, i32, i32
  }
  func.func @transform_5(%arg0: i32) -> (i32, i32) {
    %c0_i32 = arith.constant 0 : i32
    %c0_i32_0 = arith.constant 0 : i32
    return %arg0, %c0_i32 : i32, i32
  }
}

</mosaic_0001>

<llo_original>
// kernel: tpu_custom_call.1
$region0: #{tpu_custom_call.1}
  #allocation0 [shape = 'u32[]', space=smem, size = 0x4, offset = 0x4, fixed_abs, tag = 'smem constant byte address 0x4 - core index']
  #allocation1 [shape = 'u32[72,128]{1,0:T(1,128)}', space=vmem, size = 0x9000, scoped, tag = 'internal scratch']
  %s0 = inlined_call_operand.vmem [shape: f32[256,128], index: 0, kind: input, shape index: {}]
  %s1 = inlined_call_operand.vmem [shape: f32[256,16], index: 1, kind: input, shape index: {}]
  %s2 = inlined_call_operand.hbm [shape: f32[600,128], index: 2, kind: input, shape index: {}]
  %s3 = inlined_call_operand.hbm [shape: f32[256,128], index: 3, kind: output, shape index: {0}]
  %s4 = inlined_call_operand.hbm [shape: f32[1,1,1], index: 4, kind: output, shape index: {1}]
  %s5 = inlined_call_operand.vmem [shape: s32[256,2], index: 5, kind: output, shape index: {2}]
  %6 = xla_tuple %s3, %s4, %s5
  %s7 = sld [smem:[#allocation0]]
  $region42: #{tpu_custom_call.1} parent=0
    _
  %s9 = ssub.s32 1, %s7
  %s10 = scalar_select 0, %s9, %s7
  $region1: #{tpu_custom_call.1} parent=0
    #allocation2 [shape = 'u8[307200]{0}', space=vmem, size = 0x4b000, scoped, tag = 'input window, operand 2, single buffered']
    #allocation3 [shape = 's32[1]{0}', space=sflag, size = 0x4, scoped, tag = 'scoped memory for tpu_custom_call.1']
    #allocation4 [shape = 's32[1]{0}', space=sflag, size = 0x4, scoped, tag = 'scoped memory for tpu_custom_call.1']
    #allocation5 [shape = 'u8[131072]{0}', space=vmem, size = 0x20000, scoped, tag = 'output window, operand 0, single buffered']
    #allocation6 [shape = 'u8[512]{0}', space=vmem, size = 0x400, scoped, tag = 'output window, operand 1, single buffered']
    #allocation7 [shape = 's32[1]{0}', space=sflag, size = 0x4, scoped, tag = 'scoped memory for tpu_custom_call.1']
    %11 = vsyncpa [#allocation3], 0
    %12 = vsyncpa [#allocation4], 0
    %13 = vsyncpa [#allocation7], 0
    // Predicated region
    $region2: #{tpu_custom_call.1} parent=1 // pred_check
      _
    $region3: #{tpu_custom_call.1} parent=1 // pred_check_branch
      %15 = sbr.rel (0) target = $region5
    $region4: #{tpu_custom_call.1} parent=1 // pred_region
      _
    $region5: #{tpu_custom_call.1} parent=1 // pred_fallthru
      _
    // Predicated region
    $region6: #{tpu_custom_call.1} parent=1 // pred_check
      _
    $region7: #{tpu_custom_call.1} parent=1 // pred_check_branch
      %17 = sbr.rel (0) target = $region9
    $region8: #{tpu_custom_call.1} parent=1 // pred_region
      _
    $region9: #{tpu_custom_call.1} parent=1 // pred_fallthru
      _
    // Predicated region
    $region10: #{tpu_custom_call.1} parent=1 // pred_check
      _
    $region11: #{tpu_custom_call.1} parent=1 // pred_check_branch
      %19 = sbr.rel (0) target = $region13
    $region12: #{tpu_custom_call.1} parent=1 // pred_region
      %21 = vsyncadd [#allocation3], 0
      %s22 = sshll.u32 %s2, 4
      %s23 = int_to_ptr.hbm [resolvable:$true] %s22
      %s24 = sshll.u32 [#allocation2], 4
      %s25 = int_to_ptr.vmem [resolvable:$true] %s24
      %30 = dma.hbm_to_vmem [thread:$0]  %s23, 9600, %s25, [#allocation3], 128, 128, 8
    $region13: #{tpu_custom_call.1} parent=1 // pred_fallthru
      _
    // Predicated region
    $region14: #{tpu_custom_call.1} parent=1 // pred_check
      _
    $region15: #{tpu_custom_call.1} parent=1 // pred_check_branch
      %32 = sbr.rel (0) target = $region17
    $region16: #{tpu_custom_call.1} parent=1 // pred_region
      %34 = dma.done [#allocation3], 9600
    $region17: #{tpu_custom_call.1} parent=1 // pred_fallthru
      _
    %v35 = vld [vmem:[%s0] sm:$0xff]
    %v36 = vld [vmem:[%s0 + $0x8] sm:$0xff]
    %v37 = vld [vmem:[%s0 + $0x10] sm:$0xff]
    %v38 = vld [vmem:[%s0 + $0x18] sm:$0xff]
    %v39 = vld [vmem:[%s0 + $0x20] sm:$0xff]
    %v40 = vld [vmem:[%s0 + $0x28] sm:$0xff]
    %v41 = vld [vmem:[%s0 + $0x30] sm:$0xff]
    %v42 = vld [vmem:[%s0 + $0x38] sm:$0xff]
    %v43 = vld [vmem:[%s0 + $0x40] sm:$0xff]
    %v44 = vld [vmem:[%s0 + $0x48] sm:$0xff]
    %v45 = vld [vmem:[%s0 + $0x50] sm:$0xff]
    %v46 = vld [vmem:[%s0 + $0x58] sm:$0xff]
    %v47 = vld [vmem:[%s0 + $0x60] sm:$0xff]
    %v48 = vld [vmem:[%s0 + $0x68] sm:$0xff]
    %v49 = vld [vmem:[%s0 + $0x70] sm:$0xff]
    %v50 = vld [vmem:[%s0 + $0x78] sm:$0xff]
    %v51 = vld [vmem:[%s0 + $0x80] sm:$0xff]
    %v52 = vld [vmem:[%s0 + $0x88] sm:$0xff]
    %v53 = vld [vmem:[%s0 + $0x90] sm:$0xff]
    %v54 = vld [vmem:[%s0 + $0x98] sm:$0xff]
    %v55 = vld [vmem:[%s0 + $0xa0] sm:$0xff]
    %v56 = vld [vmem:[%s0 + $0xa8] sm:$0xff]
    %v57 = vld [vmem:[%s0 + $0xb0] sm:$0xff]
    %v58 = vld [vmem:[%s0 + $0xb8] sm:$0xff]
    %v59 = vld [vmem:[%s0 + $0xc0] sm:$0xff]
    %v60 = vld [vmem:[%s0 + $0xc8] sm:$0xff]
    %v61 = vld [vmem:[%s0 + $0xd0] sm:$0xff]
    %v62 = vld [vmem:[%s0 + $0xd8] sm:$0xff]
    %v63 = vld [vmem:[%s0 + $0xe0] sm:$0xff]
    %v64 = vld [vmem:[%s0 + $0xe8] sm:$0xff]
    %v65 = vld [vmem:[%s0 + $0xf0] sm:$0xff]
    %v66 = vld [vmem:[%s0 + $0xf8] sm:$0xff]
    %v67 = vld [vmem:[#allocation2] sm:$0xff]
    %v68 = vld [vmem:[#allocation2 + $0x8] sm:$0xff]
    %v69 = vld [vmem:[#allocation2 + $0x10] sm:$0xff]
    %v70 = vld [vmem:[#allocation2 + $0x18] sm:$0xff]
    %v71 = vld [vmem:[#allocation2 + $0x20] sm:$0xff]
    %v72 = vld [vmem:[#allocation2 + $0x28] sm:$0xff]
    %v73 = vld [vmem:[#allocation2 + $0x30] sm:$0xff]
    %v74 = vld [vmem:[#allocation2 + $0x38] sm:$0xff]
    %v75 = vld [vmem:[#allocation2 + $0x40] sm:$0xff]
    %v76 = vld [vmem:[#allocation2 + $0x48] sm:$0xff]
    %v77 = vld [vmem:[#allocation2 + $0x50] sm:$0xff]
    %v78 = vld [vmem:[#allocation2 + $0x58] sm:$0xff]
    %v79 = vld [vmem:[#allocation2 + $0x60] sm:$0xff]
    %v80 = vld [vmem:[#allocation2 + $0x68] sm:$0xff]
    %v81 = vld [vmem:[#allocation2 + $0x70] sm:$0xff]
    %v82 = vld [vmem:[#allocation2 + $0x78] sm:$0xff]
    %v83 = vld [vmem:[#allocation2 + $0x80] sm:$0x1]
    %v84 = vperm.slane %v83, 0
    %85 = vmatpush.msra.mxu0 %v82
    %86 = vmatpush.msra.mxu0 %v81
    %87 = vmatpush.msra.mxu0 %v80
    %88 = vmatpush.msra.mxu0 %v79
    %89 = vmatpush.msra.mxu0 %v78
    %90 = vmatpush.msra.mxu0 %v77
    %91 = vmatpush.msra.mxu0 %v76
    %92 = vmatpush.msra.mxu0 %v75
    %93 = vmatpush.msra.mxu0 %v74
    %94 = vmatpush.msra.mxu0 %v73
    %95 = vmatpush.msra.mxu0 %v72
    %96 = vmatpush.msra.mxu0 %v71
    %97 = vmatpush.msra.mxu0 %v70
    %98 = vmatpush.msra.mxu0 %v69
    %99 = vmatpush.msra.mxu0 %v68
    %100 = vmatpush.msra.mxu0 %v67
    %101 = vmatmul.f32.gmra.mxu0 %v35
    %v102 = vpop.f32.mrf.mxu0
    %v103 = vadd.f32 %v84, %v102
    %104 = vmatmul.f32.gmra.mxu0 %v36
    %v105 = vpop.f32.mrf.mxu0
    %v106 = vadd.f32 %v84, %v105
    %107 = vmatmul.f32.gmra.mxu0 %v37
    %v108 = vpop.f32.mrf.mxu0
    %v109 = vadd.f32 %v84, %v108
    %110 = vmatmul.f32.gmra.mxu0 %v38
    %v111 = vpop.f32.mrf.mxu0
    %v112 = vadd.f32 %v84, %v111
    %113 = vmatmul.f32.gmra.mxu0 %v39
    %v114 = vpop.f32.mrf.mxu0
    %v115 = vadd.f32 %v84, %v114
    %116 = vmatmul.f32.gmra.mxu0 %v40
    %v117 = vpop.f32.mrf.mxu0
    %v118 = vadd.f32 %v84, %v117
    %119 = vmatmul.f32.gmra.mxu0 %v41
    %v120 = vpop.f32.mrf.mxu0
    %v121 = vadd.f32 %v84, %v120
    %122 = vmatmul.f32.gmra.mxu0 %v42
    %v123 = vpop.f32.mrf.mxu0
    %v124 = vadd.f32 %v84, %v123
    %125 = vmatmul.f32.gmra.mxu0 %v43
    %v126 = vpop.f32.mrf.mxu0
    %v127 = vadd.f32 %v84, %v126
    %128 = vmatmul.f32.gmra.mxu0 %v44
    %v129 = vpop.f32.mrf.mxu0
    %v130 = vadd.f32 %v84, %v129
    %131 = vmatmul.f32.gmra.mxu0 %v45
    %v132 = vpop.f32.mrf.mxu0
    %v133 = vadd.f32 %v84, %v132
    %134 = vmatmul.f32.gmra.mxu0 %v46
    %v135 = vpop.f32.mrf.mxu0
    %v136 = vadd.f32 %v84, %v135
    %137 = vmatmul.f32.gmra.mxu0 %v47
    %v138 = vpop.f32.mrf.mxu0
    %v139 = vadd.f32 %v84, %v138
    %140 = vmatmul.f32.gmra.mxu0 %v48
    %v141 = vpop.f32.mrf.mxu0
    %v142 = vadd.f32 %v84, %v141
    %143 = vmatmul.f32.gmra.mxu0 %v49
    %v144 = vpop.f32.mrf.mxu0
    %v145 = vadd.f32 %v84, %v144
    %146 = vmatmul.f32.gmra.mxu0 %v50
    %v147 = vpop.f32.mrf.mxu0
    %v148 = vadd.f32 %v84, %v147
    %149 = vmatmul.f32.gmra.mxu0 %v51
    %v150 = vpop.f32.mrf.mxu0
    %v151 = vadd.f32 %v84, %v150
    %152 = vmatmul.f32.gmra.mxu0 %v52
    %v153 = vpop.f32.mrf.mxu0
    %v154 = vadd.f32 %v84, %v153
    %155 = vmatmul.f32.gmra.mxu0 %v53
    %v156 = vpop.f32.mrf.mxu0
    %v157 = vadd.f32 %v84, %v156
    %158 = vmatmul.f32.gmra.mxu0 %v54
    %v159 = vpop.f32.mrf.mxu0
    %v160 = vadd.f32 %v84, %v159
    %161 = vmatmul.f32.gmra.mxu0 %v55
    %v162 = vpop.f32.mrf.mxu0
    %v163 = vadd.f32 %v84, %v162
    %164 = vmatmul.f32.gmra.mxu0 %v56
    %v165 = vpop.f32.mrf.mxu0
    %v166 = vadd.f32 %v84, %v165
    %167 = vmatmul.f32.gmra.mxu0 %v57
    %v168 = vpop.f32.mrf.mxu0
    %v169 = vadd.f32 %v84, %v168
    %170 = vmatmul.f32.gmra.mxu0 %v58
    %v171 = vpop.f32.mrf.mxu0
    %v172 = vadd.f32 %v84, %v171
    %173 = vmatmul.f32.gmra.mxu0 %v59
    %v174 = vpop.f32.mrf.mxu0
    %v175 = vadd.f32 %v84, %v174
    %176 = vmatmul.f32.gmra.mxu0 %v60
    %v177 = vpop.f32.mrf.mxu0
    %v178 = vadd.f32 %v84, %v177
    %179 = vmatmul.f32.gmra.mxu0 %v61
    %v180 = vpop.f32.mrf.mxu0
    %v181 = vadd.f32 %v84, %v180
    %182 = vmatmul.f32.gmra.mxu0 %v62
    %v183 = vpop.f32.mrf.mxu0
    %v184 = vadd.f32 %v84, %v183
    %185 = vmatmul.f32.gmra.mxu0 %v63
    %v186 = vpop.f32.mrf.mxu0
    %v187 = vadd.f32 %v84, %v186
    %188 = vmatmul.f32.gmra.mxu0 %v64
    %v189 = vpop.f32.mrf.mxu0
    %v190 = vadd.f32 %v84, %v189
    %191 = vmatmul.f32.gmra.mxu0 %v65
    %v192 = vpop.f32.mrf.mxu0
    %v193 = vadd.f32 %v84, %v192
    %194 = vmatmul.f32.gmra.mxu0 %v66
    %v195 = vpop.f32.mrf.mxu0
    %v196 = vadd.f32 %v84, %v195
    %197 = vdwg.mxu0
    %v198 = vmax.f32 %v103, 0.0
    %v199 = vmax.f32 %v106, 0.0
    %v200 = vmax.f32 %v109, 0.0
    %v201 = vmax.f32 %v112, 0.0
    %v202 = vmax.f32 %v115, 0.0
    %v203 = vmax.f32 %v118, 0.0
    %v204 = vmax.f32 %v121, 0.0
    %v205 = vmax.f32 %v124, 0.0
    %v206 = vmax.f32 %v127, 0.0
    %v207 = vmax.f32 %v130, 0.0
    %v208 = vmax.f32 %v133, 0.0
    %v209 = vmax.f32 %v136, 0.0
    %v210 = vmax.f32 %v139, 0.0
    %v211 = vmax.f32 %v142, 0.0
    %v212 = vmax.f32 %v145, 0.0
    %v213 = vmax.f32 %v148, 0.0
    %v214 = vmax.f32 %v151, 0.0
    %v215 = vmax.f32 %v154, 0.0
    %v216 = vmax.f32 %v157, 0.0
    %v217 = vmax.f32 %v160, 0.0
    %v218 = vmax.f32 %v163, 0.0
    %v219 = vmax.f32 %v166, 0.0
    %v220 = vmax.f32 %v169, 0.0
    %v221 = vmax.f32 %v172, 0.0
    %v222 = vmax.f32 %v175, 0.0
    %v223 = vmax.f32 %v178, 0.0
    %v224 = vmax.f32 %v181, 0.0
    %v225 = vmax.f32 %v184, 0.0
    %v226 = vmax.f32 %v187, 0.0
    %v227 = vmax.f32 %v190, 0.0
    %v228 = vmax.f32 %v193, 0.0
    %v229 = vmax.f32 %v196, 0.0
    %v230 = vld [vmem:[#allocation2 + $0x88] sm:$0xff]
    %v231 = vld [vmem:[#allocation2 + $0x90] sm:$0xff]
    %v232 = vld [vmem:[#allocation2 + $0x98] sm:$0xff]
    %v233 = vld [vmem:[#allocation2 + $0xa0] sm:$0xff]
    %v234 = vld [vmem:[#allocation2 + $0xa8] sm:$0xff]
    %v235 = vld [vmem:[#allocation2 + $0xb0] sm:$0xff]
    %v236 = vld [vmem:[#allocation2 + $0xb8] sm:$0xff]
    %v237 = vld [vmem:[#allocation2 + $0xc0] sm:$0xff]
    %v238 = vld [vmem:[#allocation2 + $0xc8] sm:$0x1]
    %v239 = vperm.slane %v238, 0
    %vm240 = vcmask 523264
    %v242 = vsel %vm240, %v198, 0
    %v245 = vsel %vm240, %v199, 0
    %v248 = vsel %vm240, %v200, 0
    %v251 = vsel %vm240, %v201, 0
    %v254 = vsel %vm240, %v202, 0
    %v257 = vsel %vm240, %v203, 0
    %v260 = vsel %vm240, %v204, 0
    %v263 = vsel %vm240, %v205, 0
    %v266 = vsel %vm240, %v206, 0
    %v269 = vsel %vm240, %v207, 0
    %v272 = vsel %vm240, %v208, 0
    %v275 = vsel %vm240, %v209, 0
    %v278 = vsel %vm240, %v210, 0
    %v281 = vsel %vm240, %v211, 0
    %v284 = vsel %vm240, %v212, 0
    %v287 = vsel %vm240, %v213, 0
    %v290 = vsel %vm240, %v214, 0
    %v293 = vsel %vm240, %v215, 0
    %v296 = vsel %vm240, %v216, 0
    %v299 = vsel %vm240, %v217, 0
    %v302 = vsel %vm240, %v218, 0
    %v305 = vsel %vm240, %v219, 0
    %v308 = vsel %vm240, %v220, 0
    %v311 = vsel %vm240, %v221, 0
    %v314 = vsel %vm240, %v222, 0
    %v317 = vsel %vm240, %v223, 0
    %v320 = vsel %vm240, %v224, 0
    %v323 = vsel %vm240, %v225, 0
    %v326 = vsel %vm240, %v226, 0
    %v329 = vsel %vm240, %v227, 0
    %v332 = vsel %vm240, %v228, 0
    %v335 = vsel %vm240, %v229, 0
    %337 = vmatpush.msra.mxu0 0.0
    %338 = vmatpush.msra.mxu0 0.0
    %339 = vmatpush.msra.mxu0 0.0
    %340 = vmatpush.msra.mxu0 0.0
    %341 = vmatpush.msra.mxu0 0.0
    %342 = vmatpush.msra.mxu0 0.0
    %343 = vmatpush.msra.mxu0 0.0
    %344 = vmatpush.msra.mxu0 0.0
    %345 = vmatpush.msra.mxu0 %v237
    %346 = vmatpush.msra.mxu0 %v236
    %347 = vmatpush.msra.mxu0 %v235
    %348 = vmatpush.msra.mxu0 %v234
    %349 = vmatpush.msra.mxu0 %v233
    %350 = vmatpush.msra.mxu0 %v232
    %351 = vmatpush.msra.mxu0 %v231
    %352 = vmatpush.msra.mxu0 %v230
    %353 = vmatmul.f32.gmra.mxu0 %v242
    %v354 = vpop.f32.mrf.mxu0
    %v355 = vadd.f32 %v239, %v354
    %356 = vmatmul.f32.gmra.mxu0 %v245
    %v357 = vpop.f32.mrf.mxu0
    %v358 = vadd.f32 %v239, %v357
    %359 = vmatmul.f32.gmra.mxu0 %v248
    %v360 = vpop.f32.mrf.mxu0
    %v361 = vadd.f32 %v239, %v360
    %362 = vmatmul.f32.gmra.mxu0 %v251
    %v363 = vpop.f32.mrf.mxu0
    %v364 = vadd.f32 %v239, %v363
    %365 = vmatmul.f32.gmra.mxu0 %v254
    %v366 = vpop.f32.mrf.mxu0
    %v367 = vadd.f32 %v239, %v366
    %368 = vmatmul.f32.gmra.mxu0 %v257
    %v369 = vpop.f32.mrf.mxu0
    %v370 = vadd.f32 %v239, %v369
    %371 = vmatmul.f32.gmra.mxu0 %v260
    %v372 = vpop.f32.mrf.mxu0
    %v373 = vadd.f32 %v239, %v372
    %374 = vmatmul.f32.gmra.mxu0 %v263
    %v375 = vpop.f32.mrf.mxu0
    %v376 = vadd.f32 %v239, %v375
    %377 = vmatmul.f32.gmra.mxu0 %v266
    %v378 = vpop.f32.mrf.mxu0
    %v379 = vadd.f32 %v239, %v378
    %380 = vmatmul.f32.gmra.mxu0 %v269
    %v381 = vpop.f32.mrf.mxu0
    %v382 = vadd.f32 %v239, %v381
    %383 = vmatmul.f32.gmra.mxu0 %v272
    %v384 = vpop.f32.mrf.mxu0
    %v385 = vadd.f32 %v239, %v384
    %386 = vmatmul.f32.gmra.mxu0 %v275
    %v387 = vpop.f32.mrf.mxu0
    %v388 = vadd.f32 %v239, %v387
    %389 = vmatmul.f32.gmra.mxu0 %v278
    %v390 = vpop.f32.mrf.mxu0
    %v391 = vadd.f32 %v239, %v390
    %392 = vmatmul.f32.gmra.mxu0 %v281
    %v393 = vpop.f32.mrf.mxu0
    %v394 = vadd.f32 %v239, %v393
    %395 = vmatmul.f32.gmra.mxu0 %v284
    %v396 = vpop.f32.mrf.mxu0
    %v397 = vadd.f32 %v239, %v396
    %398 = vmatmul.f32.gmra.mxu0 %v287
    %v399 = vpop.f32.mrf.mxu0
    %v400 = vadd.f32 %v239, %v399
    %401 = vmatmul.f32.gmra.mxu0 %v290
    %v402 = vpop.f32.mrf.mxu0
    %v403 = vadd.f32 %v239, %v402
    %404 = vmatmul.f32.gmra.mxu0 %v293
    %v405 = vpop.f32.mrf.mxu0
    %v406 = vadd.f32 %v239, %v405
    %407 = vmatmul.f32.gmra.mxu0 %v296
    %v408 = vpop.f32.mrf.mxu0
    %v409 = vadd.f32 %v239, %v408
    %410 = vmatmul.f32.gmra.mxu0 %v299
    %v411 = vpop.f32.mrf.mxu0
    %v412 = vadd.f32 %v239, %v411
    %413 = vmatmul.f32.gmra.mxu0 %v302
    %v414 = vpop.f32.mrf.mxu0
    %v415 = vadd.f32 %v239, %v414
    %416 = vmatmul.f32.gmra.mxu0 %v305
    %v417 = vpop.f32.mrf.mxu0
    %v418 = vadd.f32 %v239, %v417
    %419 = vmatmul.f32.gmra.mxu0 %v308
    %v420 = vpop.f32.mrf.mxu0
    %v421 = vadd.f32 %v239, %v420
    %422 = vmatmul.f32.gmra.mxu0 %v311
    %v423 = vpop.f32.mrf.mxu0
    %v424 = vadd.f32 %v239, %v423
    %425 = vmatmul.f32.gmra.mxu0 %v314
    %v426 = vpop.f32.mrf.mxu0
    %v427 = vadd.f32 %v239, %v426
    %428 = vmatmul.f32.gmra.mxu0 %v317
    %v429 = vpop.f32.mrf.mxu0
    %v430 = vadd.f32 %v239, %v429
    %431 = vmatmul.f32.gmra.mxu0 %v320
    %v432 = vpop.f32.mrf.mxu0
    %v433 = vadd.f32 %v239, %v432
    %434 = vmatmul.f32.gmra.mxu0 %v323
    %v435 = vpop.f32.mrf.mxu0
    %v436 = vadd.f32 %v239, %v435
    %437 = vmatmul.f32.gmra.mxu0 %v326
    %v438 = vpop.f32.mrf.mxu0
    %v439 = vadd.f32 %v239, %v438
    %440 = vmatmul.f32.gmra.mxu0 %v329
    %v441 = vpop.f32.mrf.mxu0
    %v442 = vadd.f32 %v239, %v441
    %443 = vmatmul.f32.gmra.mxu0 %v332
    %v444 = vpop.f32.mrf.mxu0
    %v445 = vadd.f32 %v239, %v444
    %446 = vmatmul.f32.gmra.mxu0 %v335
    %v447 = vpop.f32.mrf.mxu0
    %v448 = vadd.f32 %v239, %v447
    %449 = vdwg.mxu0
    %v450 = vmax.f32 %v355, 0.0
    %v451 = vmax.f32 %v358, 0.0
    %v452 = vmax.f32 %v361, 0.0
    %v453 = vmax.f32 %v364, 0.0
    %v454 = vmax.f32 %v367, 0.0
    %v455 = vmax.f32 %v370, 0.0
    %v456 = vmax.f32 %v373, 0.0
    %v457 = vmax.f32 %v376, 0.0
    %v458 = vmax.f32 %v379, 0.0
    %v459 = vmax.f32 %v382, 0.0
    %v460 = vmax.f32 %v385, 0.0
    %v461 = vmax.f32 %v388, 0.0
    %v462 = vmax.f32 %v391, 0.0
    %v463 = vmax.f32 %v394, 0.0
    %v464 = vmax.f32 %v397, 0.0
    %v465 = vmax.f32 %v400, 0.0
    %v466 = vmax.f32 %v403, 0.0
    %v467 = vmax.f32 %v406, 0.0
    %v468 = vmax.f32 %v409, 0.0
    %v469 = vmax.f32 %v412, 0.0
    %v470 = vmax.f32 %v415, 0.0
    %v471 = vmax.f32 %v418, 0.0
    %v472 = vmax.f32 %v421, 0.0
    %v473 = vmax.f32 %v424, 0.0
    %v474 = vmax.f32 %v427, 0.0
    %v475 = vmax.f32 %v430, 0.0
    %v476 = vmax.f32 %v433, 0.0
    %v477 = vmax.f32 %v436, 0.0
    %v478 = vmax.f32 %v439, 0.0
    %v479 = vmax.f32 %v442, 0.0
    %v480 = vmax.f32 %v445, 0.0
    %v481 = vmax.f32 %v448, 0.0
    %v482 = vld [vmem:[#allocation2 + $0xd0] sm:$0xff]
    %v483 = vld [vmem:[#allocation2 + $0xd8] sm:$0xff]
    %v484 = vld [vmem:[#allocation2 + $0xe0] sm:$0xff]
    %v485 = vld [vmem:[#allocation2 + $0xe8] sm:$0xff]
    %v486 = vld [vmem:[#allocation2 + $0xf0] sm:$0x1]
    %v487 = vperm.slane %v486, 0
    %vm488 = vcmask 261120
    %v490 = vsel %vm488, %v450, 0
    %v493 = vsel %vm488, %v451, 0
    %v496 = vsel %vm488, %v452, 0
    %v499 = vsel %vm488, %v453, 0
    %v502 = vsel %vm488, %v454, 0
    %v505 = vsel %vm488, %v455, 0
    %v508 = vsel %vm488, %v456, 0
    %v511 = vsel %vm488, %v457, 0
    %v514 = vsel %vm488, %v458, 0
    %v517 = vsel %vm488, %v459, 0
    %v520 = vsel %vm488, %v460, 0
    %v523 = vsel %vm488, %v461, 0
    %v526 = vsel %vm488, %v462, 0
    %v529 = vsel %vm488, %v463, 0
    %v532 = vsel %vm488, %v464, 0
    %v535 = vsel %vm488, %v465, 0
    %v538 = vsel %vm488, %v466, 0
    %v541 = vsel %vm488, %v467, 0
    %v544 = vsel %vm488, %v468, 0
    %v547 = vsel %vm488, %v469, 0
    %v550 = vsel %vm488, %v470, 0
    %v553 = vsel %vm488, %v471, 0
    %v556 = vsel %vm488, %v472, 0
    %v559 = vsel %vm488, %v473, 0
    %v562 = vsel %vm488, %v474, 0
    %v565 = vsel %vm488, %v475, 0
    %v568 = vsel %vm488, %v476, 0
    %v571 = vsel %vm488, %v477, 0
    %v574 = vsel %vm488, %v478, 0
    %v577 = vsel %vm488, %v479, 0
    %v580 = vsel %vm488, %v480, 0
    %v583 = vsel %vm488, %v481, 0
    %585 = vmatpush.msra.mxu0 0.0
    %586 = vmatpush.msra.mxu0 0.0
    %587 = vmatpush.msra.mxu0 0.0
    %588 = vmatpush.msra.mxu0 0.0
    %589 = vmatpush.msra.mxu0 0.0
    %590 = vmatpush.msra.mxu0 0.0
    %591 = vmatpush.msra.mxu0 0.0
    %592 = vmatpush.msra.mxu0 0.0
    %593 = vmatpush.msra.mxu0 0.0
    %594 = vmatpush.msra.mxu0 0.0
    %595 = vmatpush.msra.mxu0 0.0
    %596 = vmatpush.msra.mxu0 0.0
    %597 = vmatpush.msra.mxu0 %v485
    %598 = vmatpush.msra.mxu0 %v484
    %599 = vmatpush.msra.mxu0 %v483
    %600 = vmatpush.msra.mxu0 %v482
    %601 = vmatmul.f32.gmra.mxu0 %v490
    %v602 = vpop.f32.mrf.mxu0
    %v603 = vadd.f32 %v487, %v602
    %604 = vmatmul.f32.gmra.mxu0 %v493
    %v605 = vpop.f32.mrf.mxu0
    %v606 = vadd.f32 %v487, %v605
    %607 = vmatmul.f32.gmra.mxu0 %v496
    %v608 = vpop.f32.mrf.mxu0
    %v609 = vadd.f32 %v487, %v608
    %610 = vmatmul.f32.gmra.mxu0 %v499
    %v611 = vpop.f32.mrf.mxu0
    %v612 = vadd.f32 %v487, %v611
    %613 = vmatmul.f32.gmra.mxu0 %v502
    %v614 = vpop.f32.mrf.mxu0
    %v615 = vadd.f32 %v487, %v614
    %616 = vmatmul.f32.gmra.mxu0 %v505
    %v617 = vpop.f32.mrf.mxu0
    %v618 = vadd.f32 %v487, %v617
    %619 = vmatmul.f32.gmra.mxu0 %v508
    %v620 = vpop.f32.mrf.mxu0
    %v621 = vadd.f32 %v487, %v620
    %622 = vmatmul.f32.gmra.mxu0 %v511
    %v623 = vpop.f32.mrf.mxu0
    %v624 = vadd.f32 %v487, %v623
    %625 = vmatmul.f32.gmra.mxu0 %v514
    %v626 = vpop.f32.mrf.mxu0
    %v627 = vadd.f32 %v487, %v626
    %628 = vmatmul.f32.gmra.mxu0 %v517
    %v629 = vpop.f32.mrf.mxu0
    %v630 = vadd.f32 %v487, %v629
    %631 = vmatmul.f32.gmra.mxu0 %v520
    %v632 = vpop.f32.mrf.mxu0
    %v633 = vadd.f32 %v487, %v632
    %634 = vmatmul.f32.gmra.mxu0 %v523
    %v635 = vpop.f32.mrf.mxu0
    %v636 = vadd.f32 %v487, %v635
    %637 = vmatmul.f32.gmra.mxu0 %v526
    %v638 = vpop.f32.mrf.mxu0
    %v639 = vadd.f32 %v487, %v638
    %640 = vmatmul.f32.gmra.mxu0 %v529
    %v641 = vpop.f32.mrf.mxu0
    %v642 = vadd.f32 %v487, %v641
    %643 = vmatmul.f32.gmra.mxu0 %v532
    %v644 = vpop.f32.mrf.mxu0
    %v645 = vadd.f32 %v487, %v644
    %646 = vmatmul.f32.gmra.mxu0 %v535
    %v647 = vpop.f32.mrf.mxu0
    %v648 = vadd.f32 %v487, %v647
    %649 = vmatmul.f32.gmra.mxu0 %v538
    %v650 = vpop.f32.mrf.mxu0
    %v651 = vadd.f32 %v487, %v650
    %652 = vmatmul.f32.gmra.mxu0 %v541
    %v653 = vpop.f32.mrf.mxu0
    %v654 = vadd.f32 %v487, %v653
    %655 = vmatmul.f32.gmra.mxu0 %v544
    %v656 = vpop.f32.mrf.mxu0
    %v657 = vadd.f32 %v487, %v656
    %658 = vmatmul.f32.gmra.mxu0 %v547
    %v659 = vpop.f32.mrf.mxu0
    %v660 = vadd.f32 %v487, %v659
    %661 = vmatmul.f32.gmra.mxu0 %v550
    %v662 = vpop.f32.mrf.mxu0
    %v663 = vadd.f32 %v487, %v662
    %664 = vmatmul.f32.gmra.mxu0 %v553
    %v665 = vpop.f32.mrf.mxu0
    %v666 = vadd.f32 %v487, %v665
    %667 = vmatmul.f32.gmra.mxu0 %v556
    %v668 = vpop.f32.mrf.mxu0
    %v669 = vadd.f32 %v487, %v668
    %670 = vmatmul.f32.gmra.mxu0 %v559
    %v671 = vpop.f32.mrf.mxu0
    %v672 = vadd.f32 %v487, %v671
    %673 = vmatmul.f32.gmra.mxu0 %v562
    %v674 = vpop.f32.mrf.mxu0
    %v675 = vadd.f32 %v487, %v674
    %676 = vmatmul.f32.gmra.mxu0 %v565
    %v677 = vpop.f32.mrf.mxu0
    %v678 = vadd.f32 %v487, %v677
    %679 = vmatmul.f32.gmra.mxu0 %v568
    %v680 = vpop.f32.mrf.mxu0
    %v681 = vadd.f32 %v487, %v680
    %682 = vmatmul.f32.gmra.mxu0 %v571
    %v683 = vpop.f32.mrf.mxu0
    %v684 = vadd.f32 %v487, %v683
    %685 = vmatmul.f32.gmra.mxu0 %v574
    %v686 = vpop.f32.mrf.mxu0
    %v687 = vadd.f32 %v487, %v686
    %688 = vmatmul.f32.gmra.mxu0 %v577
    %v689 = vpop.f32.mrf.mxu0
    %v690 = vadd.f32 %v487, %v689
    %691 = vmatmul.f32.gmra.mxu0 %v580
    %v692 = vpop.f32.mrf.mxu0
    %v693 = vadd.f32 %v487, %v692
    %694 = vmatmul.f32.gmra.mxu0 %v583
    %v695 = vpop.f32.mrf.mxu0
    %v696 = vadd.f32 %v487, %v695
    %697 = vdwg.mxu0
    %v698 = vmax.f32 %v603, 0.0
    %v699 = vmax.f32 %v606, 0.0
    %v700 = vmax.f32 %v609, 0.0
    %v701 = vmax.f32 %v612, 0.0
    %v702 = vmax.f32 %v615, 0.0
    %v703 = vmax.f32 %v618, 0.0
    %v704 = vmax.f32 %v621, 0.0
    %v705 = vmax.f32 %v624, 0.0
    %v706 = vmax.f32 %v627, 0.0
    %v707 = vmax.f32 %v630, 0.0
    %v708 = vmax.f32 %v633, 0.0
    %v709 = vmax.f32 %v636, 0.0
    %v710 = vmax.f32 %v639, 0.0
    %v711 = vmax.f32 %v642, 0.0
    %v712 = vmax.f32 %v645, 0.0
    %v713 = vmax.f32 %v648, 0.0
    %v714 = vmax.f32 %v651, 0.0
    %v715 = vmax.f32 %v654, 0.0
    %v716 = vmax.f32 %v657, 0.0
    %v717 = vmax.f32 %v660, 0.0
    %v718 = vmax.f32 %v663, 0.0
    %v719 = vmax.f32 %v666, 0.0
    %v720 = vmax.f32 %v669, 0.0
    %v721 = vmax.f32 %v672, 0.0
    %v722 = vmax.f32 %v675, 0.0
    %v723 = vmax.f32 %v678, 0.0
    %v724 = vmax.f32 %v681, 0.0
    %v725 = vmax.f32 %v684, 0.0
    %v726 = vmax.f32 %v687, 0.0
    %v727 = vmax.f32 %v690, 0.0
    %v728 = vmax.f32 %v693, 0.0
    %v729 = vmax.f32 %v696, 0.0
    %v730 = vld [vmem:[#allocation2 + $0xf8] sm:$0xff]
    %v731 = vld [vmem:[#allocation2 + $0x100] sm:$0xff]
    %v732 = vld [vmem:[#allocation2 + $0x108] sm:$0x1]
    %v733 = vperm.slane %v732, 0
    %vm734 = vcmask 130048
    %v736 = vsel %vm734, %v698, 0
    %v739 = vsel %vm734, %v699, 0
    %v742 = vsel %vm734, %v700, 0
    %v745 = vsel %vm734, %v701, 0
    %v748 = vsel %vm734, %v702, 0
    %v751 = vsel %vm734, %v703, 0
    %v754 = vsel %vm734, %v704, 0
    %v757 = vsel %vm734, %v705, 0
    %v760 = vsel %vm734, %v706, 0
    %v763 = vsel %vm734, %v707, 0
    %v766 = vsel %vm734, %v708, 0
    %v769 = vsel %vm734, %v709, 0
    %v772 = vsel %vm734, %v710, 0
    %v775 = vsel %vm734, %v711, 0
    %v778 = vsel %vm734, %v712, 0
    %v781 = vsel %vm734, %v713, 0
    %v784 = vsel %vm734, %v714, 0
    %v787 = vsel %vm734, %v715, 0
    %v790 = vsel %vm734, %v716, 0
    %v793 = vsel %vm734, %v717, 0
    %v796 = vsel %vm734, %v718, 0
    %v799 = vsel %vm734, %v719, 0
    %v802 = vsel %vm734, %v720, 0
    %v805 = vsel %vm734, %v721, 0
    %v808 = vsel %vm734, %v722, 0
    %v811 = vsel %vm734, %v723, 0
    %v814 = vsel %vm734, %v724, 0
    %v817 = vsel %vm734, %v725, 0
    %v820 = vsel %vm734, %v726, 0
    %v823 = vsel %vm734, %v727, 0
    %v826 = vsel %vm734, %v728, 0
    %v829 = vsel %vm734, %v729, 0
    %831 = vmatpush.msra.mxu0 0.0
    %832 = vmatpush.msra.mxu0 0.0
    %833 = vmatpush.msra.mxu0 0.0
    %834 = vmatpush.msra.mxu0 0.0
    %835 = vmatpush.msra.mxu0 0.0
    %836 = vmatpush.msra.mxu0 0.0
    %837 = vmatpush.msra.mxu0 0.0
    %838 = vmatpush.msra.mxu0 0.0
    %839 = vmatpush.msra.mxu0 0.0
    %840 = vmatpush.msra.mxu0 0.0
    %841 = vmatpush.msra.mxu0 0.0
    %842 = vmatpush.msra.mxu0 0.0
    %843 = vmatpush.msra.mxu0 0.0
    %844 = vmatpush.msra.mxu0 0.0
    %845 = vmatpush.msra.mxu0 %v731
    %846 = vmatpush.msra.mxu0 %v730
    %847 = vmatmul.f32.gmra.mxu0 %v736
    %v848 = vpop.f32.mrf.mxu0
    %v849 = vadd.f32 %v733, %v848
    %850 = vmatmul.f32.gmra.mxu0 %v739
    %v851 = vpop.f32.mrf.mxu0
    %v852 = vadd.f32 %v733, %v851
    %853 = vmatmul.f32.gmra.mxu0 %v742
    %v854 = vpop.f32.mrf.mxu0
    %v855 = vadd.f32 %v733, %v854
    %856 = vmatmul.f32.gmra.mxu0 %v745
    %v857 = vpop.f32.mrf.mxu0
    %v858 = vadd.f32 %v733, %v857
    %859 = vmatmul.f32.gmra.mxu0 %v748
    %v860 = vpop.f32.mrf.mxu0
    %v861 = vadd.f32 %v733, %v860
    %862 = vmatmul.f32.gmra.mxu0 %v751
    %v863 = vpop.f32.mrf.mxu0
    %v864 = vadd.f32 %v733, %v863
    %865 = vmatmul.f32.gmra.mxu0 %v754
    %v866 = vpop.f32.mrf.mxu0
    %v867 = vadd.f32 %v733, %v866
    %868 = vmatmul.f32.gmra.mxu0 %v757
    %v869 = vpop.f32.mrf.mxu0
    %v870 = vadd.f32 %v733, %v869
    %871 = vmatmul.f32.gmra.mxu0 %v760
    %v872 = vpop.f32.mrf.mxu0
    %v873 = vadd.f32 %v733, %v872
    %874 = vmatmul.f32.gmra.mxu0 %v763
    %v875 = vpop.f32.mrf.mxu0
    %v876 = vadd.f32 %v733, %v875
    %877 = vmatmul.f32.gmra.mxu0 %v766
    %v878 = vpop.f32.mrf.mxu0
    %v879 = vadd.f32 %v733, %v878
    %880 = vmatmul.f32.gmra.mxu0 %v769
    %v881 = vpop.f32.mrf.mxu0
    %v882 = vadd.f32 %v733, %v881
    %883 = vmatmul.f32.gmra.mxu0 %v772
    %v884 = vpop.f32.mrf.mxu0
    %v885 = vadd.f32 %v733, %v884
    %886 = vmatmul.f32.gmra.mxu0 %v775
    %v887 = vpop.f32.mrf.mxu0
    %v888 = vadd.f32 %v733, %v887
    %889 = vmatmul.f32.gmra.mxu0 %v778
    %v890 = vpop.f32.mrf.mxu0
    %v891 = vadd.f32 %v733, %v890
    %892 = vmatmul.f32.gmra.mxu0 %v781
    %v893 = vpop.f32.mrf.mxu0
    %v894 = vadd.f32 %v733, %v893
    %895 = vmatmul.f32.gmra.mxu0 %v784
    %v896 = vpop.f32.mrf.mxu0
    %v897 = vadd.f32 %v733, %v896
    %898 = vmatmul.f32.gmra.mxu0 %v787
    %v899 = vpop.f32.mrf.mxu0
    %v900 = vadd.f32 %v733, %v899
    %901 = vmatmul.f32.gmra.mxu0 %v790
    %v902 = vpop.f32.mrf.mxu0
    %v903 = vadd.f32 %v733, %v902
    %904 = vmatmul.f32.gmra.mxu0 %v793
    %v905 = vpop.f32.mrf.mxu0
    %v906 = vadd.f32 %v733, %v905
    %907 = vmatmul.f32.gmra.mxu0 %v796
    %v908 = vpop.f32.mrf.mxu0
    %v909 = vadd.f32 %v733, %v908
    %910 = vmatmul.f32.gmra.mxu0 %v799
    %v911 = vpop.f32.mrf.mxu0
    %v912 = vadd.f32 %v733, %v911
    %913 = vmatmul.f32.gmra.mxu0 %v802
    %v914 = vpop.f32.mrf.mxu0
    %v915 = vadd.f32 %v733, %v914
    %916 = vmatmul.f32.gmra.mxu0 %v805
    %v917 = vpop.f32.mrf.mxu0
    %v918 = vadd.f32 %v733, %v917
    %919 = vmatmul.f32.gmra.mxu0 %v808
    %v920 = vpop.f32.mrf.mxu0
    %v921 = vadd.f32 %v733, %v920
    %922 = vmatmul.f32.gmra.mxu0 %v811
    %v923 = vpop.f32.mrf.mxu0
    %v924 = vadd.f32 %v733, %v923
    %925 = vmatmul.f32.gmra.mxu0 %v814
    %v926 = vpop.f32.mrf.mxu0
    %v927 = vadd.f32 %v733, %v926
    %928 = vmatmul.f32.gmra.mxu0 %v817
    %v929 = vpop.f32.mrf.mxu0
    %v930 = vadd.f32 %v733, %v929
    %931 = vmatmul.f32.gmra.mxu0 %v820
    %v932 = vpop.f32.mrf.mxu0
    %v933 = vadd.f32 %v733, %v932
    %934 = vmatmul.f32.gmra.mxu0 %v823
    %v935 = vpop.f32.mrf.mxu0
    %v936 = vadd.f32 %v733, %v935
    %937 = vmatmul.f32.gmra.mxu0 %v826
    %v938 = vpop.f32.mrf.mxu0
    %v939 = vadd.f32 %v733, %v938
    %940 = vmatmul.f32.gmra.mxu0 %v829
    %v941 = vpop.f32.mrf.mxu0
    %v942 = vadd.f32 %v733, %v941
    %943 = vdwg.mxu0
    %v944 = vmax.f32 %v849, -10.0
    %v945 = vmax.f32 %v852, -10.0
    %v946 = vmax.f32 %v855, -10.0
    %v947 = vmax.f32 %v858, -10.0
    %v948 = vmax.f32 %v861, -10.0
    %v949 = vmax.f32 %v864, -10.0
    %v950 = vmax.f32 %v867, -10.0
    %v951 = vmax.f32 %v870, -10.0
    %v952 = vmax.f32 %v873, -10.0
    %v953 = vmax.f32 %v876, -10.0
    %v954 = vmax.f32 %v879, -10.0
    %v955 = vmax.f32 %v882, -10.0
    %v956 = vmax.f32 %v885, -10.0
    %v957 = vmax.f32 %v888, -10.0
    %v958 = vmax.f32 %v891, -10.0
    %v959 = vmax.f32 %v894, -10.0
    %v960 = vmax.f32 %v897, -10.0
    %v961 = vmax.f32 %v900, -10.0
    %v962 = vmax.f32 %v903, -10.0
    %v963 = vmax.f32 %v906, -10.0
    %v964 = vmax.f32 %v909, -10.0
    %v965 = vmax.f32 %v912, -10.0
    %v966 = vmax.f32 %v915, -10.0
    %v967 = vmax.f32 %v918, -10.0
    %v968 = vmax.f32 %v921, -10.0
    %v969 = vmax.f32 %v924, -10.0
    %v970 = vmax.f32 %v927, -10.0
    %v971 = vmax.f32 %v930, -10.0
    %v972 = vmax.f32 %v933, -10.0
    %v973 = vmax.f32 %v936, -10.0
    %v974 = vmax.f32 %v939, -10.0
    %v975 = vmax.f32 %v942, -10.0
    %v976 = vmin.f32 %v944, 10.0
    %v977 = vmin.f32 %v945, 10.0
    %v978 = vmin.f32 %v946, 10.0
    %v979 = vmin.f32 %v947, 10.0
    %v980 = vmin.f32 %v948, 10.0
    %v981 = vmin.f32 %v949, 10.0
    %v982 = vmin.f32 %v950, 10.0
    %v983 = vmin.f32 %v951, 10.0
    %v984 = vmin.f32 %v952, 10.0
    %v985 = vmin.f32 %v953, 10.0
    %v986 = vmin.f32 %v954, 10.0
    %v987 = vmin.f32 %v955, 10.0
    %v988 = vmin.f32 %v956, 10.0
    %v989 = vmin.f32 %v957, 10.0
    %v990 = vmin.f32 %v958, 10.0
    %v991 = vmin.f32 %v959, 10.0
    %v992 = vmin.f32 %v960, 10.0
    %v993 = vmin.f32 %v961, 10.0
    %v994 = vmin.f32 %v962, 10.0
    %v995 = vmin.f32 %v963, 10.0
    %v996 = vmin.f32 %v964, 10.0
    %v997 = vmin.f32 %v965, 10.0
    %v998 = vmin.f32 %v966, 10.0
    %v999 = vmin.f32 %v967, 10.0
    %v1000 = vmin.f32 %v968, 10.0
    %v1001 = vmin.f32 %v969, 10.0
    %v1002 = vmin.f32 %v970, 10.0
    %v1003 = vmin.f32 %v971, 10.0
    %v1004 = vmin.f32 %v972, 10.0
    %v1005 = vmin.f32 %v973, 10.0
    %v1006 = vmin.f32 %v974, 10.0
    %v1007 = vmin.f32 %v975, 10.0
    %v1008 = vmul.f32 %v976, 0.5
    %v1009 = vmul.f32 %v977, 0.5
    %v1010 = vmul.f32 %v978, 0.5
    %v1011 = vmul.f32 %v979, 0.5
    %v1012 = vmul.f32 %v980, 0.5
    %v1013 = vmul.f32 %v981, 0.5
    %v1014 = vmul.f32 %v982, 0.5
    %v1015 = vmul.f32 %v983, 0.5
    %v1016 = vmul.f32 %v984, 0.5
    %v1017 = vmul.f32 %v985, 0.5
    %v1018 = vmul.f32 %v986, 0.5
    %v1019 = vmul.f32 %v987, 0.5
    %v1020 = vmul.f32 %v988, 0.5
    %v1021 = vmul.f32 %v989, 0.5
    %v1022 = vmul.f32 %v990, 0.5
    %v1023 = vmul.f32 %v991, 0.5
    %v1024 = vmul.f32 %v992, 0.5
    %v1025 = vmul.f32 %v993, 0.5
    %v1026 = vmul.f32 %v994, 0.5
    %v1027 = vmul.f32 %v995, 0.5
    %v1028 = vmul.f32 %v996, 0.5
    %v1029 = vmul.f32 %v997, 0.5
    %v1030 = vmul.f32 %v998, 0.5
    %v1031 = vmul.f32 %v999, 0.5
    %v1032 = vmul.f32 %v1000, 0.5
    %v1033 = vmul.f32 %v1001, 0.5
    %v1034 = vmul.f32 %v1002, 0.5
    %v1035 = vmul.f32 %v1003, 0.5
    %v1036 = vmul.f32 %v1004, 0.5
    %v1037 = vmul.f32 %v1005, 0.5
    %v1038 = vmul.f32 %v1006, 0.5
    %v1039 = vmul.f32 %v1007, 0.5
    %v1040 = vmul.f32 %v1008, 1.442695
    %v1041 = vpow.pop %v1040
    %v1042 = vmul.f32 %v1009, 1.442695
    %v1043 = vpow.pop %v1042
    %v1044 = vmul.f32 %v1010, 1.442695
    %v1045 = vpow.pop %v1044
    %v1046 = vmul.f32 %v1011, 1.442695
    %v1047 = vpow.pop %v1046
    %v1048 = vmul.f32 %v1012, 1.442695
    %v1049 = vpow.pop %v1048
    %v1050 = vmul.f32 %v1013, 1.442695
    %v1051 = vpow.pop %v1050
    %v1052 = vmul.f32 %v1014, 1.442695
    %v1053 = vpow.pop %v1052
    %v1054 = vmul.f32 %v1015, 1.442695
    %v1055 = vpow.pop %v1054
    %v1056 = vmul.f32 %v1016, 1.442695
    %v1057 = vpow.pop %v1056
    %v1058 = vmul.f32 %v1017, 1.442695
    %v1059 = vpow.pop %v1058
    %v1060 = vmul.f32 %v1018, 1.442695
    %v1061 = vpow.pop %v1060
    %v1062 = vmul.f32 %v1019, 1.442695
    %v1063 = vpow.pop %v1062
    %v1064 = vmul.f32 %v1020, 1.442695
    %v1065 = vpow.pop %v1064
    %v1066 = vmul.f32 %v1021, 1.442695
    %v1067 = vpow.pop %v1066
    %v1068 = vmul.f32 %v1022, 1.442695
    %v1069 = vpow.pop %v1068
    %v1070 = vmul.f32 %v1023, 1.442695
    %v1071 = vpow.pop %v1070
    %v1072 = vmul.f32 %v1024, 1.442695
    %v1073 = vpow.pop %v1072
    %v1074 = vmul.f32 %v1025, 1.442695
    %v1075 = vpow.pop %v1074
    %v1076 = vmul.f32 %v1026, 1.442695
    %v1077 = vpow.pop %v1076
    %v1078 = vmul.f32 %v1027, 1.442695
    %v1079 = vpow.pop %v1078
    %v1080 = vmul.f32 %v1028, 1.442695
    %v1081 = vpow.pop %v1080
    %v1082 = vmul.f32 %v1029, 1.442695
    %v1083 = vpow.pop %v1082
    %v1084 = vmul.f32 %v1030, 1.442695
    %v1085 = vpow.pop %v1084
    %v1086 = vmul.f32 %v1031, 1.442695
    %v1087 = vpow.pop %v1086
    %v1088 = vmul.f32 %v1032, 1.442695
    %v1089 = vpow.pop %v1088
    %v1090 = vmul.f32 %v1033, 1.442695
    %v1091 = vpow.pop %v1090
    %v1092 = vmul.f32 %v1034, 1.442695
    %v1093 = vpow.pop %v1092
    %v1094 = vmul.f32 %v1035, 1.442695
    %v1095 = vpow.pop %v1094
    %v1096 = vmul.f32 %v1036, 1.442695
    %v1097 = vpow.pop %v1096
    %v1098 = vmul.f32 %v1037, 1.442695
    %v1099 = vpow.pop %v1098
    %v1100 = vmul.f32 %v1038, 1.442695
    %v1101 = vpow.pop %v1100
    %v1102 = vmul.f32 %v1039, 1.442695
    %v1103 = vpow.pop %v1102
    %v1104 = vld [vmem:[%s1] sm:$0xff]
    %v1105 = vld [vmem:[%s1 + $0x8] sm:$0xff]
    %v1106 = vld [vmem:[%s1 + $0x10] sm:$0xff]
    %v1107 = vld [vmem:[%s1 + $0x18] sm:$0xff]
    %v1108 = vld [vmem:[%s1 + $0x20] sm:$0xff]
    %v1109 = vld [vmem:[%s1 + $0x28] sm:$0xff]
    %v1110 = vld [vmem:[%s1 + $0x30] sm:$0xff]
    %v1111 = vld [vmem:[%s1 + $0x38] sm:$0xff]
    %v1112 = vld [vmem:[%s1 + $0x40] sm:$0xff]
    %v1113 = vld [vmem:[%s1 + $0x48] sm:$0xff]
    %v1114 = vld [vmem:[%s1 + $0x50] sm:$0xff]
    %v1115 = vld [vmem:[%s1 + $0x58] sm:$0xff]
    %v1116 = vld [vmem:[%s1 + $0x60] sm:$0xff]
    %v1117 = vld [vmem:[%s1 + $0x68] sm:$0xff]
    %v1118 = vld [vmem:[%s1 + $0x70] sm:$0xff]
    %v1119 = vld [vmem:[%s1 + $0x78] sm:$0xff]
    %v1120 = vld [vmem:[%s1 + $0x80] sm:$0xff]
    %v1121 = vld [vmem:[%s1 + $0x88] sm:$0xff]
    %v1122 = vld [vmem:[%s1 + $0x90] sm:$0xff]
    %v1123 = vld [vmem:[%s1 + $0x98] sm:$0xff]
    %v1124 = vld [vmem:[%s1 + $0xa0] sm:$0xff]
    %v1125 = vld [vmem:[%s1 + $0xa8] sm:$0xff]
    %v1126 = vld [vmem:[%s1 + $0xb0] sm:$0xff]
    %v1127 = vld [vmem:[%s1 + $0xb8] sm:$0xff]
    %v1128 = vld [vmem:[%s1 + $0xc0] sm:$0xff]
    %v1129 = vld [vmem:[%s1 + $0xc8] sm:$0xff]
    %v1130 = vld [vmem:[%s1 + $0xd0] sm:$0xff]
    %v1131 = vld [vmem:[%s1 + $0xd8] sm:$0xff]
    %v1132 = vld [vmem:[%s1 + $0xe0] sm:$0xff]
    %v1133 = vld [vmem:[%s1 + $0xe8] sm:$0xff]
    %v1134 = vld [vmem:[%s1 + $0xf0] sm:$0xff]
    %v1135 = vld [vmem:[%s1 + $0xf8] sm:$0xff]
    %1168 = vrot.lane.b32.xlu0 %v1104, 16
    %v1169 = vpop.permute.xlu0 %1168
    %1170 = vrot.lane.b32.xlu0 %v1105, 16
    %v1171 = vpop.permute.xlu0 %1170
    %1172 = vrot.lane.b32.xlu0 %v1106, 16
    %v1173 = vpop.permute.xlu0 %1172
    %1174 = vrot.lane.b32.xlu0 %v1107, 16
    %v1175 = vpop.permute.xlu0 %1174
    %1176 = vrot.lane.b32.xlu0 %v1108, 16
    %v1177 = vpop.permute.xlu0 %1176
    %1178 = vrot.lane.b32.xlu0 %v1109, 16
    %v1179 = vpop.permute.xlu0 %1178
    %1180 = vrot.lane.b32.xlu0 %v1110, 16
    %v1181 = vpop.permute.xlu0 %1180
    %1182 = vrot.lane.b32.xlu0 %v1111, 16
    %v1183 = vpop.permute.xlu0 %1182
    %1184 = vrot.lane.b32.xlu0 %v1112, 16
    %v1185 = vpop.permute.xlu0 %1184
    %1186 = vrot.lane.b32.xlu0 %v1113, 16
    %v1187 = vpop.permute.xlu0 %1186
    %1188 = vrot.lane.b32.xlu0 %v1114, 16
    %v1189 = vpop.permute.xlu0 %1188
    %1190 = vrot.lane.b32.xlu0 %v1115, 16
    %v1191 = vpop.permute.xlu0 %1190
    %1192 = vrot.lane.b32.xlu0 %v1116, 16
    %v1193 = vpop.permute.xlu0 %1192
    %1194 = vrot.lane.b32.xlu0 %v1117, 16
    %v1195 = vpop.permute.xlu0 %1194
    %1196 = vrot.lane.b32.xlu0 %v1118, 16
    %v1197 = vpop.permute.xlu0 %1196
    %1198 = vrot.lane.b32.xlu0 %v1119, 16
    %v1199 = vpop.permute.xlu0 %1198
    %1200 = vrot.lane.b32.xlu0 %v1120, 16
    %v1201 = vpop.permute.xlu0 %1200
    %1202 = vrot.lane.b32.xlu0 %v1121, 16
    %v1203 = vpop.permute.xlu0 %1202
    %1204 = vrot.lane.b32.xlu0 %v1122, 16
    %v1205 = vpop.permute.xlu0 %1204
    %1206 = vrot.lane.b32.xlu0 %v1123, 16
    %v1207 = vpop.permute.xlu0 %1206
    %1208 = vrot.lane.b32.xlu0 %v1124, 16
    %v1209 = vpop.permute.xlu0 %1208
    %1210 = vrot.lane.b32.xlu0 %v1125, 16
    %v1211 = vpop.permute.xlu0 %1210
    %1212 = vrot.lane.b32.xlu0 %v1126, 16
    %v1213 = vpop.permute.xlu0 %1212
    %1214 = vrot.lane.b32.xlu0 %v1127, 16
    %v1215 = vpop.permute.xlu0 %1214
    %1216 = vrot.lane.b32.xlu0 %v1128, 16
    %v1217 = vpop.permute.xlu0 %1216
    %1218 = vrot.lane.b32.xlu0 %v1129, 16
    %v1219 = vpop.permute.xlu0 %1218
    %1220 = vrot.lane.b32.xlu0 %v1130, 16
    %v1221 = vpop.permute.xlu0 %1220
    %1222 = vrot.lane.b32.xlu0 %v1131, 16
    %v1223 = vpop.permute.xlu0 %1222
    %1224 = vrot.lane.b32.xlu0 %v1132, 16
    %v1225 = vpop.permute.xlu0 %1224
    %1226 = vrot.lane.b32.xlu0 %v1133, 16
    %v1227 = vpop.permute.xlu0 %1226
    %1228 = vrot.lane.b32.xlu0 %v1134, 16
    %v1229 = vpop.permute.xlu0 %1228
    %1230 = vrot.lane.b32.xlu0 %v1135, 16
    %v1231 = vpop.permute.xlu0 %1230
    %v1264 = vmul.f32 %v1041, %v1169
    %v1265 = vmul.f32 %v1043, %v1171
    %v1266 = vmul.f32 %v1045, %v1173
    %v1267 = vmul.f32 %v1047, %v1175
    %v1268 = vmul.f32 %v1049, %v1177
    %v1269 = vmul.f32 %v1051, %v1179
    %v1270 = vmul.f32 %v1053, %v1181
    %v1271 = vmul.f32 %v1055, %v1183
    %v1272 = vmul.f32 %v1057, %v1185
    %v1273 = vmul.f32 %v1059, %v1187
    %v1274 = vmul.f32 %v1061, %v1189
    %v1275 = vmul.f32 %v1063, %v1191
    %v1276 = vmul.f32 %v1065, %v1193
    %v1277 = vmul.f32 %v1067, %v1195
    %v1278 = vmul.f32 %v1069, %v1197
    %v1279 = vmul.f32 %v1071, %v1199
    %v1280 = vmul.f32 %v1073, %v1201
    %v1281 = vmul.f32 %v1075, %v1203
    %v1282 = vmul.f32 %v1077, %v1205
    %v1283 = vmul.f32 %v1079, %v1207
    %v1284 = vmul.f32 %v1081, %v1209
    %v1285 = vmul.f32 %v1083, %v1211
    %v1286 = vmul.f32 %v1085, %v1213
    %v1287 = vmul.f32 %v1087, %v1215
    %v1288 = vmul.f32 %v1089, %v1217
    %v1289 = vmul.f32 %v1091, %v1219
    %v1290 = vmul.f32 %v1093, %v1221
    %v1291 = vmul.f32 %v1095, %v1223
    %v1292 = vmul.f32 %v1097, %v1225
    %v1293 = vmul.f32 %v1099, %v1227
    %v1294 = vmul.f32 %v1101, %v1229
    %v1295 = vmul.f32 %v1103, %v1231
    %1328 = vrot.lane.b32.xlu0 %v1264, 112
    %v1329 = vpop.permute.xlu0 %1328
    %1330 = vrot.lane.b32.xlu0 %v1265, 112
    %v1331 = vpop.permute.xlu0 %1330
    %1332 = vrot.lane.b32.xlu0 %v1266, 112
    %v1333 = vpop.permute.xlu0 %1332
    %1334 = vrot.lane.b32.xlu0 %v1267, 112
    %v1335 = vpop.permute.xlu0 %1334
    %1336 = vrot.lane.b32.xlu0 %v1268, 112
    %v1337 = vpop.permute.xlu0 %1336
    %1338 = vrot.lane.b32.xlu0 %v1269, 112
    %v1339 = vpop.permute.xlu0 %1338
    %1340 = vrot.lane.b32.xlu0 %v1270, 112
    %v1341 = vpop.permute.xlu0 %1340
    %1342 = vrot.lane.b32.xlu0 %v1271, 112
    %v1343 = vpop.permute.xlu0 %1342
    %1344 = vrot.lane.b32.xlu0 %v1272, 112
    %v1345 = vpop.permute.xlu0 %1344
    %1346 = vrot.lane.b32.xlu0 %v1273, 112
    %v1347 = vpop.permute.xlu0 %1346
    %1348 = vrot.lane.b32.xlu0 %v1274, 112
    %v1349 = vpop.permute.xlu0 %1348
    %1350 = vrot.lane.b32.xlu0 %v1275, 112
    %v1351 = vpop.permute.xlu0 %1350
    %1352 = vrot.lane.b32.xlu0 %v1276, 112
    %v1353 = vpop.permute.xlu0 %1352
    %1354 = vrot.lane.b32.xlu0 %v1277, 112
    %v1355 = vpop.permute.xlu0 %1354
    %1356 = vrot.lane.b32.xlu0 %v1278, 112
    %v1357 = vpop.permute.xlu0 %1356
    %1358 = vrot.lane.b32.xlu0 %v1279, 112
    %v1359 = vpop.permute.xlu0 %1358
    %1360 = vrot.lane.b32.xlu0 %v1280, 112
    %v1361 = vpop.permute.xlu0 %1360
    %1362 = vrot.lane.b32.xlu0 %v1281, 112
    %v1363 = vpop.permute.xlu0 %1362
    %1364 = vrot.lane.b32.xlu0 %v1282, 112
    %v1365 = vpop.permute.xlu0 %1364
    %1366 = vrot.lane.b32.xlu0 %v1283, 112
    %v1367 = vpop.permute.xlu0 %1366
    %1368 = vrot.lane.b32.xlu0 %v1284, 112
    %v1369 = vpop.permute.xlu0 %1368
    %1370 = vrot.lane.b32.xlu0 %v1285, 112
    %v1371 = vpop.permute.xlu0 %1370
    %1372 = vrot.lane.b32.xlu0 %v1286, 112
    %v1373 = vpop.permute.xlu0 %1372
    %1374 = vrot.lane.b32.xlu0 %v1287, 112
    %v1375 = vpop.permute.xlu0 %1374
    %1376 = vrot.lane.b32.xlu0 %v1288, 112
    %v1377 = vpop.permute.xlu0 %1376
    %1378 = vrot.lane.b32.xlu0 %v1289, 112
    %v1379 = vpop.permute.xlu0 %1378
    %1380 = vrot.lane.b32.xlu0 %v1290, 112
    %v1381 = vpop.permute.xlu0 %1380
    %1382 = vrot.lane.b32.xlu0 %v1291, 112
    %v1383 = vpop.permute.xlu0 %1382
    %1384 = vrot.lane.b32.xlu0 %v1292, 112
    %v1385 = vpop.permute.xlu0 %1384
    %1386 = vrot.lane.b32.xlu0 %v1293, 112
    %v1387 = vpop.permute.xlu0 %1386
    %1388 = vrot.lane.b32.xlu0 %v1294, 112
    %v1389 = vpop.permute.xlu0 %1388
    %1390 = vrot.lane.b32.xlu0 %v1295, 112
    %v1391 = vpop.permute.xlu0 %1390
    %v1424 = vadd.f32 %v849, %v1329
    %v1425 = vadd.f32 %v852, %v1331
    %v1426 = vadd.f32 %v855, %v1333
    %v1427 = vadd.f32 %v858, %v1335
    %v1428 = vadd.f32 %v861, %v1337
    %v1429 = vadd.f32 %v864, %v1339
    %v1430 = vadd.f32 %v867, %v1341
    %v1431 = vadd.f32 %v870, %v1343
    %v1432 = vadd.f32 %v873, %v1345
    %v1433 = vadd.f32 %v876, %v1347
    %v1434 = vadd.f32 %v879, %v1349
    %v1435 = vadd.f32 %v882, %v1351
    %v1436 = vadd.f32 %v885, %v1353
    %v1437 = vadd.f32 %v888, %v1355
    %v1438 = vadd.f32 %v891, %v1357
    %v1439 = vadd.f32 %v894, %v1359
    %v1440 = vadd.f32 %v897, %v1361
    %v1441 = vadd.f32 %v900, %v1363
    %v1442 = vadd.f32 %v903, %v1365
    %v1443 = vadd.f32 %v906, %v1367
    %v1444 = vadd.f32 %v909, %v1369
    %v1445 = vadd.f32 %v912, %v1371
    %v1446 = vadd.f32 %v915, %v1373
    %v1447 = vadd.f32 %v918, %v1375
    %v1448 = vadd.f32 %v921, %v1377
    %v1449 = vadd.f32 %v924, %v1379
    %v1450 = vadd.f32 %v927, %v1381
    %v1451 = vadd.f32 %v930, %v1383
    %v1452 = vadd.f32 %v933, %v1385
    %v1453 = vadd.f32 %v936, %v1387
    %v1454 = vadd.f32 %v939, %v1389
    %v1455 = vadd.f32 %v942, %v1391
    %v1456 = vld [vmem:[#allocation2 + $0x110] sm:$0xff]
    %v1457 = vld [vmem:[#allocation2 + $0x118] sm:$0xff]
    %v1458 = vld [vmem:[#allocation2 + $0x120] sm:$0xff]
    %v1459 = vld [vmem:[#allocation2 + $0x128] sm:$0xff]
    %v1460 = vld [vmem:[#allocation2 + $0x130] sm:$0xff]
    %v1461 = vld [vmem:[#allocation2 + $0x138] sm:$0xff]
    %v1462 = vld [vmem:[#allocation2 + $0x140] sm:$0x1]
    %v1464 = vsel %vm734, %v1424, 0
    %v1467 = vsel %vm734, %v1425, 0
    %v1470 = vsel %vm734, %v1426, 0
    %v1473 = vsel %vm734, %v1427, 0
    %v1476 = vsel %vm734, %v1428, 0
    %v1479 = vsel %vm734, %v1429, 0
    %v1482 = vsel %vm734, %v1430, 0
    %v1485 = vsel %vm734, %v1431, 0
    %v1488 = vsel %vm734, %v1432, 0
    %v1491 = vsel %vm734, %v1433, 0
    %v1494 = vsel %vm734, %v1434, 0
    %v1497 = vsel %vm734, %v1435, 0
    %v1500 = vsel %vm734, %v1436, 0
    %v1503 = vsel %vm734, %v1437, 0
    %v1506 = vsel %vm734, %v1438, 0
    %v1509 = vsel %vm734, %v1439, 0
    %v1512 = vsel %vm734, %v1440, 0
    %v1515 = vsel %vm734, %v1441, 0
    %v1518 = vsel %vm734, %v1442, 0
    %v1521 = vsel %vm734, %v1443, 0
    %v1524 = vsel %vm734, %v1444, 0
    %v1527 = vsel %vm734, %v1445, 0
    %v1530 = vsel %vm734, %v1446, 0
    %v1533 = vsel %vm734, %v1447, 0
    %v1536 = vsel %vm734, %v1448, 0
    %v1539 = vsel %vm734, %v1449, 0
    %v1542 = vsel %vm734, %v1450, 0
    %v1545 = vsel %vm734, %v1451, 0
    %v1548 = vsel %vm734, %v1452, 0
    %v1551 = vsel %vm734, %v1453, 0
    %v1554 = vsel %vm734, %v1454, 0
    %v1557 = vsel %vm734, %v1455, 0
    %1559 = vmatpush.msra.mxu0 0.0
    %1560 = vmatpush.msra.mxu0 0.0
    %1561 = vmatpush.msra.mxu0 0.0
    %1562 = vmatpush.msra.mxu0 0.0
    %1563 = vmatpush.msra.mxu0 0.0
    %1564 = vmatpush.msra.mxu0 0.0
    %1565 = vmatpush.msra.mxu0 0.0
    %1566 = vmatpush.msra.mxu0 0.0
    %1567 = vmatpush.msra.mxu0 0.0
    %1568 = vmatpush.msra.mxu0 0.0
    %1569 = vmatpush.msra.mxu0 0.0
    %1570 = vmatpush.msra.mxu0 0.0
    %1571 = vmatpush.msra.mxu0 0.0
    %1572 = vmatpush.msra.mxu0 0.0
    %1573 = vmatpush.msra.mxu0 %v1457
    %1574 = vmatpush.msra.mxu0 %v1456
    %1575 = vmatmul.f32.gmra.mxu0 %v1464
    %v1576 = vpop.f32.mrf.mxu0
    %v1577 = vadd.f32 0.0, %v1576
    %1578 = vmatmul.f32.gmra.mxu0 %v1467
    %v1579 = vpop.f32.mrf.mxu0
    %v1580 = vadd.f32 0.0, %v1579
    %1581 = vmatmul.f32.gmra.mxu0 %v1470
    %v1582 = vpop.f32.mrf.mxu0
    %v1583 = vadd.f32 0.0, %v1582
    %1584 = vmatmul.f32.gmra.mxu0 %v1473
    %v1585 = vpop.f32.mrf.mxu0
    %v1586 = vadd.f32 0.0, %v1585
    %1587 = vmatmul.f32.gmra.mxu0 %v1476
    %v1588 = vpop.f32.mrf.mxu0
    %v1589 = vadd.f32 0.0, %v1588
    %1590 = vmatmul.f32.gmra.mxu0 %v1479
    %v1591 = vpop.f32.mrf.mxu0
    %v1592 = vadd.f32 0.0, %v1591
    %1593 = vmatmul.f32.gmra.mxu0 %v1482
    %v1594 = vpop.f32.mrf.mxu0
    %v1595 = vadd.f32 0.0, %v1594
    %1596 = vmatmul.f32.gmra.mxu0 %v1485
    %v1597 = vpop.f32.mrf.mxu0
    %v1598 = vadd.f32 0.0, %v1597
    %1599 = vmatmul.f32.gmra.mxu0 %v1488
    %v1600 = vpop.f32.mrf.mxu0
    %v1601 = vadd.f32 0.0, %v1600
    %1602 = vmatmul.f32.gmra.mxu0 %v1491
    %v1603 = vpop.f32.mrf.mxu0
    %v1604 = vadd.f32 0.0, %v1603
    %1605 = vmatmul.f32.gmra.mxu0 %v1494
    %v1606 = vpop.f32.mrf.mxu0
    %v1607 = vadd.f32 0.0, %v1606
    %1608 = vmatmul.f32.gmra.mxu0 %v1497
    %v1609 = vpop.f32.mrf.mxu0
    %v1610 = vadd.f32 0.0, %v1609
    %1611 = vmatmul.f32.gmra.mxu0 %v1500
    %v1612 = vpop.f32.mrf.mxu0
    %v1613 = vadd.f32 0.0, %v1612
    %1614 = vmatmul.f32.gmra.mxu0 %v1503
    %v1615 = vpop.f32.mrf.mxu0
    %v1616 = vadd.f32 0.0, %v1615
    %1617 = vmatmul.f32.gmra.mxu0 %v1506
    %v1618 = vpop.f32.mrf.mxu0
    %v1619 = vadd.f32 0.0, %v1618
    %1620 = vmatmul.f32.gmra.mxu0 %v1509
    %v1621 = vpop.f32.mrf.mxu0
    %v1622 = vadd.f32 0.0, %v1621
    %1623 = vmatmul.f32.gmra.mxu0 %v1512
    %v1624 = vpop.f32.mrf.mxu0
    %v1625 = vadd.f32 0.0, %v1624
    %1626 = vmatmul.f32.gmra.mxu0 %v1515
    %v1627 = vpop.f32.mrf.mxu0
    %v1628 = vadd.f32 0.0, %v1627
    %1629 = vmatmul.f32.gmra.mxu0 %v1518
    %v1630 = vpop.f32.mrf.mxu0
    %v1631 = vadd.f32 0.0, %v1630
    %1632 = vmatmul.f32.gmra.mxu0 %v1521
    %v1633 = vpop.f32.mrf.mxu0
    %v1634 = vadd.f32 0.0, %v1633
    %1635 = vmatmul.f32.gmra.mxu0 %v1524
    %v1636 = vpop.f32.mrf.mxu0
    %v1637 = vadd.f32 0.0, %v1636
    %1638 = vmatmul.f32.gmra.mxu0 %v1527
    %v1639 = vpop.f32.mrf.mxu0
    %v1640 = vadd.f32 0.0, %v1639
    %1641 = vmatmul.f32.gmra.mxu0 %v1530
    %v1642 = vpop.f32.mrf.mxu0
    %v1643 = vadd.f32 0.0, %v1642
    %1644 = vmatmul.f32.gmra.mxu0 %v1533
    %v1645 = vpop.f32.mrf.mxu0
    %v1646 = vadd.f32 0.0, %v1645
    %1647 = vmatmul.f32.gmra.mxu0 %v1536
    %v1648 = vpop.f32.mrf.mxu0
    %v1649 = vadd.f32 0.0, %v1648
    %1650 = vmatmul.f32.gmra.mxu0 %v1539
    %v1651 = vpop.f32.mrf.mxu0
    %v1652 = vadd.f32 0.0, %v1651
    %1653 = vmatmul.f32.gmra.mxu0 %v1542
    %v1654 = vpop.f32.mrf.mxu0
    %v1655 = vadd.f32 0.0, %v1654
    %1656 = vmatmul.f32.gmra.mxu0 %v1545
    %v1657 = vpop.f32.mrf.mxu0
    %v1658 = vadd.f32 0.0, %v1657
    %1659 = vmatmul.f32.gmra.mxu0 %v1548
    %v1660 = vpop.f32.mrf.mxu0
    %v1661 = vadd.f32 0.0, %v1660
    %1662 = vmatmul.f32.gmra.mxu0 %v1551
    %v1663 = vpop.f32.mrf.mxu0
    %v1664 = vadd.f32 0.0, %v1663
    %1665 = vmatmul.f32.gmra.mxu0 %v1554
    %v1666 = vpop.f32.mrf.mxu0
    %v1667 = vadd.f32 0.0, %v1666
    %1668 = vmatmul.f32.gmra.mxu0 %v1557
    %v1669 = vpop.f32.mrf.mxu0
    %v1670 = vadd.f32 0.0, %v1669
    %1671 = vdwg.mxu0
    %v1672 = vmul.f32 %v1577, 2.0
    %v1673 = vmul.f32 %v1580, 2.0
    %v1674 = vmul.f32 %v1583, 2.0
    %v1675 = vmul.f32 %v1586, 2.0
    %v1676 = vmul.f32 %v1589, 2.0
    %v1677 = vmul.f32 %v1592, 2.0
    %v1678 = vmul.f32 %v1595, 2.0
    %v1679 = vmul.f32 %v1598, 2.0
    %v1680 = vmul.f32 %v1601, 2.0
    %v1681 = vmul.f32 %v1604, 2.0
    %v1682 = vmul.f32 %v1607, 2.0
    %v1683 = vmul.f32 %v1610, 2.0
    %v1684 = vmul.f32 %v1613, 2.0
    %v1685 = vmul.f32 %v1616, 2.0
    %v1686 = vmul.f32 %v1619, 2.0
    %v1687 = vmul.f32 %v1622, 2.0
    %v1688 = vmul.f32 %v1625, 2.0
    %v1689 = vmul.f32 %v1628, 2.0
    %v1690 = vmul.f32 %v1631, 2.0
    %v1691 = vmul.f32 %v1634, 2.0
    %v1692 = vmul.f32 %v1637, 2.0
    %v1693 = vmul.f32 %v1640, 2.0
    %v1694 = vmul.f32 %v1643, 2.0
    %v1695 = vmul.f32 %v1646, 2.0
    %v1696 = vmul.f32 %v1649, 2.0
    %v1697 = vmul.f32 %v1652, 2.0
    %v1698 = vmul.f32 %v1655, 2.0
    %v1699 = vmul.f32 %v1658, 2.0
    %v1700 = vmul.f32 %v1661, 2.0
    %v1701 = vmul.f32 %v1664, 2.0
    %v1702 = vmul.f32 %v1667, 2.0
    %v1703 = vmul.f32 %v1670, 2.0
    %v1704 = vperm.slane %v1462, 0
    %v1705 = vsub.f32 %v1704, %v1672
    %v1706 = vsub.f32 %v1704, %v1673
    %v1707 = vsub.f32 %v1704, %v1674
    %v1708 = vsub.f32 %v1704, %v1675
    %v1709 = vsub.f32 %v1704, %v1676
    %v1710 = vsub.f32 %v1704, %v1677
    %v1711 = vsub.f32 %v1704, %v1678
    %v1712 = vsub.f32 %v1704, %v1679
    %v1713 = vsub.f32 %v1704, %v1680
    %v1714 = vsub.f32 %v1704, %v1681
    %v1715 = vsub.f32 %v1704, %v1682
    %v1716 = vsub.f32 %v1704, %v1683
    %v1717 = vsub.f32 %v1704, %v1684
    %v1718 = vsub.f32 %v1704, %v1685
    %v1719 = vsub.f32 %v1704, %v1686
    %v1720 = vsub.f32 %v1704, %v1687
    %v1721 = vsub.f32 %v1704, %v1688
    %v1722 = vsub.f32 %v1704, %v1689
    %v1723 = vsub.f32 %v1704, %v1690
    %v1724 = vsub.f32 %v1704, %v1691
    %v1725 = vsub.f32 %v1704, %v1692
    %v1726 = vsub.f32 %v1704, %v1693
    %v1727 = vsub.f32 %v1704, %v1694
    %v1728 = vsub.f32 %v1704, %v1695
    %v1729 = vsub.f32 %v1704, %v1696
    %v1730 = vsub.f32 %v1704, %v1697
    %v1731 = vsub.f32 %v1704, %v1698
    %v1732 = vsub.f32 %v1704, %v1699
    %v1733 = vsub.f32 %v1704, %v1700
    %v1734 = vsub.f32 %v1704, %v1701
    %v1735 = vsub.f32 %v1704, %v1702
    %v1736 = vsub.f32 %v1704, %v1703
    %v1737 = vlaneseq
    %v1738 = vand.u32 %v1737, 127
    %vm1739 = vcmp.ge.s32.totalorder %v1738, 16
    %v1740 = vsel %vm1739, 1, 0
    %v1741 = vmul.u32 %v1740, 16
    %v1742 = vsub.s32 %v1738, %v1741
    %v1743 = vsel %vm1739, inf, %v1705
    %v1744 = vsel %vm1739, inf, %v1706
    %v1745 = vsel %vm1739, inf, %v1707
    %v1746 = vsel %vm1739, inf, %v1708
    %v1747 = vsel %vm1739, inf, %v1709
    %v1748 = vsel %vm1739, inf, %v1710
    %v1749 = vsel %vm1739, inf, %v1711
    %v1750 = vsel %vm1739, inf, %v1712
    %v1751 = vsel %vm1739, inf, %v1713
    %v1752 = vsel %vm1739, inf, %v1714
    %v1753 = vsel %vm1739, inf, %v1715
    %v1754 = vsel %vm1739, inf, %v1716
    %v1755 = vsel %vm1739, inf, %v1717
    %v1756 = vsel %vm1739, inf, %v1718
    %v1757 = vsel %vm1739, inf, %v1719
    %v1758 = vsel %vm1739, inf, %v1720
    %v1759 = vsel %vm1739, inf, %v1721
    %v1760 = vsel %vm1739, inf, %v1722
    %v1761 = vsel %vm1739, inf, %v1723
    %v1762 = vsel %vm1739, inf, %v1724
    %v1763 = vsel %vm1739, inf, %v1725
    %v1764 = vsel %vm1739, inf, %v1726
    %v1765 = vsel %vm1739, inf, %v1727
    %v1766 = vsel %vm1739, inf, %v1728
    %v1767 = vsel %vm1739, inf, %v1729
    %v1768 = vsel %vm1739, inf, %v1730
    %v1769 = vsel %vm1739, inf, %v1731
    %v1770 = vsel %vm1739, inf, %v1732
    %v1771 = vsel %vm1739, inf, %v1733
    %v1772 = vsel %vm1739, inf, %v1734
    %v1773 = vsel %vm1739, inf, %v1735
    %v1774 = vsel %vm1739, inf, %v1736
    %v1775 = vsel %vm488, %v1743, inf
    %1776 = vmin.xlane.f32.xlu0 %v1775
    %v1777 = vpop.xlane.xlu0 %1776
    %v1778 = vsel %vm488, %v1744, inf
    %1779 = vmin.xlane.f32.xlu0 %v1778
    %v1780 = vpop.xlane.xlu0 %1779
    %v1781 = vsel %vm488, %v1745, inf
    %1782 = vmin.xlane.f32.xlu0 %v1781
    %v1783 = vpop.xlane.xlu0 %1782
    %v1784 = vsel %vm488, %v1746, inf
    %1785 = vmin.xlane.f32.xlu0 %v1784
    %v1786 = vpop.xlane.xlu0 %1785
    %v1787 = vsel %vm488, %v1747, inf
    %1788 = vmin.xlane.f32.xlu0 %v1787
    %v1789 = vpop.xlane.xlu0 %1788
    %v1790 = vsel %vm488, %v1748, inf
    %1791 = vmin.xlane.f32.xlu0 %v1790
    %v1792 = vpop.xlane.xlu0 %1791
    %v1793 = vsel %vm488, %v1749, inf
    %1794 = vmin.xlane.f32.xlu0 %v1793
    %v1795 = vpop.xlane.xlu0 %1794
    %v1796 = vsel %vm488, %v1750, inf
    %1797 = vmin.xlane.f32.xlu0 %v1796
    %v1798 = vpop.xlane.xlu0 %1797
    %v1799 = vsel %vm488, %v1751, inf
    %1800 = vmin.xlane.f32.xlu0 %v1799
    %v1801 = vpop.xlane.xlu0 %1800
    %v1802 = vsel %vm488, %v1752, inf
    %1803 = vmin.xlane.f32.xlu0 %v1802
    %v1804 = vpop.xlane.xlu0 %1803
    %v1805 = vsel %vm488, %v1753, inf
    %1806 = vmin.xlane.f32.xlu0 %v1805
    %v1807 = vpop.xlane.xlu0 %1806
    %v1808 = vsel %vm488, %v1754, inf
    %1809 = vmin.xlane.f32.xlu0 %v1808
    %v1810 = vpop.xlane.xlu0 %1809
    %v1811 = vsel %vm488, %v1755, inf
    %1812 = vmin.xlane.f32.xlu0 %v1811
    %v1813 = vpop.xlane.xlu0 %1812
    %v1814 = vsel %vm488, %v1756, inf
    %1815 = vmin.xlane.f32.xlu0 %v1814
    %v1816 = vpop.xlane.xlu0 %1815
    %v1817 = vsel %vm488, %v1757, inf
    %1818 = vmin.xlane.f32.xlu0 %v1817
    %v1819 = vpop.xlane.xlu0 %1818
    %v1820 = vsel %vm488, %v1758, inf
    %1821 = vmin.xlane.f32.xlu0 %v1820
    %v1822 = vpop.xlane.xlu0 %1821
    %v1823 = vsel %vm488, %v1759, inf
    %1824 = vmin.xlane.f32.xlu0 %v1823
    %v1825 = vpop.xlane.xlu0 %1824
    %v1826 = vsel %vm488, %v1760, inf
    %1827 = vmin.xlane.f32.xlu0 %v1826
    %v1828 = vpop.xlane.xlu0 %1827
    %v1829 = vsel %vm488, %v1761, inf
    %1830 = vmin.xlane.f32.xlu0 %v1829
    %v1831 = vpop.xlane.xlu0 %1830
    %v1832 = vsel %vm488, %v1762, inf
    %1833 = vmin.xlane.f32.xlu0 %v1832
    %v1834 = vpop.xlane.xlu0 %1833
    %v1835 = vsel %vm488, %v1763, inf
    %1836 = vmin.xlane.f32.xlu0 %v1835
    %v1837 = vpop.xlane.xlu0 %1836
    %v1838 = vsel %vm488, %v1764, inf
    %1839 = vmin.xlane.f32.xlu0 %v1838
    %v1840 = vpop.xlane.xlu0 %1839
    %v1841 = vsel %vm488, %v1765, inf
    %1842 = vmin.xlane.f32.xlu0 %v1841
    %v1843 = vpop.xlane.xlu0 %1842
    %v1844 = vsel %vm488, %v1766, inf
    %1845 = vmin.xlane.f32.xlu0 %v1844
    %v1846 = vpop.xlane.xlu0 %1845
    %v1847 = vsel %vm488, %v1767, inf
    %1848 = vmin.xlane.f32.xlu0 %v1847
    %v1849 = vpop.xlane.xlu0 %1848
    %v1850 = vsel %vm488, %v1768, inf
    %1851 = vmin.xlane.f32.xlu0 %v1850
    %v1852 = vpop.xlane.xlu0 %1851
    %v1853 = vsel %vm488, %v1769, inf
    %1854 = vmin.xlane.f32.xlu0 %v1853
    %v1855 = vpop.xlane.xlu0 %1854
    %v1856 = vsel %vm488, %v1770, inf
    %1857 = vmin.xlane.f32.xlu0 %v1856
    %v1858 = vpop.xlane.xlu0 %1857
    %v1859 = vsel %vm488, %v1771, inf
    %1860 = vmin.xlane.f32.xlu0 %v1859
    %v1861 = vpop.xlane.xlu0 %1860
    %v1862 = vsel %vm488, %v1772, inf
    %1863 = vmin.xlane.f32.xlu0 %v1862
    %v1864 = vpop.xlane.xlu0 %1863
    %v1865 = vsel %vm488, %v1773, inf
    %1866 = vmin.xlane.f32.xlu0 %v1865
    %v1867 = vpop.xlane.xlu0 %1866
    %v1868 = vsel %vm488, %v1774, inf
    %1869 = vmin.xlane.f32.xlu0 %v1868
    %v1870 = vpop.xlane.xlu0 %1869
    %v1871 = vsel %vm1739, %v1705, inf
    %v1872 = vsel %vm1739, %v1706, inf
    %v1873 = vsel %vm1739, %v1707, inf
    %v1874 = vsel %vm1739, %v1708, inf
    %v1875 = vsel %vm1739, %v1709, inf
    %v1876 = vsel %vm1739, %v1710, inf
    %v1877 = vsel %vm1739, %v1711, inf
    %v1878 = vsel %vm1739, %v1712, inf
    %v1879 = vsel %vm1739, %v1713, inf
    %v1880 = vsel %vm1739, %v1714, inf
    %v1881 = vsel %vm1739, %v1715, inf
    %v1882 = vsel %vm1739, %v1716, inf
    %v1883 = vsel %vm1739, %v1717, inf
    %v1884 = vsel %vm1739, %v1718, inf
    %v1885 = vsel %vm1739, %v1719, inf
    %v1886 = vsel %vm1739, %v1720, inf
    %v1887 = vsel %vm1739, %v1721, inf
    %v1888 = vsel %vm1739, %v1722, inf
    %v1889 = vsel %vm1739, %v1723, inf
    %v1890 = vsel %vm1739, %v1724, inf
    %v1891 = vsel %vm1739, %v1725, inf
    %v1892 = vsel %vm1739, %v1726, inf
    %v1893 = vsel %vm1739, %v1727, inf
    %v1894 = vsel %vm1739, %v1728, inf
    %v1895 = vsel %vm1739, %v1729, inf
    %v1896 = vsel %vm1739, %v1730, inf
    %v1897 = vsel %vm1739, %v1731, inf
    %v1898 = vsel %vm1739, %v1732, inf
    %v1899 = vsel %vm1739, %v1733, inf
    %v1900 = vsel %vm1739, %v1734, inf
    %v1901 = vsel %vm1739, %v1735, inf
    %v1902 = vsel %vm1739, %v1736, inf
    %v1903 = vsel %vm488, %v1871, inf
    %1904 = vmin.xlane.f32.xlu0 %v1903
    %v1905 = vpop.xlane.xlu0 %1904
    %v1906 = vsel %vm488, %v1872, inf
    %1907 = vmin.xlane.f32.xlu0 %v1906
    %v1908 = vpop.xlane.xlu0 %1907
    %v1909 = vsel %vm488, %v1873, inf
    %1910 = vmin.xlane.f32.xlu0 %v1909
    %v1911 = vpop.xlane.xlu0 %1910
    %v1912 = vsel %vm488, %v1874, inf
    %1913 = vmin.xlane.f32.xlu0 %v1912
    %v1914 = vpop.xlane.xlu0 %1913
    %v1915 = vsel %vm488, %v1875, inf
    %1916 = vmin.xlane.f32.xlu0 %v1915
    %v1917 = vpop.xlane.xlu0 %1916
    %v1918 = vsel %vm488, %v1876, inf
    %1919 = vmin.xlane.f32.xlu0 %v1918
    %v1920 = vpop.xlane.xlu0 %1919
    %v1921 = vsel %vm488, %v1877, inf
    %1922 = vmin.xlane.f32.xlu0 %v1921
    %v1923 = vpop.xlane.xlu0 %1922
    %v1924 = vsel %vm488, %v1878, inf
    %1925 = vmin.xlane.f32.xlu0 %v1924
    %v1926 = vpop.xlane.xlu0 %1925
    %v1927 = vsel %vm488, %v1879, inf
    %1928 = vmin.xlane.f32.xlu0 %v1927
    %v1929 = vpop.xlane.xlu0 %1928
    %v1930 = vsel %vm488, %v1880, inf
    %1931 = vmin.xlane.f32.xlu0 %v1930
    %v1932 = vpop.xlane.xlu0 %1931
    %v1933 = vsel %vm488, %v1881, inf
    %1934 = vmin.xlane.f32.xlu0 %v1933
    %v1935 = vpop.xlane.xlu0 %1934
    %v1936 = vsel %vm488, %v1882, inf
    %1937 = vmin.xlane.f32.xlu0 %v1936
    %v1938 = vpop.xlane.xlu0 %1937
    %v1939 = vsel %vm488, %v1883, inf
    %1940 = vmin.xlane.f32.xlu0 %v1939
    %v1941 = vpop.xlane.xlu0 %1940
    %v1942 = vsel %vm488, %v1884, inf
    %1943 = vmin.xlane.f32.xlu0 %v1942
    %v1944 = vpop.xlane.xlu0 %1943
    %v1945 = vsel %vm488, %v1885, inf
    %1946 = vmin.xlane.f32.xlu0 %v1945
    %v1947 = vpop.xlane.xlu0 %1946
    %v1948 = vsel %vm488, %v1886, inf
    %1949 = vmin.xlane.f32.xlu0 %v1948
    %v1950 = vpop.xlane.xlu0 %1949
    %v1951 = vsel %vm488, %v1887, inf
    %1952 = vmin.xlane.f32.xlu0 %v1951
    %v1953 = vpop.xlane.xlu0 %1952
    %v1954 = vsel %vm488, %v1888, inf
    %1955 = vmin.xlane.f32.xlu0 %v1954
    %v1956 = vpop.xlane.xlu0 %1955
    %v1957 = vsel %vm488, %v1889, inf
    %1958 = vmin.xlane.f32.xlu0 %v1957
    %v1959 = vpop.xlane.xlu0 %1958
    %v1960 = vsel %vm488, %v1890, inf
    %1961 = vmin.xlane.f32.xlu0 %v1960
    %v1962 = vpop.xlane.xlu0 %1961
    %v1963 = vsel %vm488, %v1891, inf
    %1964 = vmin.xlane.f32.xlu0 %v1963
    %v1965 = vpop.xlane.xlu0 %1964
    %v1966 = vsel %vm488, %v1892, inf
    %1967 = vmin.xlane.f32.xlu0 %v1966
    %v1968 = vpop.xlane.xlu0 %1967
    %v1969 = vsel %vm488, %v1893, inf
    %1970 = vmin.xlane.f32.xlu0 %v1969
    %v1971 = vpop.xlane.xlu0 %1970
    %v1972 = vsel %vm488, %v1894, inf
    %1973 = vmin.xlane.f32.xlu0 %v1972
    %v1974 = vpop.xlane.xlu0 %1973
    %v1975 = vsel %vm488, %v1895, inf
    %1976 = vmin.xlane.f32.xlu0 %v1975
    %v1977 = vpop.xlane.xlu0 %1976
    %v1978 = vsel %vm488, %v1896, inf
    %1979 = vmin.xlane.f32.xlu0 %v1978
    %v1980 = vpop.xlane.xlu0 %1979
    %v1981 = vsel %vm488, %v1897, inf
    %1982 = vmin.xlane.f32.xlu0 %v1981
    %v1983 = vpop.xlane.xlu0 %1982
    %v1984 = vsel %vm488, %v1898, inf
    %1985 = vmin.xlane.f32.xlu0 %v1984
    %v1986 = vpop.xlane.xlu0 %1985
    %v1987 = vsel %vm488, %v1899, inf
    %1988 = vmin.xlane.f32.xlu0 %v1987
    %v1989 = vpop.xlane.xlu0 %1988
    %v1990 = vsel %vm488, %v1900, inf
    %1991 = vmin.xlane.f32.xlu0 %v1990
    %v1992 = vpop.xlane.xlu0 %1991
    %v1993 = vsel %vm488, %v1901, inf
    %1994 = vmin.xlane.f32.xlu0 %v1993
    %v1995 = vpop.xlane.xlu0 %1994
    %v1996 = vsel %vm488, %v1902, inf
    %1997 = vmin.xlane.f32.xlu0 %v1996
    %v1998 = vpop.xlane.xlu0 %1997
    %vm1999 = vmxor %vm1739, 1
    %vm2000 = vcmp.le.f32.partialorder %v1705, %v1777
    %vm2001 = vcmp.le.f32.partialorder %v1706, %v1780
    %vm2002 = vcmp.le.f32.partialorder %v1707, %v1783
    %vm2003 = vcmp.le.f32.partialorder %v1708, %v1786
    %vm2004 = vcmp.le.f32.partialorder %v1709, %v1789
    %vm2005 = vcmp.le.f32.partialorder %v1710, %v1792
    %vm2006 = vcmp.le.f32.partialorder %v1711, %v1795
    %vm2007 = vcmp.le.f32.partialorder %v1712, %v1798
    %vm2008 = vcmp.le.f32.partialorder %v1713, %v1801
    %vm2009 = vcmp.le.f32.partialorder %v1714, %v1804
    %vm2010 = vcmp.le.f32.partialorder %v1715, %v1807
    %vm2011 = vcmp.le.f32.partialorder %v1716, %v1810
    %vm2012 = vcmp.le.f32.partialorder %v1717, %v1813
    %vm2013 = vcmp.le.f32.partialorder %v1718, %v1816
    %vm2014 = vcmp.le.f32.partialorder %v1719, %v1819
    %vm2015 = vcmp.le.f32.partialorder %v1720, %v1822
    %vm2016 = vcmp.le.f32.partialorder %v1721, %v1825
    %vm2017 = vcmp.le.f32.partialorder %v1722, %v1828
    %vm2018 = vcmp.le.f32.partialorder %v1723, %v1831
    %vm2019 = vcmp.le.f32.partialorder %v1724, %v1834
    %vm2020 = vcmp.le.f32.partialorder %v1725, %v1837
    %vm2021 = vcmp.le.f32.partialorder %v1726, %v1840
    %vm2022 = vcmp.le.f32.partialorder %v1727, %v1843
    %vm2023 = vcmp.le.f32.partialorder %v1728, %v1846
    %vm2024 = vcmp.le.f32.partialorder %v1729, %v1849
    %vm2025 = vcmp.le.f32.partialorder %v1730, %v1852
    %vm2026 = vcmp.le.f32.partialorder %v1731, %v1855
    %vm2027 = vcmp.le.f32.partialorder %v1732, %v1858
    %vm2028 = vcmp.le.f32.partialorder %v1733, %v1861
    %vm2029 = vcmp.le.f32.partialorder %v1734, %v1864
    %vm2030 = vcmp.le.f32.partialorder %v1735, %v1867
    %vm2031 = vcmp.le.f32.partialorder %v1736, %v1870
    %vm2032 = vmand %vm1999, %vm2000
    %vm2033 = vmand %vm1999, %vm2001
    %vm2034 = vmand %vm1999, %vm2002
    %vm2035 = vmand %vm1999, %vm2003
    %vm2036 = vmand %vm1999, %vm2004
    %vm2037 = vmand %vm1999, %vm2005
    %vm2038 = vmand %vm1999, %vm2006
    %vm2039 = vmand %vm1999, %vm2007
    %vm2040 = vmand %vm1999, %vm2008
    %vm2041 = vmand %vm1999, %vm2009
    %vm2042 = vmand %vm1999, %vm2010
    %vm2043 = vmand %vm1999, %vm2011
    %vm2044 = vmand %vm1999, %vm2012
    %vm2045 = vmand %vm1999, %vm2013
    %vm2046 = vmand %vm1999, %vm2014
    %vm2047 = vmand %vm1999, %vm2015
    %vm2048 = vmand %vm1999, %vm2016
    %vm2049 = vmand %vm1999, %vm2017
    %vm2050 = vmand %vm1999, %vm2018
    %vm2051 = vmand %vm1999, %vm2019
    %vm2052 = vmand %vm1999, %vm2020
    %vm2053 = vmand %vm1999, %vm2021
    %vm2054 = vmand %vm1999, %vm2022
    %vm2055 = vmand %vm1999, %vm2023
    %vm2056 = vmand %vm1999, %vm2024
    %vm2057 = vmand %vm1999, %vm2025
    %vm2058 = vmand %vm1999, %vm2026
    %vm2059 = vmand %vm1999, %vm2027
    %vm2060 = vmand %vm1999, %vm2028
    %vm2061 = vmand %vm1999, %vm2029
    %vm2062 = vmand %vm1999, %vm2030
    %vm2063 = vmand %vm1999, %vm2031
    %v2064 = vsel %vm2032, %v1742, 16
    %v2065 = vsel %vm2033, %v1742, 16
    %v2066 = vsel %vm2034, %v1742, 16
    %v2067 = vsel %vm2035, %v1742, 16
    %v2068 = vsel %vm2036, %v1742, 16
    %v2069 = vsel %vm2037, %v1742, 16
    %v2070 = vsel %vm2038, %v1742, 16
    %v2071 = vsel %vm2039, %v1742, 16
    %v2072 = vsel %vm2040, %v1742, 16
    %v2073 = vsel %vm2041, %v1742, 16
    %v2074 = vsel %vm2042, %v1742, 16
    %v2075 = vsel %vm2043, %v1742, 16
    %v2076 = vsel %vm2044, %v1742, 16
    %v2077 = vsel %vm2045, %v1742, 16
    %v2078 = vsel %vm2046, %v1742, 16
    %v2079 = vsel %vm2047, %v1742, 16
    %v2080 = vsel %vm2048, %v1742, 16
    %v2081 = vsel %vm2049, %v1742, 16
    %v2082 = vsel %vm2050, %v1742, 16
    %v2083 = vsel %vm2051, %v1742, 16
    %v2084 = vsel %vm2052, %v1742, 16
    %v2085 = vsel %vm2053, %v1742, 16
    %v2086 = vsel %vm2054, %v1742, 16
    %v2087 = vsel %vm2055, %v1742, 16
    %v2088 = vsel %vm2056, %v1742, 16
    %v2089 = vsel %vm2057, %v1742, 16
    %v2090 = vsel %vm2058, %v1742, 16
    %v2091 = vsel %vm2059, %v1742, 16
    %v2092 = vsel %vm2060, %v1742, 16
    %v2093 = vsel %vm2061, %v1742, 16
    %v2094 = vsel %vm2062, %v1742, 16
    %v2095 = vsel %vm2063, %v1742, 16
    %v2096 = vsel %vm488, %v2064, 2147483647
    %v2097 = vand.u32 %v2096, 65535
    %v2098 = vshra.s32 %v2096, 16
    %v2099 = vcvt.s32.f32 %v2097
    %v2100 = vcvt.s32.f32 %v2098
    %2101 = vmin.xlane.f32.xlu0 %v2100
    %v2102 = vpop.xlane.xlu0 %2101
    %vm2103 = vcmp.eq.f32.partialorder %v2100, %v2102
    %v2104 = vsel %vm2103, %v2099, inf
    %2105 = vmin.xlane.f32.xlu0 %v2104
    %v2106 = vpop.xlane.xlu0 %2105
    %v2107 = vcvt.f32.s32 %v2106
    %v2108 = vcvt.f32.s32 %v2102
    %v2109 = vshll.u32 %v2108, 16
    %v2110 = vadd.s32 %v2109, %v2107
    %v2111 = vsel %vm488, %v2065, 2147483647
    %v2112 = vand.u32 %v2111, 65535
    %v2113 = vshra.s32 %v2111, 16
    %v2114 = vcvt.s32.f32 %v2112
    %v2115 = vcvt.s32.f32 %v2113
    %2116 = vmin.xlane.f32.xlu0 %v2115
    %v2117 = vpop.xlane.xlu0 %2116
    %vm2118 = vcmp.eq.f32.partialorder %v2115, %v2117
    %v2119 = vsel %vm2118, %v2114, inf
    %2120 = vmin.xlane.f32.xlu0 %v2119
    %v2121 = vpop.xlane.xlu0 %2120
    %v2122 = vcvt.f32.s32 %v2121
    %v2123 = vcvt.f32.s32 %v2117
    %v2124 = vshll.u32 %v2123, 16
    %v2125 = vadd.s32 %v2124, %v2122
    %v2126 = vsel %vm488, %v2066, 2147483647
    %v2127 = vand.u32 %v2126, 65535
    %v2128 = vshra.s32 %v2126, 16
    %v2129 = vcvt.s32.f32 %v2127
    %v2130 = vcvt.s32.f32 %v2128
    %2131 = vmin.xlane.f32.xlu0 %v2130
    %v2132 = vpop.xlane.xlu0 %2131
    %vm2133 = vcmp.eq.f32.partialorder %v2130, %v2132
    %v2134 = vsel %vm2133, %v2129, inf
    %2135 = vmin.xlane.f32.xlu0 %v2134
    %v2136 = vpop.xlane.xlu0 %2135
    %v2137 = vcvt.f32.s32 %v2136
    %v2138 = vcvt.f32.s32 %v2132
    %v2139 = vshll.u32 %v2138, 16
    %v2140 = vadd.s32 %v2139, %v2137
    %v2141 = vsel %vm488, %v2067, 2147483647
    %v2142 = vand.u32 %v2141, 65535
    %v2143 = vshra.s32 %v2141, 16
    %v2144 = vcvt.s32.f32 %v2142
    %v2145 = vcvt.s32.f32 %v2143
    %2146 = vmin.xlane.f32.xlu0 %v2145
    %v2147 = vpop.xlane.xlu0 %2146
    %vm2148 = vcmp.eq.f32.partialorder %v2145, %v2147
    %v2149 = vsel %vm2148, %v2144, inf
    %2150 = vmin.xlane.f32.xlu0 %v2149
    %v2151 = vpop.xlane.xlu0 %2150
    %v2152 = vcvt.f32.s32 %v2151
    %v2153 = vcvt.f32.s32 %v2147
    %v2154 = vshll.u32 %v2153, 16
    %v2155 = vadd.s32 %v2154, %v2152
    %v2156 = vsel %vm488, %v2068, 2147483647
    %v2157 = vand.u32 %v2156, 65535
    %v2158 = vshra.s32 %v2156, 16
    %v2159 = vcvt.s32.f32 %v2157
    %v2160 = vcvt.s32.f32 %v2158
    %2161 = vmin.xlane.f32.xlu0 %v2160
    %v2162 = vpop.xlane.xlu0 %2161
    %vm2163 = vcmp.eq.f32.partialorder %v2160, %v2162
    %v2164 = vsel %vm2163, %v2159, inf
    %2165 = vmin.xlane.f32.xlu0 %v2164
    %v2166 = vpop.xlane.xlu0 %2165
    %v2167 = vcvt.f32.s32 %v2166
    %v2168 = vcvt.f32.s32 %v2162
    %v2169 = vshll.u32 %v2168, 16
    %v2170 = vadd.s32 %v2169, %v2167
    %v2171 = vsel %vm488, %v2069, 2147483647
    %v2172 = vand.u32 %v2171, 65535
    %v2173 = vshra.s32 %v2171, 16
    %v2174 = vcvt.s32.f32 %v2172
    %v2175 = vcvt.s32.f32 %v2173
    %2176 = vmin.xlane.f32.xlu0 %v2175
    %v2177 = vpop.xlane.xlu0 %2176
    %vm2178 = vcmp.eq.f32.partialorder %v2175, %v2177
    %v2179 = vsel %vm2178, %v2174, inf
    %2180 = vmin.xlane.f32.xlu0 %v2179
    %v2181 = vpop.xlane.xlu0 %2180
    %v2182 = vcvt.f32.s32 %v2181
    %v2183 = vcvt.f32.s32 %v2177
    %v2184 = vshll.u32 %v2183, 16
    %v2185 = vadd.s32 %v2184, %v2182
    %v2186 = vsel %vm488, %v2070, 2147483647
    %v2187 = vand.u32 %v2186, 65535
    %v2188 = vshra.s32 %v2186, 16
    %v2189 = vcvt.s32.f32 %v2187
    %v2190 = vcvt.s32.f32 %v2188
    %2191 = vmin.xlane.f32.xlu0 %v2190
    %v2192 = vpop.xlane.xlu0 %2191
    %vm2193 = vcmp.eq.f32.partialorder %v2190, %v2192
    %v2194 = vsel %vm2193, %v2189, inf
    %2195 = vmin.xlane.f32.xlu0 %v2194
    %v2196 = vpop.xlane.xlu0 %2195
    %v2197 = vcvt.f32.s32 %v2196
    %v2198 = vcvt.f32.s32 %v2192
    %v2199 = vshll.u32 %v2198, 16
    %v2200 = vadd.s32 %v2199, %v2197
    %v2201 = vsel %vm488, %v2071, 2147483647
    %v2202 = vand.u32 %v2201, 65535
    %v2203 = vshra.s32 %v2201, 16
    %v2204 = vcvt.s32.f32 %v2202
    %v2205 = vcvt.s32.f32 %v2203
    %2206 = vmin.xlane.f32.xlu0 %v2205
    %v2207 = vpop.xlane.xlu0 %2206
    %vm2208 = vcmp.eq.f32.partialorder %v2205, %v2207
    %v2209 = vsel %vm2208, %v2204, inf
    %2210 = vmin.xlane.f32.xlu0 %v2209
    %v2211 = vpop.xlane.xlu0 %2210
    %v2212 = vcvt.f32.s32 %v2211
    %v2213 = vcvt.f32.s32 %v2207
    %v2214 = vshll.u32 %v2213, 16
    %v2215 = vadd.s32 %v2214, %v2212
    %v2216 = vsel %vm488, %v2072, 2147483647
    %v2217 = vand.u32 %v2216, 65535
    %v2218 = vshra.s32 %v2216, 16
    %v2219 = vcvt.s32.f32 %v2217
    %v2220 = vcvt.s32.f32 %v2218
    %2221 = vmin.xlane.f32.xlu0 %v2220
    %v2222 = vpop.xlane.xlu0 %2221
    %vm2223 = vcmp.eq.f32.partialorder %v2220, %v2222
    %v2224 = vsel %vm2223, %v2219, inf
    %2225 = vmin.xlane.f32.xlu0 %v2224
    %v2226 = vpop.xlane.xlu0 %2225
    %v2227 = vcvt.f32.s32 %v2226
    %v2228 = vcvt.f32.s32 %v2222
    %v2229 = vshll.u32 %v2228, 16
    %v2230 = vadd.s32 %v2229, %v2227
    %v2231 = vsel %vm488, %v2073, 2147483647
    %v2232 = vand.u32 %v2231, 65535
    %v2233 = vshra.s32 %v2231, 16
    %v2234 = vcvt.s32.f32 %v2232
    %v2235 = vcvt.s32.f32 %v2233
    %2236 = vmin.xlane.f32.xlu0 %v2235
    %v2237 = vpop.xlane.xlu0 %2236
    %vm2238 = vcmp.eq.f32.partialorder %v2235, %v2237
    %v2239 = vsel %vm2238, %v2234, inf
    %2240 = vmin.xlane.f32.xlu0 %v2239
    %v2241 = vpop.xlane.xlu0 %2240
    %v2242 = vcvt.f32.s32 %v2241
    %v2243 = vcvt.f32.s32 %v2237
    %v2244 = vshll.u32 %v2243, 16
    %v2245 = vadd.s32 %v2244, %v2242
    %v2246 = vsel %vm488, %v2074, 2147483647
    %v2247 = vand.u32 %v2246, 65535
    %v2248 = vshra.s32 %v2246, 16
    %v2249 = vcvt.s32.f32 %v2247
    %v2250 = vcvt.s32.f32 %v2248
    %2251 = vmin.xlane.f32.xlu0 %v2250
    %v2252 = vpop.xlane.xlu0 %2251
    %vm2253 = vcmp.eq.f32.partialorder %v2250, %v2252
    %v2254 = vsel %vm2253, %v2249, inf
    %2255 = vmin.xlane.f32.xlu0 %v2254
    %v2256 = vpop.xlane.xlu0 %2255
    %v2257 = vcvt.f32.s32 %v2256
    %v2258 = vcvt.f32.s32 %v2252
    %v2259 = vshll.u32 %v2258, 16
    %v2260 = vadd.s32 %v2259, %v2257
    %v2261 = vsel %vm488, %v2075, 2147483647
    %v2262 = vand.u32 %v2261, 65535
    %v2263 = vshra.s32 %v2261, 16
    %v2264 = vcvt.s32.f32 %v2262
    %v2265 = vcvt.s32.f32 %v2263
    %2266 = vmin.xlane.f32.xlu0 %v2265
    %v2267 = vpop.xlane.xlu0 %2266
    %vm2268 = vcmp.eq.f32.partialorder %v2265, %v2267
    %v2269 = vsel %vm2268, %v2264, inf
    %2270 = vmin.xlane.f32.xlu0 %v2269
    %v2271 = vpop.xlane.xlu0 %2270
    %v2272 = vcvt.f32.s32 %v2271
    %v2273 = vcvt.f32.s32 %v2267
    %v2274 = vshll.u32 %v2273, 16
    %v2275 = vadd.s32 %v2274, %v2272
    %v2276 = vsel %vm488, %v2076, 2147483647
    %v2277 = vand.u32 %v2276, 65535
    %v2278 = vshra.s32 %v2276, 16
    %v2279 = vcvt.s32.f32 %v2277
    %v2280 = vcvt.s32.f32 %v2278
    %2281 = vmin.xlane.f32.xlu0 %v2280
    %v2282 = vpop.xlane.xlu0 %2281
    %vm2283 = vcmp.eq.f32.partialorder %v2280, %v2282
    %v2284 = vsel %vm2283, %v2279, inf
    %2285 = vmin.xlane.f32.xlu0 %v2284
    %v2286 = vpop.xlane.xlu0 %2285
    %v2287 = vcvt.f32.s32 %v2286
    %v2288 = vcvt.f32.s32 %v2282
    %v2289 = vshll.u32 %v2288, 16
    %v2290 = vadd.s32 %v2289, %v2287
    %v2291 = vsel %vm488, %v2077, 2147483647
    %v2292 = vand.u32 %v2291, 65535
    %v2293 = vshra.s32 %v2291, 16
    %v2294 = vcvt.s32.f32 %v2292
    %v2295 = vcvt.s32.f32 %v2293
    %2296 = vmin.xlane.f32.xlu0 %v2295
    %v2297 = vpop.xlane.xlu0 %2296
    %vm2298 = vcmp.eq.f32.partialorder %v2295, %v2297
    %v2299 = vsel %vm2298, %v2294, inf
    %2300 = vmin.xlane.f32.xlu0 %v2299
    %v2301 = vpop.xlane.xlu0 %2300
    %v2302 = vcvt.f32.s32 %v2301
    %v2303 = vcvt.f32.s32 %v2297
    %v2304 = vshll.u32 %v2303, 16
    %v2305 = vadd.s32 %v2304, %v2302
    %v2306 = vsel %vm488, %v2078, 2147483647
    %v2307 = vand.u32 %v2306, 65535
    %v2308 = vshra.s32 %v2306, 16
    %v2309 = vcvt.s32.f32 %v2307
    %v2310 = vcvt.s32.f32 %v2308
    %2311 = vmin.xlane.f32.xlu0 %v2310
    %v2312 = vpop.xlane.xlu0 %2311
    %vm2313 = vcmp.eq.f32.partialorder %v2310, %v2312
    %v2314 = vsel %vm2313, %v2309, inf
    %2315 = vmin.xlane.f32.xlu0 %v2314
    %v2316 = vpop.xlane.xlu0 %2315
    %v2317 = vcvt.f32.s32 %v2316
    %v2318 = vcvt.f32.s32 %v2312
    %v2319 = vshll.u32 %v2318, 16
    %v2320 = vadd.s32 %v2319, %v2317
    %v2321 = vsel %vm488, %v2079, 2147483647
    %v2322 = vand.u32 %v2321, 65535
    %v2323 = vshra.s32 %v2321, 16
    %v2324 = vcvt.s32.f32 %v2322
    %v2325 = vcvt.s32.f32 %v2323
    %2326 = vmin.xlane.f32.xlu0 %v2325
    %v2327 = vpop.xlane.xlu0 %2326
    %vm2328 = vcmp.eq.f32.partialorder %v2325, %v2327
    %v2329 = vsel %vm2328, %v2324, inf
    %2330 = vmin.xlane.f32.xlu0 %v2329
    %v2331 = vpop.xlane.xlu0 %2330
    %v2332 = vcvt.f32.s32 %v2331
    %v2333 = vcvt.f32.s32 %v2327
    %v2334 = vshll.u32 %v2333, 16
    %v2335 = vadd.s32 %v2334, %v2332
    %v2336 = vsel %vm488, %v2080, 2147483647
    %v2337 = vand.u32 %v2336, 65535
    %v2338 = vshra.s32 %v2336, 16
    %v2339 = vcvt.s32.f32 %v2337
    %v2340 = vcvt.s32.f32 %v2338
    %2341 = vmin.xlane.f32.xlu0 %v2340
    %v2342 = vpop.xlane.xlu0 %2341
    %vm2343 = vcmp.eq.f32.partialorder %v2340, %v2342
    %v2344 = vsel %vm2343, %v2339, inf
    %2345 = vmin.xlane.f32.xlu0 %v2344
    %v2346 = vpop.xlane.xlu0 %2345
    %v2347 = vcvt.f32.s32 %v2346
    %v2348 = vcvt.f32.s32 %v2342
    %v2349 = vshll.u32 %v2348, 16
    %v2350 = vadd.s32 %v2349, %v2347
    %v2351 = vsel %vm488, %v2081, 2147483647
    %v2352 = vand.u32 %v2351, 65535
    %v2353 = vshra.s32 %v2351, 16
    %v2354 = vcvt.s32.f32 %v2352
    %v2355 = vcvt.s32.f32 %v2353
    %2356 = vmin.xlane.f32.xlu0 %v2355
    %v2357 = vpop.xlane.xlu0 %2356
    %vm2358 = vcmp.eq.f32.partialorder %v2355, %v2357
    %v2359 = vsel %vm2358, %v2354, inf
    %2360 = vmin.xlane.f32.xlu0 %v2359
    %v2361 = vpop.xlane.xlu0 %2360
    %v2362 = vcvt.f32.s32 %v2361
    %v2363 = vcvt.f32.s32 %v2357
    %v2364 = vshll.u32 %v2363, 16
    %v2365 = vadd.s32 %v2364, %v2362
    %v2366 = vsel %vm488, %v2082, 2147483647
    %v2367 = vand.u32 %v2366, 65535
    %v2368 = vshra.s32 %v2366, 16
    %v2369 = vcvt.s32.f32 %v2367
    %v2370 = vcvt.s32.f32 %v2368
    %2371 = vmin.xlane.f32.xlu0 %v2370
    %v2372 = vpop.xlane.xlu0 %2371
    %vm2373 = vcmp.eq.f32.partialorder %v2370, %v2372
    %v2374 = vsel %vm2373, %v2369, inf
    %2375 = vmin.xlane.f32.xlu0 %v2374
    %v2376 = vpop.xlane.xlu0 %2375
    %v2377 = vcvt.f32.s32 %v2376
    %v2378 = vcvt.f32.s32 %v2372
    %v2379 = vshll.u32 %v2378, 16
    %v2380 = vadd.s32 %v2379, %v2377
    %v2381 = vsel %vm488, %v2083, 2147483647
    %v2382 = vand.u32 %v2381, 65535
    %v2383 = vshra.s32 %v2381, 16
    %v2384 = vcvt.s32.f32 %v2382
    %v2385 = vcvt.s32.f32 %v2383
    %2386 = vmin.xlane.f32.xlu0 %v2385
    %v2387 = vpop.xlane.xlu0 %2386
    %vm2388 = vcmp.eq.f32.partialorder %v2385, %v2387
    %v2389 = vsel %vm2388, %v2384, inf
    %2390 = vmin.xlane.f32.xlu0 %v2389
    %v2391 = vpop.xlane.xlu0 %2390
    %v2392 = vcvt.f32.s32 %v2391
    %v2393 = vcvt.f32.s32 %v2387
    %v2394 = vshll.u32 %v2393, 16
    %v2395 = vadd.s32 %v2394, %v2392
    %v2396 = vsel %vm488, %v2084, 2147483647
    %v2397 = vand.u32 %v2396, 65535
    %v2398 = vshra.s32 %v2396, 16
    %v2399 = vcvt.s32.f32 %v2397
    %v2400 = vcvt.s32.f32 %v2398
    %2401 = vmin.xlane.f32.xlu0 %v2400
    %v2402 = vpop.xlane.xlu0 %2401
    %vm2403 = vcmp.eq.f32.partialorder %v2400, %v2402
    %v2404 = vsel %vm2403, %v2399, inf
    %2405 = vmin.xlane.f32.xlu0 %v2404
    %v2406 = vpop.xlane.xlu0 %2405
    %v2407 = vcvt.f32.s32 %v2406
    %v2408 = vcvt.f32.s32 %v2402
    %v2409 = vshll.u32 %v2408, 16
    %v2410 = vadd.s32 %v2409, %v2407
    %v2411 = vsel %vm488, %v2085, 2147483647
    %v2412 = vand.u32 %v2411, 65535
    %v2413 = vshra.s32 %v2411, 16
    %v2414 = vcvt.s32.f32 %v2412
    %v2415 = vcvt.s32.f32 %v2413
    %2416 = vmin.xlane.f32.xlu0 %v2415
    %v2417 = vpop.xlane.xlu0 %2416
    %vm2418 = vcmp.eq.f32.partialorder %v2415, %v2417
    %v2419 = vsel %vm2418, %v2414, inf
    %2420 = vmin.xlane.f32.xlu0 %v2419
    %v2421 = vpop.xlane.xlu0 %2420
    %v2422 = vcvt.f32.s32 %v2421
    %v2423 = vcvt.f32.s32 %v2417
    %v2424 = vshll.u32 %v2423, 16
    %v2425 = vadd.s32 %v2424, %v2422
    %v2426 = vsel %vm488, %v2086, 2147483647
    %v2427 = vand.u32 %v2426, 65535
    %v2428 = vshra.s32 %v2426, 16
    %v2429 = vcvt.s32.f32 %v2427
    %v2430 = vcvt.s32.f32 %v2428
    %2431 = vmin.xlane.f32.xlu0 %v2430
    %v2432 = vpop.xlane.xlu0 %2431
    %vm2433 = vcmp.eq.f32.partialorder %v2430, %v2432
    %v2434 = vsel %vm2433, %v2429, inf
    %2435 = vmin.xlane.f32.xlu0 %v2434
    %v2436 = vpop.xlane.xlu0 %2435
    %v2437 = vcvt.f32.s32 %v2436
    %v2438 = vcvt.f32.s32 %v2432
    %v2439 = vshll.u32 %v2438, 16
    %v2440 = vadd.s32 %v2439, %v2437
    %v2441 = vsel %vm488, %v2087, 2147483647
    %v2442 = vand.u32 %v2441, 65535
    %v2443 = vshra.s32 %v2441, 16
    %v2444 = vcvt.s32.f32 %v2442
    %v2445 = vcvt.s32.f32 %v2443
    %2446 = vmin.xlane.f32.xlu0 %v2445
    %v2447 = vpop.xlane.xlu0 %2446
    %vm2448 = vcmp.eq.f32.partialorder %v2445, %v2447
    %v2449 = vsel %vm2448, %v2444, inf
    %2450 = vmin.xlane.f32.xlu0 %v2449
    %v2451 = vpop.xlane.xlu0 %2450
    %v2452 = vcvt.f32.s32 %v2451
    %v2453 = vcvt.f32.s32 %v2447
    %v2454 = vshll.u32 %v2453, 16
    %v2455 = vadd.s32 %v2454, %v2452
    %v2456 = vsel %vm488, %v2088, 2147483647
    %v2457 = vand.u32 %v2456, 65535
    %v2458 = vshra.s32 %v2456, 16
    %v2459 = vcvt.s32.f32 %v2457
    %v2460 = vcvt.s32.f32 %v2458
    %2461 = vmin.xlane.f32.xlu0 %v2460
    %v2462 = vpop.xlane.xlu0 %2461
    %vm2463 = vcmp.eq.f32.partialorder %v2460, %v2462
    %v2464 = vsel %vm2463, %v2459, inf
    %2465 = vmin.xlane.f32.xlu0 %v2464
    %v2466 = vpop.xlane.xlu0 %2465
    %v2467 = vcvt.f32.s32 %v2466
    %v2468 = vcvt.f32.s32 %v2462
    %v2469 = vshll.u32 %v2468, 16
    %v2470 = vadd.s32 %v2469, %v2467
    %v2471 = vsel %vm488, %v2089, 2147483647
    %v2472 = vand.u32 %v2471, 65535
    %v2473 = vshra.s32 %v2471, 16
    %v2474 = vcvt.s32.f32 %v2472
    %v2475 = vcvt.s32.f32 %v2473
    %2476 = vmin.xlane.f32.xlu0 %v2475
    %v2477 = vpop.xlane.xlu0 %2476
    %vm2478 = vcmp.eq.f32.partialorder %v2475, %v2477
    %v2479 = vsel %vm2478, %v2474, inf
    %2480 = vmin.xlane.f32.xlu0 %v2479
    %v2481 = vpop.xlane.xlu0 %2480
    %v2482 = vcvt.f32.s32 %v2481
    %v2483 = vcvt.f32.s32 %v2477
    %v2484 = vshll.u32 %v2483, 16
    %v2485 = vadd.s32 %v2484, %v2482
    %v2486 = vsel %vm488, %v2090, 2147483647
    %v2487 = vand.u32 %v2486, 65535
    %v2488 = vshra.s32 %v2486, 16
    %v2489 = vcvt.s32.f32 %v2487
    %v2490 = vcvt.s32.f32 %v2488
    %2491 = vmin.xlane.f32.xlu0 %v2490
    %v2492 = vpop.xlane.xlu0 %2491
    %vm2493 = vcmp.eq.f32.partialorder %v2490, %v2492
    %v2494 = vsel %vm2493, %v2489, inf
    %2495 = vmin.xlane.f32.xlu0 %v2494
    %v2496 = vpop.xlane.xlu0 %2495
    %v2497 = vcvt.f32.s32 %v2496
    %v2498 = vcvt.f32.s32 %v2492
    %v2499 = vshll.u32 %v2498, 16
    %v2500 = vadd.s32 %v2499, %v2497
    %v2501 = vsel %vm488, %v2091, 2147483647
    %v2502 = vand.u32 %v2501, 65535
    %v2503 = vshra.s32 %v2501, 16
    %v2504 = vcvt.s32.f32 %v2502
    %v2505 = vcvt.s32.f32 %v2503
    %2506 = vmin.xlane.f32.xlu0 %v2505
    %v2507 = vpop.xlane.xlu0 %2506
    %vm2508 = vcmp.eq.f32.partialorder %v2505, %v2507
    %v2509 = vsel %vm2508, %v2504, inf
    %2510 = vmin.xlane.f32.xlu0 %v2509
    %v2511 = vpop.xlane.xlu0 %2510
    %v2512 = vcvt.f32.s32 %v2511
    %v2513 = vcvt.f32.s32 %v2507
    %v2514 = vshll.u32 %v2513, 16
    %v2515 = vadd.s32 %v2514, %v2512
    %v2516 = vsel %vm488, %v2092, 2147483647
    %v2517 = vand.u32 %v2516, 65535
    %v2518 = vshra.s32 %v2516, 16
    %v2519 = vcvt.s32.f32 %v2517
    %v2520 = vcvt.s32.f32 %v2518
    %2521 = vmin.xlane.f32.xlu0 %v2520
    %v2522 = vpop.xlane.xlu0 %2521
    %vm2523 = vcmp.eq.f32.partialorder %v2520, %v2522
    %v2524 = vsel %vm2523, %v2519, inf
    %2525 = vmin.xlane.f32.xlu0 %v2524
    %v2526 = vpop.xlane.xlu0 %2525
    %v2527 = vcvt.f32.s32 %v2526
    %v2528 = vcvt.f32.s32 %v2522
    %v2529 = vshll.u32 %v2528, 16
    %v2530 = vadd.s32 %v2529, %v2527
    %v2531 = vsel %vm488, %v2093, 2147483647
    %v2532 = vand.u32 %v2531, 65535
    %v2533 = vshra.s32 %v2531, 16
    %v2534 = vcvt.s32.f32 %v2532
    %v2535 = vcvt.s32.f32 %v2533
    %2536 = vmin.xlane.f32.xlu0 %v2535
    %v2537 = vpop.xlane.xlu0 %2536
    %vm2538 = vcmp.eq.f32.partialorder %v2535, %v2537
    %v2539 = vsel %vm2538, %v2534, inf
    %2540 = vmin.xlane.f32.xlu0 %v2539
    %v2541 = vpop.xlane.xlu0 %2540
    %v2542 = vcvt.f32.s32 %v2541
    %v2543 = vcvt.f32.s32 %v2537
    %v2544 = vshll.u32 %v2543, 16
    %v2545 = vadd.s32 %v2544, %v2542
    %v2546 = vsel %vm488, %v2094, 2147483647
    %v2547 = vand.u32 %v2546, 65535
    %v2548 = vshra.s32 %v2546, 16
    %v2549 = vcvt.s32.f32 %v2547
    %v2550 = vcvt.s32.f32 %v2548
    %2551 = vmin.xlane.f32.xlu0 %v2550
    %v2552 = vpop.xlane.xlu0 %2551
    %vm2553 = vcmp.eq.f32.partialorder %v2550, %v2552
    %v2554 = vsel %vm2553, %v2549, inf
    %2555 = vmin.xlane.f32.xlu0 %v2554
    %v2556 = vpop.xlane.xlu0 %2555
    %v2557 = vcvt.f32.s32 %v2556
    %v2558 = vcvt.f32.s32 %v2552
    %v2559 = vshll.u32 %v2558, 16
    %v2560 = vadd.s32 %v2559, %v2557
    %v2561 = vsel %vm488, %v2095, 2147483647
    %v2562 = vand.u32 %v2561, 65535
    %v2563 = vshra.s32 %v2561, 16
    %v2564 = vcvt.s32.f32 %v2562
    %v2565 = vcvt.s32.f32 %v2563
    %2566 = vmin.xlane.f32.xlu0 %v2565
    %v2567 = vpop.xlane.xlu0 %2566
    %vm2568 = vcmp.eq.f32.partialorder %v2565, %v2567
    %v2569 = vsel %vm2568, %v2564, inf
    %2570 = vmin.xlane.f32.xlu0 %v2569
    %v2571 = vpop.xlane.xlu0 %2570
    %v2572 = vcvt.f32.s32 %v2571
    %v2573 = vcvt.f32.s32 %v2567
    %v2574 = vshll.u32 %v2573, 16
    %v2575 = vadd.s32 %v2574, %v2572
    %vm2576 = vcmp.le.f32.partialorder %v1705, %v1905
    %vm2577 = vcmp.le.f32.partialorder %v1706, %v1908
    %vm2578 = vcmp.le.f32.partialorder %v1707, %v1911
    %vm2579 = vcmp.le.f32.partialorder %v1708, %v1914
    %vm2580 = vcmp.le.f32.partialorder %v1709, %v1917
    %vm2581 = vcmp.le.f32.partialorder %v1710, %v1920
    %vm2582 = vcmp.le.f32.partialorder %v1711, %v1923
    %vm2583 = vcmp.le.f32.partialorder %v1712, %v1926
    %vm2584 = vcmp.le.f32.partialorder %v1713, %v1929
    %vm2585 = vcmp.le.f32.partialorder %v1714, %v1932
    %vm2586 = vcmp.le.f32.partialorder %v1715, %v1935
    %vm2587 = vcmp.le.f32.partialorder %v1716, %v1938
    %vm2588 = vcmp.le.f32.partialorder %v1717, %v1941
    %vm2589 = vcmp.le.f32.partialorder %v1718, %v1944
    %vm2590 = vcmp.le.f32.partialorder %v1719, %v1947
    %vm2591 = vcmp.le.f32.partialorder %v1720, %v1950
    %vm2592 = vcmp.le.f32.partialorder %v1721, %v1953
    %vm2593 = vcmp.le.f32.partialorder %v1722, %v1956
    %vm2594 = vcmp.le.f32.partialorder %v1723, %v1959
    %vm2595 = vcmp.le.f32.partialorder %v1724, %v1962
    %vm2596 = vcmp.le.f32.partialorder %v1725, %v1965
    %vm2597 = vcmp.le.f32.partialorder %v1726, %v1968
    %vm2598 = vcmp.le.f32.partialorder %v1727, %v1971
    %vm2599 = vcmp.le.f32.partialorder %v1728, %v1974
    %vm2600 = vcmp.le.f32.partialorder %v1729, %v1977
    %vm2601 = vcmp.le.f32.partialorder %v1730, %v1980
    %vm2602 = vcmp.le.f32.partialorder %v1731, %v1983
    %vm2603 = vcmp.le.f32.partialorder %v1732, %v1986
    %vm2604 = vcmp.le.f32.partialorder %v1733, %v1989
    %vm2605 = vcmp.le.f32.partialorder %v1734, %v1992
    %vm2606 = vcmp.le.f32.partialorder %v1735, %v1995
    %vm2607 = vcmp.le.f32.partialorder %v1736, %v1998
    %vm2608 = vmand %vm1739, %vm2576
    %vm2609 = vmand %vm1739, %vm2577
    %vm2610 = vmand %vm1739, %vm2578
    %vm2611 = vmand %vm1739, %vm2579
    %vm2612 = vmand %vm1739, %vm2580
    %vm2613 = vmand %vm1739, %vm2581
    %vm2614 = vmand %vm1739, %vm2582
    %vm2615 = vmand %vm1739, %vm2583
    %vm2616 = vmand %vm1739, %vm2584
    %vm2617 = vmand %vm1739, %vm2585
    %vm2618 = vmand %vm1739, %vm2586
    %vm2619 = vmand %vm1739, %vm2587
    %vm2620 = vmand %vm1739, %vm2588
    %vm2621 = vmand %vm1739, %vm2589
    %vm2622 = vmand %vm1739, %vm2590
    %vm2623 = vmand %vm1739, %vm2591
    %vm2624 = vmand %vm1739, %vm2592
    %vm2625 = vmand %vm1739, %vm2593
    %vm2626 = vmand %vm1739, %vm2594
    %vm2627 = vmand %vm1739, %vm2595
    %vm2628 = vmand %vm1739, %vm2596
    %vm2629 = vmand %vm1739, %vm2597
    %vm2630 = vmand %vm1739, %vm2598
    %vm2631 = vmand %vm1739, %vm2599
    %vm2632 = vmand %vm1739, %vm2600
    %vm2633 = vmand %vm1739, %vm2601
    %vm2634 = vmand %vm1739, %vm2602
    %vm2635 = vmand %vm1739, %vm2603
    %vm2636 = vmand %vm1739, %vm2604
    %vm2637 = vmand %vm1739, %vm2605
    %vm2638 = vmand %vm1739, %vm2606
    %vm2639 = vmand %vm1739, %vm2607
    %v2640 = vsel %vm2608, %v1742, 16
    %v2641 = vsel %vm2609, %v1742, 16
    %v2642 = vsel %vm2610, %v1742, 16
    %v2643 = vsel %vm2611, %v1742, 16
    %v2644 = vsel %vm2612, %v1742, 16
    %v2645 = vsel %vm2613, %v1742, 16
    %v2646 = vsel %vm2614, %v1742, 16
    %v2647 = vsel %vm2615, %v1742, 16
    %v2648 = vsel %vm2616, %v1742, 16
    %v2649 = vsel %vm2617, %v1742, 16
    %v2650 = vsel %vm2618, %v1742, 16
    %v2651 = vsel %vm2619, %v1742, 16
    %v2652 = vsel %vm2620, %v1742, 16
    %v2653 = vsel %vm2621, %v1742, 16
    %v2654 = vsel %vm2622, %v1742, 16
    %v2655 = vsel %vm2623, %v1742, 16
    %v2656 = vsel %vm2624, %v1742, 16
    %v2657 = vsel %vm2625, %v1742, 16
    %v2658 = vsel %vm2626, %v1742, 16
    %v2659 = vsel %vm2627, %v1742, 16
    %v2660 = vsel %vm2628, %v1742, 16
    %v2661 = vsel %vm2629, %v1742, 16
    %v2662 = vsel %vm2630, %v1742, 16
    %v2663 = vsel %vm2631, %v1742, 16
    %v2664 = vsel %vm2632, %v1742, 16
    %v2665 = vsel %vm2633, %v1742, 16
    %v2666 = vsel %vm2634, %v1742, 16
    %v2667 = vsel %vm2635, %v1742, 16
    %v2668 = vsel %vm2636, %v1742, 16
    %v2669 = vsel %vm2637, %v1742, 16
    %v2670 = vsel %vm2638, %v1742, 16
    %v2671 = vsel %vm2639, %v1742, 16
    %v2672 = vsel %vm488, %v2640, 2147483647
    %v2673 = vand.u32 %v2672, 65535
    %v2674 = vshra.s32 %v2672, 16
    %v2675 = vcvt.s32.f32 %v2673
    %v2676 = vcvt.s32.f32 %v2674
    %2677 = vmin.xlane.f32.xlu0 %v2676
    %v2678 = vpop.xlane.xlu0 %2677
    %vm2679 = vcmp.eq.f32.partialorder %v2676, %v2678
    %v2680 = vsel %vm2679, %v2675, inf
    %2681 = vmin.xlane.f32.xlu0 %v2680
    %v2682 = vpop.xlane.xlu0 %2681
    %v2683 = vcvt.f32.s32 %v2682
    %v2684 = vcvt.f32.s32 %v2678
    %v2685 = vshll.u32 %v2684, 16
    %v2686 = vadd.s32 %v2685, %v2683
    %v2687 = vsel %vm488, %v2641, 2147483647
    %v2688 = vand.u32 %v2687, 65535
    %v2689 = vshra.s32 %v2687, 16
    %v2690 = vcvt.s32.f32 %v2688
    %v2691 = vcvt.s32.f32 %v2689
    %2692 = vmin.xlane.f32.xlu0 %v2691
    %v2693 = vpop.xlane.xlu0 %2692
    %vm2694 = vcmp.eq.f32.partialorder %v2691, %v2693
    %v2695 = vsel %vm2694, %v2690, inf
    %2696 = vmin.xlane.f32.xlu0 %v2695
    %v2697 = vpop.xlane.xlu0 %2696
    %v2698 = vcvt.f32.s32 %v2697
    %v2699 = vcvt.f32.s32 %v2693
    %v2700 = vshll.u32 %v2699, 16
    %v2701 = vadd.s32 %v2700, %v2698
    %v2702 = vsel %vm488, %v2642, 2147483647
    %v2703 = vand.u32 %v2702, 65535
    %v2704 = vshra.s32 %v2702, 16
    %v2705 = vcvt.s32.f32 %v2703
    %v2706 = vcvt.s32.f32 %v2704
    %2707 = vmin.xlane.f32.xlu0 %v2706
    %v2708 = vpop.xlane.xlu0 %2707
    %vm2709 = vcmp.eq.f32.partialorder %v2706, %v2708
    %v2710 = vsel %vm2709, %v2705, inf
    %2711 = vmin.xlane.f32.xlu0 %v2710
    %v2712 = vpop.xlane.xlu0 %2711
    %v2713 = vcvt.f32.s32 %v2712
    %v2714 = vcvt.f32.s32 %v2708
    %v2715 = vshll.u32 %v2714, 16
    %v2716 = vadd.s32 %v2715, %v2713
    %v2717 = vsel %vm488, %v2643, 2147483647
    %v2718 = vand.u32 %v2717, 65535
    %v2719 = vshra.s32 %v2717, 16
    %v2720 = vcvt.s32.f32 %v2718
    %v2721 = vcvt.s32.f32 %v2719
    %2722 = vmin.xlane.f32.xlu0 %v2721
    %v2723 = vpop.xlane.xlu0 %2722
    %vm2724 = vcmp.eq.f32.partialorder %v2721, %v2723
    %v2725 = vsel %vm2724, %v2720, inf
    %2726 = vmin.xlane.f32.xlu0 %v2725
    %v2727 = vpop.xlane.xlu0 %2726
    %v2728 = vcvt.f32.s32 %v2727
    %v2729 = vcvt.f32.s32 %v2723
    %v2730 = vshll.u32 %v2729, 16
    %v2731 = vadd.s32 %v2730, %v2728
    %v2732 = vsel %vm488, %v2644, 2147483647
    %v2733 = vand.u32 %v2732, 65535
    %v2734 = vshra.s32 %v2732, 16
    %v2735 = vcvt.s32.f32 %v2733
    %v2736 = vcvt.s32.f32 %v2734
    %2737 = vmin.xlane.f32.xlu0 %v2736
    %v2738 = vpop.xlane.xlu0 %2737
    %vm2739 = vcmp.eq.f32.partialorder %v2736, %v2738
    %v2740 = vsel %vm2739, %v2735, inf
    %2741 = vmin.xlane.f32.xlu0 %v2740
    %v2742 = vpop.xlane.xlu0 %2741
    %v2743 = vcvt.f32.s32 %v2742
    %v2744 = vcvt.f32.s32 %v2738
    %v2745 = vshll.u32 %v2744, 16
    %v2746 = vadd.s32 %v2745, %v2743
    %v2747 = vsel %vm488, %v2645, 2147483647
    %v2748 = vand.u32 %v2747, 65535
    %v2749 = vshra.s32 %v2747, 16
    %v2750 = vcvt.s32.f32 %v2748
    %v2751 = vcvt.s32.f32 %v2749
    %2752 = vmin.xlane.f32.xlu0 %v2751
    %v2753 = vpop.xlane.xlu0 %2752
    %vm2754 = vcmp.eq.f32.partialorder %v2751, %v2753
    %v2755 = vsel %vm2754, %v2750, inf
    %2756 = vmin.xlane.f32.xlu0 %v2755
    %v2757 = vpop.xlane.xlu0 %2756
    %v2758 = vcvt.f32.s32 %v2757
    %v2759 = vcvt.f32.s32 %v2753
    %v2760 = vshll.u32 %v2759, 16
    %v2761 = vadd.s32 %v2760, %v2758
    %v2762 = vsel %vm488, %v2646, 2147483647
    %v2763 = vand.u32 %v2762, 65535
    %v2764 = vshra.s32 %v2762, 16
    %v2765 = vcvt.s32.f32 %v2763
    %v2766 = vcvt.s32.f32 %v2764
    %2767 = vmin.xlane.f32.xlu0 %v2766
    %v2768 = vpop.xlane.xlu0 %2767
    %vm2769 = vcmp.eq.f32.partialorder %v2766, %v2768
    %v2770 = vsel %vm2769, %v2765, inf
    %2771 = vmin.xlane.f32.xlu0 %v2770
    %v2772 = vpop.xlane.xlu0 %2771
    %v2773 = vcvt.f32.s32 %v2772
    %v2774 = vcvt.f32.s32 %v2768
    %v2775 = vshll.u32 %v2774, 16
    %v2776 = vadd.s32 %v2775, %v2773
    %v2777 = vsel %vm488, %v2647, 2147483647
    %v2778 = vand.u32 %v2777, 65535
    %v2779 = vshra.s32 %v2777, 16
    %v2780 = vcvt.s32.f32 %v2778
    %v2781 = vcvt.s32.f32 %v2779
    %2782 = vmin.xlane.f32.xlu0 %v2781
    %v2783 = vpop.xlane.xlu0 %2782
    %vm2784 = vcmp.eq.f32.partialorder %v2781, %v2783
    %v2785 = vsel %vm2784, %v2780, inf
    %2786 = vmin.xlane.f32.xlu0 %v2785
    %v2787 = vpop.xlane.xlu0 %2786
    %v2788 = vcvt.f32.s32 %v2787
    %v2789 = vcvt.f32.s32 %v2783
    %v2790 = vshll.u32 %v2789, 16
    %v2791 = vadd.s32 %v2790, %v2788
    %v2792 = vsel %vm488, %v2648, 2147483647
    %v2793 = vand.u32 %v2792, 65535
    %v2794 = vshra.s32 %v2792, 16
    %v2795 = vcvt.s32.f32 %v2793
    %v2796 = vcvt.s32.f32 %v2794
    %2797 = vmin.xlane.f32.xlu0 %v2796
    %v2798 = vpop.xlane.xlu0 %2797
    %vm2799 = vcmp.eq.f32.partialorder %v2796, %v2798
    %v2800 = vsel %vm2799, %v2795, inf
    %2801 = vmin.xlane.f32.xlu0 %v2800
    %v2802 = vpop.xlane.xlu0 %2801
    %v2803 = vcvt.f32.s32 %v2802
    %v2804 = vcvt.f32.s32 %v2798
    %v2805 = vshll.u32 %v2804, 16
    %v2806 = vadd.s32 %v2805, %v2803
    %v2807 = vsel %vm488, %v2649, 2147483647
    %v2808 = vand.u32 %v2807, 65535
    %v2809 = vshra.s32 %v2807, 16
    %v2810 = vcvt.s32.f32 %v2808
    %v2811 = vcvt.s32.f32 %v2809
    %2812 = vmin.xlane.f32.xlu0 %v2811
    %v2813 = vpop.xlane.xlu0 %2812
    %vm2814 = vcmp.eq.f32.partialorder %v2811, %v2813
    %v2815 = vsel %vm2814, %v2810, inf
    %2816 = vmin.xlane.f32.xlu0 %v2815
    %v2817 = vpop.xlane.xlu0 %2816
    %v2818 = vcvt.f32.s32 %v2817
    %v2819 = vcvt.f32.s32 %v2813
    %v2820 = vshll.u32 %v2819, 16
    %v2821 = vadd.s32 %v2820, %v2818
    %v2822 = vsel %vm488, %v2650, 2147483647
    %v2823 = vand.u32 %v2822, 65535
    %v2824 = vshra.s32 %v2822, 16
    %v2825 = vcvt.s32.f32 %v2823
    %v2826 = vcvt.s32.f32 %v2824
    %2827 = vmin.xlane.f32.xlu0 %v2826
    %v2828 = vpop.xlane.xlu0 %2827
    %vm2829 = vcmp.eq.f32.partialorder %v2826, %v2828
    %v2830 = vsel %vm2829, %v2825, inf
    %2831 = vmin.xlane.f32.xlu0 %v2830
    %v2832 = vpop.xlane.xlu0 %2831
    %v2833 = vcvt.f32.s32 %v2832
    %v2834 = vcvt.f32.s32 %v2828
    %v2835 = vshll.u32 %v2834, 16
    %v2836 = vadd.s32 %v2835, %v2833
    %v2837 = vsel %vm488, %v2651, 2147483647
    %v2838 = vand.u32 %v2837, 65535
    %v2839 = vshra.s32 %v2837, 16
    %v2840 = vcvt.s32.f32 %v2838
    %v2841 = vcvt.s32.f32 %v2839
    %2842 = vmin.xlane.f32.xlu0 %v2841
    %v2843 = vpop.xlane.xlu0 %2842
    %vm2844 = vcmp.eq.f32.partialorder %v2841, %v2843
    %v2845 = vsel %vm2844, %v2840, inf
    %2846 = vmin.xlane.f32.xlu0 %v2845
    %v2847 = vpop.xlane.xlu0 %2846
    %v2848 = vcvt.f32.s32 %v2847
    %v2849 = vcvt.f32.s32 %v2843
    %v2850 = vshll.u32 %v2849, 16
    %v2851 = vadd.s32 %v2850, %v2848
    %v2852 = vsel %vm488, %v2652, 2147483647
    %v2853 = vand.u32 %v2852, 65535
    %v2854 = vshra.s32 %v2852, 16
    %v2855 = vcvt.s32.f32 %v2853
    %v2856 = vcvt.s32.f32 %v2854
    %2857 = vmin.xlane.f32.xlu0 %v2856
    %v2858 = vpop.xlane.xlu0 %2857
    %vm2859 = vcmp.eq.f32.partialorder %v2856, %v2858
    %v2860 = vsel %vm2859, %v2855, inf
    %2861 = vmin.xlane.f32.xlu0 %v2860
    %v2862 = vpop.xlane.xlu0 %2861
    %v2863 = vcvt.f32.s32 %v2862
    %v2864 = vcvt.f32.s32 %v2858
    %v2865 = vshll.u32 %v2864, 16
    %v2866 = vadd.s32 %v2865, %v2863
    %v2867 = vsel %vm488, %v2653, 2147483647
    %v2868 = vand.u32 %v2867, 65535
    %v2869 = vshra.s32 %v2867, 16
    %v2870 = vcvt.s32.f32 %v2868
    %v2871 = vcvt.s32.f32 %v2869
    %2872 = vmin.xlane.f32.xlu0 %v2871
    %v2873 = vpop.xlane.xlu0 %2872
    %vm2874 = vcmp.eq.f32.partialorder %v2871, %v2873
    %v2875 = vsel %vm2874, %v2870, inf
    %2876 = vmin.xlane.f32.xlu0 %v2875
    %v2877 = vpop.xlane.xlu0 %2876
    %v2878 = vcvt.f32.s32 %v2877
    %v2879 = vcvt.f32.s32 %v2873
    %v2880 = vshll.u32 %v2879, 16
    %v2881 = vadd.s32 %v2880, %v2878
    %v2882 = vsel %vm488, %v2654, 2147483647
    %v2883 = vand.u32 %v2882, 65535
    %v2884 = vshra.s32 %v2882, 16
    %v2885 = vcvt.s32.f32 %v2883
    %v2886 = vcvt.s32.f32 %v2884
    %2887 = vmin.xlane.f32.xlu0 %v2886
    %v2888 = vpop.xlane.xlu0 %2887
    %vm2889 = vcmp.eq.f32.partialorder %v2886, %v2888
    %v2890 = vsel %vm2889, %v2885, inf
    %2891 = vmin.xlane.f32.xlu0 %v2890
    %v2892 = vpop.xlane.xlu0 %2891
    %v2893 = vcvt.f32.s32 %v2892
    %v2894 = vcvt.f32.s32 %v2888
    %v2895 = vshll.u32 %v2894, 16
    %v2896 = vadd.s32 %v2895, %v2893
    %v2897 = vsel %vm488, %v2655, 2147483647
    %v2898 = vand.u32 %v2897, 65535
    %v2899 = vshra.s32 %v2897, 16
    %v2900 = vcvt.s32.f32 %v2898
    %v2901 = vcvt.s32.f32 %v2899
    %2902 = vmin.xlane.f32.xlu0 %v2901
    %v2903 = vpop.xlane.xlu0 %2902
    %vm2904 = vcmp.eq.f32.partialorder %v2901, %v2903
    %v2905 = vsel %vm2904, %v2900, inf
    %2906 = vmin.xlane.f32.xlu0 %v2905
    %v2907 = vpop.xlane.xlu0 %2906
    %v2908 = vcvt.f32.s32 %v2907
    %v2909 = vcvt.f32.s32 %v2903
    %v2910 = vshll.u32 %v2909, 16
    %v2911 = vadd.s32 %v2910, %v2908
    %v2912 = vsel %vm488, %v2656, 2147483647
    %v2913 = vand.u32 %v2912, 65535
    %v2914 = vshra.s32 %v2912, 16
    %v2915 = vcvt.s32.f32 %v2913
    %v2916 = vcvt.s32.f32 %v2914
    %2917 = vmin.xlane.f32.xlu0 %v2916
    %v2918 = vpop.xlane.xlu0 %2917
    %vm2919 = vcmp.eq.f32.partialorder %v2916, %v2918
    %v2920 = vsel %vm2919, %v2915, inf
    %2921 = vmin.xlane.f32.xlu0 %v2920
    %v2922 = vpop.xlane.xlu0 %2921
    %v2923 = vcvt.f32.s32 %v2922
    %v2924 = vcvt.f32.s32 %v2918
    %v2925 = vshll.u32 %v2924, 16
    %v2926 = vadd.s32 %v2925, %v2923
    %v2927 = vsel %vm488, %v2657, 2147483647
    %v2928 = vand.u32 %v2927, 65535
    %v2929 = vshra.s32 %v2927, 16
    %v2930 = vcvt.s32.f32 %v2928
    %v2931 = vcvt.s32.f32 %v2929
    %2932 = vmin.xlane.f32.xlu0 %v2931
    %v2933 = vpop.xlane.xlu0 %2932
    %vm2934 = vcmp.eq.f32.partialorder %v2931, %v2933
    %v2935 = vsel %vm2934, %v2930, inf
    %2936 = vmin.xlane.f32.xlu0 %v2935
    %v2937 = vpop.xlane.xlu0 %2936
    %v2938 = vcvt.f32.s32 %v2937
    %v2939 = vcvt.f32.s32 %v2933
    %v2940 = vshll.u32 %v2939, 16
    %v2941 = vadd.s32 %v2940, %v2938
    %v2942 = vsel %vm488, %v2658, 2147483647
    %v2943 = vand.u32 %v2942, 65535
    %v2944 = vshra.s32 %v2942, 16
    %v2945 = vcvt.s32.f32 %v2943
    %v2946 = vcvt.s32.f32 %v2944
    %2947 = vmin.xlane.f32.xlu0 %v2946
    %v2948 = vpop.xlane.xlu0 %2947
    %vm2949 = vcmp.eq.f32.partialorder %v2946, %v2948
    %v2950 = vsel %vm2949, %v2945, inf
    %2951 = vmin.xlane.f32.xlu0 %v2950
    %v2952 = vpop.xlane.xlu0 %2951
    %v2953 = vcvt.f32.s32 %v2952
    %v2954 = vcvt.f32.s32 %v2948
    %v2955 = vshll.u32 %v2954, 16
    %v2956 = vadd.s32 %v2955, %v2953
    %v2957 = vsel %vm488, %v2659, 2147483647
    %v2958 = vand.u32 %v2957, 65535
    %v2959 = vshra.s32 %v2957, 16
    %v2960 = vcvt.s32.f32 %v2958
    %v2961 = vcvt.s32.f32 %v2959
    %2962 = vmin.xlane.f32.xlu0 %v2961
    %v2963 = vpop.xlane.xlu0 %2962
    %vm2964 = vcmp.eq.f32.partialorder %v2961, %v2963
    %v2965 = vsel %vm2964, %v2960, inf
    %2966 = vmin.xlane.f32.xlu0 %v2965
    %v2967 = vpop.xlane.xlu0 %2966
    %v2968 = vcvt.f32.s32 %v2967
    %v2969 = vcvt.f32.s32 %v2963
    %v2970 = vshll.u32 %v2969, 16
    %v2971 = vadd.s32 %v2970, %v2968
    %v2972 = vsel %vm488, %v2660, 2147483647
    %v2973 = vand.u32 %v2972, 65535
    %v2974 = vshra.s32 %v2972, 16
    %v2975 = vcvt.s32.f32 %v2973
    %v2976 = vcvt.s32.f32 %v2974
    %2977 = vmin.xlane.f32.xlu0 %v2976
    %v2978 = vpop.xlane.xlu0 %2977
    %vm2979 = vcmp.eq.f32.partialorder %v2976, %v2978
    %v2980 = vsel %vm2979, %v2975, inf
    %2981 = vmin.xlane.f32.xlu0 %v2980
    %v2982 = vpop.xlane.xlu0 %2981
    %v2983 = vcvt.f32.s32 %v2982
    %v2984 = vcvt.f32.s32 %v2978
    %v2985 = vshll.u32 %v2984, 16
    %v2986 = vadd.s32 %v2985, %v2983
    %v2987 = vsel %vm488, %v2661, 2147483647
    %v2988 = vand.u32 %v2987, 65535
    %v2989 = vshra.s32 %v2987, 16
    %v2990 = vcvt.s32.f32 %v2988
    %v2991 = vcvt.s32.f32 %v2989
    %2992 = vmin.xlane.f32.xlu0 %v2991
    %v2993 = vpop.xlane.xlu0 %2992
    %vm2994 = vcmp.eq.f32.partialorder %v2991, %v2993
    %v2995 = vsel %vm2994, %v2990, inf
    %2996 = vmin.xlane.f32.xlu0 %v2995
    %v2997 = vpop.xlane.xlu0 %2996
    %v2998 = vcvt.f32.s32 %v2997
    %v2999 = vcvt.f32.s32 %v2993
    %v3000 = vshll.u32 %v2999, 16
    %v3001 = vadd.s32 %v3000, %v2998
    %v3002 = vsel %vm488, %v2662, 2147483647
    %v3003 = vand.u32 %v3002, 65535
    %v3004 = vshra.s32 %v3002, 16
    %v3005 = vcvt.s32.f32 %v3003
    %v3006 = vcvt.s32.f32 %v3004
    %3007 = vmin.xlane.f32.xlu0 %v3006
    %v3008 = vpop.xlane.xlu0 %3007
    %vm3009 = vcmp.eq.f32.partialorder %v3006, %v3008
    %v3010 = vsel %vm3009, %v3005, inf
    %3011 = vmin.xlane.f32.xlu0 %v3010
    %v3012 = vpop.xlane.xlu0 %3011
    %v3013 = vcvt.f32.s32 %v3012
    %v3014 = vcvt.f32.s32 %v3008
    %v3015 = vshll.u32 %v3014, 16
    %v3016 = vadd.s32 %v3015, %v3013
    %v3017 = vsel %vm488, %v2663, 2147483647
    %v3018 = vand.u32 %v3017, 65535
    %v3019 = vshra.s32 %v3017, 16
    %v3020 = vcvt.s32.f32 %v3018
    %v3021 = vcvt.s32.f32 %v3019
    %3022 = vmin.xlane.f32.xlu0 %v3021
    %v3023 = vpop.xlane.xlu0 %3022
    %vm3024 = vcmp.eq.f32.partialorder %v3021, %v3023
    %v3025 = vsel %vm3024, %v3020, inf
    %3026 = vmin.xlane.f32.xlu0 %v3025
    %v3027 = vpop.xlane.xlu0 %3026
    %v3028 = vcvt.f32.s32 %v3027
    %v3029 = vcvt.f32.s32 %v3023
    %v3030 = vshll.u32 %v3029, 16
    %v3031 = vadd.s32 %v3030, %v3028
    %v3032 = vsel %vm488, %v2664, 2147483647
    %v3033 = vand.u32 %v3032, 65535
    %v3034 = vshra.s32 %v3032, 16
    %v3035 = vcvt.s32.f32 %v3033
    %v3036 = vcvt.s32.f32 %v3034
    %3037 = vmin.xlane.f32.xlu0 %v3036
    %v3038 = vpop.xlane.xlu0 %3037
    %vm3039 = vcmp.eq.f32.partialorder %v3036, %v3038
    %v3040 = vsel %vm3039, %v3035, inf
    %3041 = vmin.xlane.f32.xlu0 %v3040
    %v3042 = vpop.xlane.xlu0 %3041
    %v3043 = vcvt.f32.s32 %v3042
    %v3044 = vcvt.f32.s32 %v3038
    %v3045 = vshll.u32 %v3044, 16
    %v3046 = vadd.s32 %v3045, %v3043
    %v3047 = vsel %vm488, %v2665, 2147483647
    %v3048 = vand.u32 %v3047, 65535
    %v3049 = vshra.s32 %v3047, 16
    %v3050 = vcvt.s32.f32 %v3048
    %v3051 = vcvt.s32.f32 %v3049
    %3052 = vmin.xlane.f32.xlu0 %v3051
    %v3053 = vpop.xlane.xlu0 %3052
    %vm3054 = vcmp.eq.f32.partialorder %v3051, %v3053
    %v3055 = vsel %vm3054, %v3050, inf
    %3056 = vmin.xlane.f32.xlu0 %v3055
    %v3057 = vpop.xlane.xlu0 %3056
    %v3058 = vcvt.f32.s32 %v3057
    %v3059 = vcvt.f32.s32 %v3053
    %v3060 = vshll.u32 %v3059, 16
    %v3061 = vadd.s32 %v3060, %v3058
    %v3062 = vsel %vm488, %v2666, 2147483647
    %v3063 = vand.u32 %v3062, 65535
    %v3064 = vshra.s32 %v3062, 16
    %v3065 = vcvt.s32.f32 %v3063
    %v3066 = vcvt.s32.f32 %v3064
    %3067 = vmin.xlane.f32.xlu0 %v3066
    %v3068 = vpop.xlane.xlu0 %3067
    %vm3069 = vcmp.eq.f32.partialorder %v3066, %v3068
    %v3070 = vsel %vm3069, %v3065, inf
    %3071 = vmin.xlane.f32.xlu0 %v3070
    %v3072 = vpop.xlane.xlu0 %3071
    %v3073 = vcvt.f32.s32 %v3072
    %v3074 = vcvt.f32.s32 %v3068
    %v3075 = vshll.u32 %v3074, 16
    %v3076 = vadd.s32 %v3075, %v3073
    %v3077 = vsel %vm488, %v2667, 2147483647
    %v3078 = vand.u32 %v3077, 65535
    %v3079 = vshra.s32 %v3077, 16
    %v3080 = vcvt.s32.f32 %v3078
    %v3081 = vcvt.s32.f32 %v3079
    %3082 = vmin.xlane.f32.xlu0 %v3081
    %v3083 = vpop.xlane.xlu0 %3082
    %vm3084 = vcmp.eq.f32.partialorder %v3081, %v3083
    %v3085 = vsel %vm3084, %v3080, inf
    %3086 = vmin.xlane.f32.xlu0 %v3085
    %v3087 = vpop.xlane.xlu0 %3086
    %v3088 = vcvt.f32.s32 %v3087
    %v3089 = vcvt.f32.s32 %v3083
    %v3090 = vshll.u32 %v3089, 16
    %v3091 = vadd.s32 %v3090, %v3088
    %v3092 = vsel %vm488, %v2668, 2147483647
    %v3093 = vand.u32 %v3092, 65535
    %v3094 = vshra.s32 %v3092, 16
    %v3095 = vcvt.s32.f32 %v3093
    %v3096 = vcvt.s32.f32 %v3094
    %3097 = vmin.xlane.f32.xlu0 %v3096
    %v3098 = vpop.xlane.xlu0 %3097
    %vm3099 = vcmp.eq.f32.partialorder %v3096, %v3098
    %v3100 = vsel %vm3099, %v3095, inf
    %3101 = vmin.xlane.f32.xlu0 %v3100
    %v3102 = vpop.xlane.xlu0 %3101
    %v3103 = vcvt.f32.s32 %v3102
    %v3104 = vcvt.f32.s32 %v3098
    %v3105 = vshll.u32 %v3104, 16
    %v3106 = vadd.s32 %v3105, %v3103
    %v3107 = vsel %vm488, %v2669, 2147483647
    %v3108 = vand.u32 %v3107, 65535
    %v3109 = vshra.s32 %v3107, 16
    %v3110 = vcvt.s32.f32 %v3108
    %v3111 = vcvt.s32.f32 %v3109
    %3112 = vmin.xlane.f32.xlu0 %v3111
    %v3113 = vpop.xlane.xlu0 %3112
    %vm3114 = vcmp.eq.f32.partialorder %v3111, %v3113
    %v3115 = vsel %vm3114, %v3110, inf
    %3116 = vmin.xlane.f32.xlu0 %v3115
    %v3117 = vpop.xlane.xlu0 %3116
    %v3118 = vcvt.f32.s32 %v3117
    %v3119 = vcvt.f32.s32 %v3113
    %v3120 = vshll.u32 %v3119, 16
    %v3121 = vadd.s32 %v3120, %v3118
    %v3122 = vsel %vm488, %v2670, 2147483647
    %v3123 = vand.u32 %v3122, 65535
    %v3124 = vshra.s32 %v3122, 16
    %v3125 = vcvt.s32.f32 %v3123
    %v3126 = vcvt.s32.f32 %v3124
    %3127 = vmin.xlane.f32.xlu0 %v3126
    %v3128 = vpop.xlane.xlu0 %3127
    %vm3129 = vcmp.eq.f32.partialorder %v3126, %v3128
    %v3130 = vsel %vm3129, %v3125, inf
    %3131 = vmin.xlane.f32.xlu0 %v3130
    %v3132 = vpop.xlane.xlu0 %3131
    %v3133 = vcvt.f32.s32 %v3132
    %v3134 = vcvt.f32.s32 %v3128
    %v3135 = vshll.u32 %v3134, 16
    %v3136 = vadd.s32 %v3135, %v3133
    %v3137 = vsel %vm488, %v2671, 2147483647
    %v3138 = vand.u32 %v3137, 65535
    %v3139 = vshra.s32 %v3137, 16
    %v3140 = vcvt.s32.f32 %v3138
    %v3141 = vcvt.s32.f32 %v3139
    %3142 = vmin.xlane.f32.xlu0 %v3141
    %v3143 = vpop.xlane.xlu0 %3142
    %vm3144 = vcmp.eq.f32.partialorder %v3141, %v3143
    %v3145 = vsel %vm3144, %v3140, inf
    %3146 = vmin.xlane.f32.xlu0 %v3145
    %v3147 = vpop.xlane.xlu0 %3146
    %v3148 = vcvt.f32.s32 %v3147
    %v3149 = vcvt.f32.s32 %v3143
    %v3150 = vshll.u32 %v3149, 16
    %v3151 = vadd.s32 %v3150, %v3148
    %v3152 = vsel %vm1739, %v2686, %v2110
    %v3153 = vsel %vm1739, %v2701, %v2125
    %v3154 = vsel %vm1739, %v2716, %v2140
    %v3155 = vsel %vm1739, %v2731, %v2155
    %v3156 = vsel %vm1739, %v2746, %v2170
    %v3157 = vsel %vm1739, %v2761, %v2185
    %v3158 = vsel %vm1739, %v2776, %v2200
    %v3159 = vsel %vm1739, %v2791, %v2215
    %v3160 = vsel %vm1739, %v2806, %v2230
    %v3161 = vsel %vm1739, %v2821, %v2245
    %v3162 = vsel %vm1739, %v2836, %v2260
    %v3163 = vsel %vm1739, %v2851, %v2275
    %v3164 = vsel %vm1739, %v2866, %v2290
    %v3165 = vsel %vm1739, %v2881, %v2305
    %v3166 = vsel %vm1739, %v2896, %v2320
    %v3167 = vsel %vm1739, %v2911, %v2335
    %v3168 = vsel %vm1739, %v2926, %v2350
    %v3169 = vsel %vm1739, %v2941, %v2365
    %v3170 = vsel %vm1739, %v2956, %v2380
    %v3171 = vsel %vm1739, %v2971, %v2395
    %v3172 = vsel %vm1739, %v2986, %v2410
    %v3173 = vsel %vm1739, %v3001, %v2425
    %v3174 = vsel %vm1739, %v3016, %v2440
    %v3175 = vsel %vm1739, %v3031, %v2455
    %v3176 = vsel %vm1739, %v3046, %v2470
    %v3177 = vsel %vm1739, %v3061, %v2485
    %v3178 = vsel %vm1739, %v3076, %v2500
    %v3179 = vsel %vm1739, %v3091, %v2515
    %v3180 = vsel %vm1739, %v3106, %v2530
    %v3181 = vsel %vm1739, %v3121, %v2545
    %v3182 = vsel %vm1739, %v3136, %v2560
    %v3183 = vsel %vm1739, %v3151, %v2575
    %vm3184 = vcmp.eq.s32.totalorder %v1742, %v3152
    %vm3185 = vcmp.eq.s32.totalorder %v1742, %v3153
    %vm3186 = vcmp.eq.s32.totalorder %v1742, %v3154
    %vm3187 = vcmp.eq.s32.totalorder %v1742, %v3155
    %vm3188 = vcmp.eq.s32.totalorder %v1742, %v3156
    %vm3189 = vcmp.eq.s32.totalorder %v1742, %v3157
    %vm3190 = vcmp.eq.s32.totalorder %v1742, %v3158
    %vm3191 = vcmp.eq.s32.totalorder %v1742, %v3159
    %vm3192 = vcmp.eq.s32.totalorder %v1742, %v3160
    %vm3193 = vcmp.eq.s32.totalorder %v1742, %v3161
    %vm3194 = vcmp.eq.s32.totalorder %v1742, %v3162
    %vm3195 = vcmp.eq.s32.totalorder %v1742, %v3163
    %vm3196 = vcmp.eq.s32.totalorder %v1742, %v3164
    %vm3197 = vcmp.eq.s32.totalorder %v1742, %v3165
    %vm3198 = vcmp.eq.s32.totalorder %v1742, %v3166
    %vm3199 = vcmp.eq.s32.totalorder %v1742, %v3167
    %vm3200 = vcmp.eq.s32.totalorder %v1742, %v3168
    %vm3201 = vcmp.eq.s32.totalorder %v1742, %v3169
    %vm3202 = vcmp.eq.s32.totalorder %v1742, %v3170
    %vm3203 = vcmp.eq.s32.totalorder %v1742, %v3171
    %vm3204 = vcmp.eq.s32.totalorder %v1742, %v3172
    %vm3205 = vcmp.eq.s32.totalorder %v1742, %v3173
    %vm3206 = vcmp.eq.s32.totalorder %v1742, %v3174
    %vm3207 = vcmp.eq.s32.totalorder %v1742, %v3175
    %vm3208 = vcmp.eq.s32.totalorder %v1742, %v3176
    %vm3209 = vcmp.eq.s32.totalorder %v1742, %v3177
    %vm3210 = vcmp.eq.s32.totalorder %v1742, %v3178
    %vm3211 = vcmp.eq.s32.totalorder %v1742, %v3179
    %vm3212 = vcmp.eq.s32.totalorder %v1742, %v3180
    %vm3213 = vcmp.eq.s32.totalorder %v1742, %v3181
    %vm3214 = vcmp.eq.s32.totalorder %v1742, %v3182
    %vm3215 = vcmp.eq.s32.totalorder %v1742, %v3183
    %v3216 = vsel %vm3184, 1, 0
    %v3217 = vsel %vm3185, 1, 0
    %v3218 = vsel %vm3186, 1, 0
    %v3219 = vsel %vm3187, 1, 0
    %v3220 = vsel %vm3188, 1, 0
    %v3221 = vsel %vm3189, 1, 0
    %v3222 = vsel %vm3190, 1, 0
    %v3223 = vsel %vm3191, 1, 0
    %v3224 = vsel %vm3192, 1, 0
    %v3225 = vsel %vm3193, 1, 0
    %v3226 = vsel %vm3194, 1, 0
    %v3227 = vsel %vm3195, 1, 0
    %v3228 = vsel %vm3196, 1, 0
    %v3229 = vsel %vm3197, 1, 0
    %v3230 = vsel %vm3198, 1, 0
    %v3231 = vsel %vm3199, 1, 0
    %v3232 = vsel %vm3200, 1, 0
    %v3233 = vsel %vm3201, 1, 0
    %v3234 = vsel %vm3202, 1, 0
    %v3235 = vsel %vm3203, 1, 0
    %v3236 = vsel %vm3204, 1, 0
    %v3237 = vsel %vm3205, 1, 0
    %v3238 = vsel %vm3206, 1, 0
    %v3239 = vsel %vm3207, 1, 0
    %v3240 = vsel %vm3208, 1, 0
    %v3241 = vsel %vm3209, 1, 0
    %v3242 = vsel %vm3210, 1, 0
    %v3243 = vsel %vm3211, 1, 0
    %v3244 = vsel %vm3212, 1, 0
    %v3245 = vsel %vm3213, 1, 0
    %v3246 = vsel %vm3214, 1, 0
    %v3247 = vsel %vm3215, 1, 0
    %v3248 = vcvt.s32.f32 %v3216
    %v3249 = vcvt.s32.f32 %v3217
    %v3250 = vcvt.s32.f32 %v3218
    %v3251 = vcvt.s32.f32 %v3219
    %v3252 = vcvt.s32.f32 %v3220
    %v3253 = vcvt.s32.f32 %v3221
    %v3254 = vcvt.s32.f32 %v3222
    %v3255 = vcvt.s32.f32 %v3223
    %v3256 = vcvt.s32.f32 %v3224
    %v3257 = vcvt.s32.f32 %v3225
    %v3258 = vcvt.s32.f32 %v3226
    %v3259 = vcvt.s32.f32 %v3227
    %v3260 = vcvt.s32.f32 %v3228
    %v3261 = vcvt.s32.f32 %v3229
    %v3262 = vcvt.s32.f32 %v3230
    %v3263 = vcvt.s32.f32 %v3231
    %v3264 = vcvt.s32.f32 %v3232
    %v3265 = vcvt.s32.f32 %v3233
    %v3266 = vcvt.s32.f32 %v3234
    %v3267 = vcvt.s32.f32 %v3235
    %v3268 = vcvt.s32.f32 %v3236
    %v3269 = vcvt.s32.f32 %v3237
    %v3270 = vcvt.s32.f32 %v3238
    %v3271 = vcvt.s32.f32 %v3239
    %v3272 = vcvt.s32.f32 %v3240
    %v3273 = vcvt.s32.f32 %v3241
    %v3274 = vcvt.s32.f32 %v3242
    %v3275 = vcvt.s32.f32 %v3243
    %v3276 = vcvt.s32.f32 %v3244
    %v3277 = vcvt.s32.f32 %v3245
    %v3278 = vcvt.s32.f32 %v3246
    %v3279 = vcvt.s32.f32 %v3247
    %v3281 = vsel %vm488, %v3248, 0
    %v3284 = vsel %vm488, %v3249, 0
    %v3287 = vsel %vm488, %v3250, 0
    %v3290 = vsel %vm488, %v3251, 0
    %v3293 = vsel %vm488, %v3252, 0
    %v3296 = vsel %vm488, %v3253, 0
    %v3299 = vsel %vm488, %v3254, 0
    %v3302 = vsel %vm488, %v3255, 0
    %v3305 = vsel %vm488, %v3256, 0
    %v3308 = vsel %vm488, %v3257, 0
    %v3311 = vsel %vm488, %v3258, 0
    %v3314 = vsel %vm488, %v3259, 0
    %v3317 = vsel %vm488, %v3260, 0
    %v3320 = vsel %vm488, %v3261, 0
    %v3323 = vsel %vm488, %v3262, 0
    %v3326 = vsel %vm488, %v3263, 0
    %v3329 = vsel %vm488, %v3264, 0
    %v3332 = vsel %vm488, %v3265, 0
    %v3335 = vsel %vm488, %v3266, 0
    %v3338 = vsel %vm488, %v3267, 0
    %v3341 = vsel %vm488, %v3268, 0
    %v3344 = vsel %vm488, %v3269, 0
    %v3347 = vsel %vm488, %v3270, 0
    %v3350 = vsel %vm488, %v3271, 0
    %v3353 = vsel %vm488, %v3272, 0
    %v3356 = vsel %vm488, %v3273, 0
    %v3359 = vsel %vm488, %v3274, 0
    %v3362 = vsel %vm488, %v3275, 0
    %v3365 = vsel %vm488, %v3276, 0
    %v3368 = vsel %vm488, %v3277, 0
    %v3371 = vsel %vm488, %v3278, 0
    %v3374 = vsel %vm488, %v3279, 0
    %3376 = vmatpush.msra.mxu0 0.0
    %3377 = vmatpush.msra.mxu0 0.0
    %3378 = vmatpush.msra.mxu0 0.0
    %3379 = vmatpush.msra.mxu0 0.0
    %3380 = vmatpush.msra.mxu0 0.0
    %3381 = vmatpush.msra.mxu0 0.0
    %3382 = vmatpush.msra.mxu0 0.0
    %3383 = vmatpush.msra.mxu0 0.0
    %3384 = vmatpush.msra.mxu0 0.0
    %3385 = vmatpush.msra.mxu0 0.0
    %3386 = vmatpush.msra.mxu0 0.0
    %3387 = vmatpush.msra.mxu0 0.0
    %3388 = vmatpush.msra.mxu0 %v1461
    %3389 = vmatpush.msra.mxu0 %v1460
    %3390 = vmatpush.msra.mxu0 %v1459
    %3391 = vmatpush.msra.mxu0 %v1458
    %3392 = vmatmul.f32.gmra.mxu0 %v3281
    %v3393 = vpop.f32.mrf.mxu0
    %v3394 = vadd.f32 0.0, %v3393
    %3395 = vmatmul.f32.gmra.mxu0 %v3284
    %v3396 = vpop.f32.mrf.mxu0
    %v3397 = vadd.f32 0.0, %v3396
    %3398 = vmatmul.f32.gmra.mxu0 %v3287
    %v3399 = vpop.f32.mrf.mxu0
    %v3400 = vadd.f32 0.0, %v3399
    %3401 = vmatmul.f32.gmra.mxu0 %v3290
    %v3402 = vpop.f32.mrf.mxu0
    %v3403 = vadd.f32 0.0, %v3402
    %3404 = vmatmul.f32.gmra.mxu0 %v3293
    %v3405 = vpop.f32.mrf.mxu0
    %v3406 = vadd.f32 0.0, %v3405
    %3407 = vmatmul.f32.gmra.mxu0 %v3296
    %v3408 = vpop.f32.mrf.mxu0
    %v3409 = vadd.f32 0.0, %v3408
    %3410 = vmatmul.f32.gmra.mxu0 %v3299
    %v3411 = vpop.f32.mrf.mxu0
    %v3412 = vadd.f32 0.0, %v3411
    %3413 = vmatmul.f32.gmra.mxu0 %v3302
    %v3414 = vpop.f32.mrf.mxu0
    %v3415 = vadd.f32 0.0, %v3414
    %3416 = vmatmul.f32.gmra.mxu0 %v3305
    %v3417 = vpop.f32.mrf.mxu0
    %v3418 = vadd.f32 0.0, %v3417
    %3419 = vmatmul.f32.gmra.mxu0 %v3308
    %v3420 = vpop.f32.mrf.mxu0
    %v3421 = vadd.f32 0.0, %v3420
    %3422 = vmatmul.f32.gmra.mxu0 %v3311
    %v3423 = vpop.f32.mrf.mxu0
    %v3424 = vadd.f32 0.0, %v3423
    %3425 = vmatmul.f32.gmra.mxu0 %v3314
    %v3426 = vpop.f32.mrf.mxu0
    %v3427 = vadd.f32 0.0, %v3426
    %3428 = vmatmul.f32.gmra.mxu0 %v3317
    %v3429 = vpop.f32.mrf.mxu0
    %v3430 = vadd.f32 0.0, %v3429
    %3431 = vmatmul.f32.gmra.mxu0 %v3320
    %v3432 = vpop.f32.mrf.mxu0
    %v3433 = vadd.f32 0.0, %v3432
    %3434 = vmatmul.f32.gmra.mxu0 %v3323
    %v3435 = vpop.f32.mrf.mxu0
    %v3436 = vadd.f32 0.0, %v3435
    %3437 = vmatmul.f32.gmra.mxu0 %v3326
    %v3438 = vpop.f32.mrf.mxu0
    %v3439 = vadd.f32 0.0, %v3438
    %3440 = vmatmul.f32.gmra.mxu0 %v3329
    %v3441 = vpop.f32.mrf.mxu0
    %v3442 = vadd.f32 0.0, %v3441
    %3443 = vmatmul.f32.gmra.mxu0 %v3332
    %v3444 = vpop.f32.mrf.mxu0
    %v3445 = vadd.f32 0.0, %v3444
    %3446 = vmatmul.f32.gmra.mxu0 %v3335
    %v3447 = vpop.f32.mrf.mxu0
    %v3448 = vadd.f32 0.0, %v3447
    %3449 = vmatmul.f32.gmra.mxu0 %v3338
    %v3450 = vpop.f32.mrf.mxu0
    %v3451 = vadd.f32 0.0, %v3450
    %3452 = vmatmul.f32.gmra.mxu0 %v3341
    %v3453 = vpop.f32.mrf.mxu0
    %v3454 = vadd.f32 0.0, %v3453
    %3455 = vmatmul.f32.gmra.mxu0 %v3344
    %v3456 = vpop.f32.mrf.mxu0
    %v3457 = vadd.f32 0.0, %v3456
    %3458 = vmatmul.f32.gmra.mxu0 %v3347
    %v3459 = vpop.f32.mrf.mxu0
    %v3460 = vadd.f32 0.0, %v3459
    %3461 = vmatmul.f32.gmra.mxu0 %v3350
    %v3462 = vpop.f32.mrf.mxu0
    %v3463 = vadd.f32 0.0, %v3462
    %3464 = vmatmul.f32.gmra.mxu0 %v3353
    %v3465 = vpop.f32.mrf.mxu0
    %v3466 = vadd.f32 0.0, %v3465
    %3467 = vmatmul.f32.gmra.mxu0 %v3356
    %v3468 = vpop.f32.mrf.mxu0
    %v3469 = vadd.f32 0.0, %v3468
    %3470 = vmatmul.f32.gmra.mxu0 %v3359
    %v3471 = vpop.f32.mrf.mxu0
    %v3472 = vadd.f32 0.0, %v3471
    %3473 = vmatmul.f32.gmra.mxu0 %v3362
    %v3474 = vpop.f32.mrf.mxu0
    %v3475 = vadd.f32 0.0, %v3474
    %3476 = vmatmul.f32.gmra.mxu0 %v3365
    %v3477 = vpop.f32.mrf.mxu0
    %v3478 = vadd.f32 0.0, %v3477
    %3479 = vmatmul.f32.gmra.mxu0 %v3368
    %v3480 = vpop.f32.mrf.mxu0
    %v3481 = vadd.f32 0.0, %v3480
    %3482 = vmatmul.f32.gmra.mxu0 %v3371
    %v3483 = vpop.f32.mrf.mxu0
    %v3484 = vadd.f32 0.0, %v3483
    %3485 = vmatmul.f32.gmra.mxu0 %v3374
    %v3486 = vpop.f32.mrf.mxu0
    %v3487 = vadd.f32 0.0, %v3486
    %3488 = vdwg.mxu0
    %vm3489 = vcmp.eq.s32.totalorder %v1738, 0
    %v3490 = vsel %vm3489, %v2110, %v2686
    %v3491 = vsel %vm3489, %v2125, %v2701
    %v3492 = vsel %vm3489, %v2140, %v2716
    %v3493 = vsel %vm3489, %v2155, %v2731
    %v3494 = vsel %vm3489, %v2170, %v2746
    %v3495 = vsel %vm3489, %v2185, %v2761
    %v3496 = vsel %vm3489, %v2200, %v2776
    %v3497 = vsel %vm3489, %v2215, %v2791
    %v3498 = vsel %vm3489, %v2230, %v2806
    %v3499 = vsel %vm3489, %v2245, %v2821
    %v3500 = vsel %vm3489, %v2260, %v2836
    %v3501 = vsel %vm3489, %v2275, %v2851
    %v3502 = vsel %vm3489, %v2290, %v2866
    %v3503 = vsel %vm3489, %v2305, %v2881
    %v3504 = vsel %vm3489, %v2320, %v2896
    %v3505 = vsel %vm3489, %v2335, %v2911
    %v3506 = vsel %vm3489, %v2350, %v2926
    %v3507 = vsel %vm3489, %v2365, %v2941
    %v3508 = vsel %vm3489, %v2380, %v2956
    %v3509 = vsel %vm3489, %v2395, %v2971
    %v3510 = vsel %vm3489, %v2410, %v2986
    %v3511 = vsel %vm3489, %v2425, %v3001
    %v3512 = vsel %vm3489, %v2440, %v3016
    %v3513 = vsel %vm3489, %v2455, %v3031
    %v3514 = vsel %vm3489, %v2470, %v3046
    %v3515 = vsel %vm3489, %v2485, %v3061
    %v3516 = vsel %vm3489, %v2500, %v3076
    %v3517 = vsel %vm3489, %v2515, %v3091
    %v3518 = vsel %vm3489, %v2530, %v3106
    %v3519 = vsel %vm3489, %v2545, %v3121
    %v3520 = vsel %vm3489, %v2560, %v3136
    %v3521 = vsel %vm3489, %v2575, %v3151
    %vm3522 = vcmask 15360
    %3523 = vst.msk [vmem:[%s5] sm:$0xff] %vm3522, %v3490
    %3524 = vst.msk [vmem:[%s5 + $0x8] sm:$0xff] %vm3522, %v3491
    %3525 = vst.msk [vmem:[%s5 + $0x10] sm:$0xff] %vm3522, %v3492
    %3526 = vst.msk [vmem:[%s5 + $0x18] sm:$0xff] %vm3522, %v3493
    %3527 = vst.msk [vmem:[%s5 + $0x20] sm:$0xff] %vm3522, %v3494
    %3528 = vst.msk [vmem:[%s5 + $0x28] sm:$0xff] %vm3522, %v3495
    %3529 = vst.msk [vmem:[%s5 + $0x30] sm:$0xff] %vm3522, %v3496
    %3530 = vst.msk [vmem:[%s5 + $0x38] sm:$0xff] %vm3522, %v3497
    %3531 = vst.msk [vmem:[%s5 + $0x40] sm:$0xff] %vm3522, %v3498
    %3532 = vst.msk [vmem:[%s5 + $0x48] sm:$0xff] %vm3522, %v3499
    %3533 = vst.msk [vmem:[%s5 + $0x50] sm:$0xff] %vm3522, %v3500
    %3534 = vst.msk [vmem:[%s5 + $0x58] sm:$0xff] %vm3522, %v3501
    %3535 = vst.msk [vmem:[%s5 + $0x60] sm:$0xff] %vm3522, %v3502
    %3536 = vst.msk [vmem:[%s5 + $0x68] sm:$0xff] %vm3522, %v3503
    %3537 = vst.msk [vmem:[%s5 + $0x70] sm:$0xff] %vm3522, %v3504
    %3538 = vst.msk [vmem:[%s5 + $0x78] sm:$0xff] %vm3522, %v3505
    %3539 = vst.msk [vmem:[%s5 + $0x80] sm:$0xff] %vm3522, %v3506
    %3540 = vst.msk [vmem:[%s5 + $0x88] sm:$0xff] %vm3522, %v3507
    %3541 = vst.msk [vmem:[%s5 + $0x90] sm:$0xff] %vm3522, %v3508
    %3542 = vst.msk [vmem:[%s5 + $0x98] sm:$0xff] %vm3522, %v3509
    %3543 = vst.msk [vmem:[%s5 + $0xa0] sm:$0xff] %vm3522, %v3510
    %3544 = vst.msk [vmem:[%s5 + $0xa8] sm:$0xff] %vm3522, %v3511
    %3545 = vst.msk [vmem:[%s5 + $0xb0] sm:$0xff] %vm3522, %v3512
    %3546 = vst.msk [vmem:[%s5 + $0xb8] sm:$0xff] %vm3522, %v3513
    %3547 = vst.msk [vmem:[%s5 + $0xc0] sm:$0xff] %vm3522, %v3514
    %3548 = vst.msk [vmem:[%s5 + $0xc8] sm:$0xff] %vm3522, %v3515
    %3549 = vst.msk [vmem:[%s5 + $0xd0] sm:$0xff] %vm3522, %v3516
    %3550 = vst.msk [vmem:[%s5 + $0xd8] sm:$0xff] %vm3522, %v3517
    %3551 = vst.msk [vmem:[%s5 + $0xe0] sm:$0xff] %vm3522, %v3518
    %3552 = vst.msk [vmem:[%s5 + $0xe8] sm:$0xff] %vm3522, %v3519
    %3553 = vst.msk [vmem:[%s5 + $0xf0] sm:$0xff] %vm3522, %v3520
    %3554 = vst.msk [vmem:[%s5 + $0xf8] sm:$0xff] %vm3522, %v3521
    %v3555 = vsub.f32 %v3394, %v1424
    %v3556 = vsub.f32 %v3397, %v1425
    %v3557 = vsub.f32 %v3400, %v1426
    %v3558 = vsub.f32 %v3403, %v1427
    %v3559 = vsub.f32 %v3406, %v1428
    %v3560 = vsub.f32 %v3409, %v1429
    %v3561 = vsub.f32 %v3412, %v1430
    %v3562 = vsub.f32 %v3415, %v1431
    %v3563 = vsub.f32 %v3418, %v1432
    %v3564 = vsub.f32 %v3421, %v1433
    %v3565 = vsub.f32 %v3424, %v1434
    %v3566 = vsub.f32 %v3427, %v1435
    %v3567 = vsub.f32 %v3430, %v1436
    %v3568 = vsub.f32 %v3433, %v1437
    %v3569 = vsub.f32 %v3436, %v1438
    %v3570 = vsub.f32 %v3439, %v1439
    %v3571 = vsub.f32 %v3442, %v1440
    %v3572 = vsub.f32 %v3445, %v1441
    %v3573 = vsub.f32 %v3448, %v1442
    %v3574 = vsub.f32 %v3451, %v1443
    %v3575 = vsub.f32 %v3454, %v1444
    %v3576 = vsub.f32 %v3457, %v1445
    %v3577 = vsub.f32 %v3460, %v1446
    %v3578 = vsub.f32 %v3463, %v1447
    %v3579 = vsub.f32 %v3466, %v1448
    %v3580 = vsub.f32 %v3469, %v1449
    %v3581 = vsub.f32 %v3472, %v1450
    %v3582 = vsub.f32 %v3475, %v1451
    %v3583 = vsub.f32 %v3478, %v1452
    %v3584 = vsub.f32 %v3481, %v1453
    %v3585 = vsub.f32 %v3484, %v1454
    %v3586 = vsub.f32 %v3487, %v1455
    %v3587 = vmul.f32 %v3555, %v3555
    %v3588 = vmul.f32 %v3556, %v3556
    %v3589 = vmul.f32 %v3557, %v3557
    %v3590 = vmul.f32 %v3558, %v3558
    %v3591 = vmul.f32 %v3559, %v3559
    %v3592 = vmul.f32 %v3560, %v3560
    %v3593 = vmul.f32 %v3561, %v3561
    %v3594 = vmul.f32 %v3562, %v3562
    %v3595 = vmul.f32 %v3563, %v3563
    %v3596 = vmul.f32 %v3564, %v3564
    %v3597 = vmul.f32 %v3565, %v3565
    %v3598 = vmul.f32 %v3566, %v3566
    %v3599 = vmul.f32 %v3567, %v3567
    %v3600 = vmul.f32 %v3568, %v3568
    %v3601 = vmul.f32 %v3569, %v3569
    %v3602 = vmul.f32 %v3570, %v3570
    %v3603 = vmul.f32 %v3571, %v3571
    %v3604 = vmul.f32 %v3572, %v3572
    %v3605 = vmul.f32 %v3573, %v3573
    %v3606 = vmul.f32 %v3574, %v3574
    %v3607 = vmul.f32 %v3575, %v3575
    %v3608 = vmul.f32 %v3576, %v3576
    %v3609 = vmul.f32 %v3577, %v3577
    %v3610 = vmul.f32 %v3578, %v3578
    %v3611 = vmul.f32 %v3579, %v3579
    %v3612 = vmul.f32 %v3580, %v3580
    %v3613 = vmul.f32 %v3581, %v3581
    %v3614 = vmul.f32 %v3582, %v3582
    %v3615 = vmul.f32 %v3583, %v3583
    %v3616 = vmul.f32 %v3584, %v3584
    %v3617 = vmul.f32 %v3585, %v3585
    %v3618 = vmul.f32 %v3586, %v3586
    %v3619 = vsel %vm734, %v3587, 0.0
    %3620 = vadd.xlane.f32.xlu0 %v3619
    %v3621 = vpop.xlane.xlu0 %3620
    %v3622 = vsel %vm734, %v3588, 0.0
    %3623 = vadd.xlane.f32.xlu0 %v3622
    %v3624 = vpop.xlane.xlu0 %3623
    %v3625 = vsel %vm734, %v3589, 0.0
    %3626 = vadd.xlane.f32.xlu0 %v3625
    %v3627 = vpop.xlane.xlu0 %3626
    %v3628 = vsel %vm734, %v3590, 0.0
    %3629 = vadd.xlane.f32.xlu0 %v3628
    %v3630 = vpop.xlane.xlu0 %3629
    %v3631 = vsel %vm734, %v3591, 0.0
    %3632 = vadd.xlane.f32.xlu0 %v3631
    %v3633 = vpop.xlane.xlu0 %3632
    %v3634 = vsel %vm734, %v3592, 0.0
    %3635 = vadd.xlane.f32.xlu0 %v3634
    %v3636 = vpop.xlane.xlu0 %3635
    %v3637 = vsel %vm734, %v3593, 0.0
    %3638 = vadd.xlane.f32.xlu0 %v3637
    %v3639 = vpop.xlane.xlu0 %3638
    %v3640 = vsel %vm734, %v3594, 0.0
    %3641 = vadd.xlane.f32.xlu0 %v3640
    %v3642 = vpop.xlane.xlu0 %3641
    %v3643 = vsel %vm734, %v3595, 0.0
    %3644 = vadd.xlane.f32.xlu0 %v3643
    %v3645 = vpop.xlane.xlu0 %3644
    %v3646 = vsel %vm734, %v3596, 0.0
    %3647 = vadd.xlane.f32.xlu0 %v3646
    %v3648 = vpop.xlane.xlu0 %3647
    %v3649 = vsel %vm734, %v3597, 0.0
    %3650 = vadd.xlane.f32.xlu0 %v3649
    %v3651 = vpop.xlane.xlu0 %3650
    %v3652 = vsel %vm734, %v3598, 0.0
    %3653 = vadd.xlane.f32.xlu0 %v3652
    %v3654 = vpop.xlane.xlu0 %3653
    %v3655 = vsel %vm734, %v3599, 0.0
    %3656 = vadd.xlane.f32.xlu0 %v3655
    %v3657 = vpop.xlane.xlu0 %3656
    %v3658 = vsel %vm734, %v3600, 0.0
    %3659 = vadd.xlane.f32.xlu0 %v3658
    %v3660 = vpop.xlane.xlu0 %3659
    %v3661 = vsel %vm734, %v3601, 0.0
    %3662 = vadd.xlane.f32.xlu0 %v3661
    %v3663 = vpop.xlane.xlu0 %3662
    %v3664 = vsel %vm734, %v3602, 0.0
    %3665 = vadd.xlane.f32.xlu0 %v3664
    %v3666 = vpop.xlane.xlu0 %3665
    %v3667 = vsel %vm734, %v3603, 0.0
    %3668 = vadd.xlane.f32.xlu0 %v3667
    %v3669 = vpop.xlane.xlu0 %3668
    %v3670 = vsel %vm734, %v3604, 0.0
    %3671 = vadd.xlane.f32.xlu0 %v3670
    %v3672 = vpop.xlane.xlu0 %3671
    %v3673 = vsel %vm734, %v3605, 0.0
    %3674 = vadd.xlane.f32.xlu0 %v3673
    %v3675 = vpop.xlane.xlu0 %3674
    %v3676 = vsel %vm734, %v3606, 0.0
    %3677 = vadd.xlane.f32.xlu0 %v3676
    %v3678 = vpop.xlane.xlu0 %3677
    %v3679 = vsel %vm734, %v3607, 0.0
    %3680 = vadd.xlane.f32.xlu0 %v3679
    %v3681 = vpop.xlane.xlu0 %3680
    %v3682 = vsel %vm734, %v3608, 0.0
    %3683 = vadd.xlane.f32.xlu0 %v3682
    %v3684 = vpop.xlane.xlu0 %3683
    %v3685 = vsel %vm734, %v3609, 0.0
    %3686 = vadd.xlane.f32.xlu0 %v3685
    %v3687 = vpop.xlane.xlu0 %3686
    %v3688 = vsel %vm734, %v3610, 0.0
    %3689 = vadd.xlane.f32.xlu0 %v3688
    %v3690 = vpop.xlane.xlu0 %3689
    %v3691 = vsel %vm734, %v3611, 0.0
    %3692 = vadd.xlane.f32.xlu0 %v3691
    %v3693 = vpop.xlane.xlu0 %3692
    %v3694 = vsel %vm734, %v3612, 0.0
    %3695 = vadd.xlane.f32.xlu0 %v3694
    %v3696 = vpop.xlane.xlu0 %3695
    %v3697 = vsel %vm734, %v3613, 0.0
    %3698 = vadd.xlane.f32.xlu0 %v3697
    %v3699 = vpop.xlane.xlu0 %3698
    %v3700 = vsel %vm734, %v3614, 0.0
    %3701 = vadd.xlane.f32.xlu0 %v3700
    %v3702 = vpop.xlane.xlu0 %3701
    %v3703 = vsel %vm734, %v3615, 0.0
    %3704 = vadd.xlane.f32.xlu0 %v3703
    %v3705 = vpop.xlane.xlu0 %3704
    %v3706 = vsel %vm734, %v3616, 0.0
    %3707 = vadd.xlane.f32.xlu0 %v3706
    %v3708 = vpop.xlane.xlu0 %3707
    %v3709 = vsel %vm734, %v3617, 0.0
    %3710 = vadd.xlane.f32.xlu0 %v3709
    %v3711 = vpop.xlane.xlu0 %3710
    %v3712 = vsel %vm734, %v3618, 0.0
    %3713 = vadd.xlane.f32.xlu0 %v3712
    %v3714 = vpop.xlane.xlu0 %3713
    %v3715 = vadd.f32 %v3621, %v3624
    %v3716 = vadd.f32 %v3715, %v3627
    %v3717 = vadd.f32 %v3716, %v3630
    %v3718 = vadd.f32 %v3717, %v3633
    %v3719 = vadd.f32 %v3718, %v3636
    %v3720 = vadd.f32 %v3719, %v3639
    %v3721 = vadd.f32 %v3720, %v3642
    %v3722 = vadd.f32 %v3721, %v3645
    %v3723 = vadd.f32 %v3722, %v3648
    %v3724 = vadd.f32 %v3723, %v3651
    %v3725 = vadd.f32 %v3724, %v3654
    %v3726 = vadd.f32 %v3725, %v3657
    %v3727 = vadd.f32 %v3726, %v3660
    %v3728 = vadd.f32 %v3727, %v3663
    %v3729 = vadd.f32 %v3728, %v3666
    %v3730 = vadd.f32 %v3729, %v3669
    %v3731 = vadd.f32 %v3730, %v3672
    %v3732 = vadd.f32 %v3731, %v3675
    %v3733 = vadd.f32 %v3732, %v3678
    %v3734 = vadd.f32 %v3733, %v3681
    %v3735 = vadd.f32 %v3734, %v3684
    %v3736 = vadd.f32 %v3735, %v3687
    %v3737 = vadd.f32 %v3736, %v3690
    %v3738 = vadd.f32 %v3737, %v3693
    %v3739 = vadd.f32 %v3738, %v3696
    %v3740 = vadd.f32 %v3739, %v3699
    %v3741 = vadd.f32 %v3740, %v3702
    %v3742 = vadd.f32 %v3741, %v3705
    %v3743 = vadd.f32 %v3742, %v3708
    %v3744 = vadd.f32 %v3743, %v3711
    %v3745 = vadd.f32 %v3744, %v3714
    %v3746 = vrot.slane %v3745, 4
    %v3747 = vadd.f32 %v3745, %v3746
    %v3748 = vrot.slane %v3747, 2
    %v3749 = vadd.f32 %v3747, %v3748
    %v3750 = vrot.slane %v3749, 1
    %v3751 = vadd.f32 %v3749, %v3750
    %vm3752 = vcmask 0
    %3753 = vst.msk [vmem:[#allocation6] sm:$0x1] %vm3752, %v3751
    %v3754 = vld [vmem:[#allocation2 + $0x148] sm:$0xff]
    %v3755 = vld [vmem:[#allocation2 + $0x150] sm:$0xff]
    %v3756 = vld [vmem:[#allocation2 + $0x158] sm:$0x1]
    %v3757 = vperm.slane %v3756, 0
    %v3759 = vsel %vm734, %v3394, 0
    %v3762 = vsel %vm734, %v3397, 0
    %v3765 = vsel %vm734, %v3400, 0
    %v3768 = vsel %vm734, %v3403, 0
    %v3771 = vsel %vm734, %v3406, 0
    %v3774 = vsel %vm734, %v3409, 0
    %v3777 = vsel %vm734, %v3412, 0
    %v3780 = vsel %vm734, %v3415, 0
    %v3783 = vsel %vm734, %v3418, 0
    %v3786 = vsel %vm734, %v3421, 0
    %v3789 = vsel %vm734, %v3424, 0
    %v3792 = vsel %vm734, %v3427, 0
    %v3795 = vsel %vm734, %v3430, 0
    %v3798 = vsel %vm734, %v3433, 0
    %v3801 = vsel %vm734, %v3436, 0
    %v3804 = vsel %vm734, %v3439, 0
    %v3807 = vsel %vm734, %v3442, 0
    %v3810 = vsel %vm734, %v3445, 0
    %v3813 = vsel %vm734, %v3448, 0
    %v3816 = vsel %vm734, %v3451, 0
    %v3819 = vsel %vm734, %v3454, 0
    %v3822 = vsel %vm734, %v3457, 0
    %v3825 = vsel %vm734, %v3460, 0
    %v3828 = vsel %vm734, %v3463, 0
    %v3831 = vsel %vm734, %v3466, 0
    %v3834 = vsel %vm734, %v3469, 0
    %v3837 = vsel %vm734, %v3472, 0
    %v3840 = vsel %vm734, %v3475, 0
    %v3843 = vsel %vm734, %v3478, 0
    %v3846 = vsel %vm734, %v3481, 0
    %v3849 = vsel %vm734, %v3484, 0
    %v3852 = vsel %vm734, %v3487, 0
    %3854 = vmatpush.msra.mxu0 0.0
    %3855 = vmatpush.msra.mxu0 0.0
    %3856 = vmatpush.msra.mxu0 0.0
    %3857 = vmatpush.msra.mxu0 0.0
    %3858 = vmatpush.msra.mxu0 0.0
    %3859 = vmatpush.msra.mxu0 0.0
    %3860 = vmatpush.msra.mxu0 0.0
    %3861 = vmatpush.msra.mxu0 0.0
    %3862 = vmatpush.msra.mxu0 0.0
    %3863 = vmatpush.msra.mxu0 0.0
    %3864 = vmatpush.msra.mxu0 0.0
    %3865 = vmatpush.msra.mxu0 0.0
    %3866 = vmatpush.msra.mxu0 0.0
    %3867 = vmatpush.msra.mxu0 0.0
    %3868 = vmatpush.msra.mxu0 %v3755
    %3869 = vmatpush.msra.mxu0 %v3754
    %3870 = vmatmul.f32.gmra.mxu0 %v3759
    %v3871 = vpop.f32.mrf.mxu0
    %v3872 = vadd.f32 %v3757, %v3871
    %3873 = vmatmul.f32.gmra.mxu0 %v3762
    %v3874 = vpop.f32.mrf.mxu0
    %v3875 = vadd.f32 %v3757, %v3874
    %3876 = vmatmul.f32.gmra.mxu0 %v3765
    %v3877 = vpop.f32.mrf.mxu0
    %v3878 = vadd.f32 %v3757, %v3877
    %3879 = vmatmul.f32.gmra.mxu0 %v3768
    %v3880 = vpop.f32.mrf.mxu0
    %v3881 = vadd.f32 %v3757, %v3880
    %3882 = vmatmul.f32.gmra.mxu0 %v3771
    %v3883 = vpop.f32.mrf.mxu0
    %v3884 = vadd.f32 %v3757, %v3883
    %3885 = vmatmul.f32.gmra.mxu0 %v3774
    %v3886 = vpop.f32.mrf.mxu0
    %v3887 = vadd.f32 %v3757, %v3886
    %3888 = vmatmul.f32.gmra.mxu0 %v3777
    %v3889 = vpop.f32.mrf.mxu0
    %v3890 = vadd.f32 %v3757, %v3889
    %3891 = vmatmul.f32.gmra.mxu0 %v3780
    %v3892 = vpop.f32.mrf.mxu0
    %v3893 = vadd.f32 %v3757, %v3892
    %3894 = vmatmul.f32.gmra.mxu0 %v3783
    %v3895 = vpop.f32.mrf.mxu0
    %v3896 = vadd.f32 %v3757, %v3895
    %3897 = vmatmul.f32.gmra.mxu0 %v3786
    %v3898 = vpop.f32.mrf.mxu0
    %v3899 = vadd.f32 %v3757, %v3898
    %3900 = vmatmul.f32.gmra.mxu0 %v3789
    %v3901 = vpop.f32.mrf.mxu0
    %v3902 = vadd.f32 %v3757, %v3901
    %3903 = vmatmul.f32.gmra.mxu0 %v3792
    %v3904 = vpop.f32.mrf.mxu0
    %v3905 = vadd.f32 %v3757, %v3904
    %3906 = vmatmul.f32.gmra.mxu0 %v3795
    %v3907 = vpop.f32.mrf.mxu0
    %v3908 = vadd.f32 %v3757, %v3907
    %3909 = vmatmul.f32.gmra.mxu0 %v3798
    %v3910 = vpop.f32.mrf.mxu0
    %v3911 = vadd.f32 %v3757, %v3910
    %3912 = vmatmul.f32.gmra.mxu0 %v3801
    %v3913 = vpop.f32.mrf.mxu0
    %v3914 = vadd.f32 %v3757, %v3913
    %3915 = vmatmul.f32.gmra.mxu0 %v3804
    %v3916 = vpop.f32.mrf.mxu0
    %v3917 = vadd.f32 %v3757, %v3916
    %3918 = vmatmul.f32.gmra.mxu0 %v3807
    %v3919 = vpop.f32.mrf.mxu0
    %v3920 = vadd.f32 %v3757, %v3919
    %3921 = vmatmul.f32.gmra.mxu0 %v3810
    %v3922 = vpop.f32.mrf.mxu0
    %v3923 = vadd.f32 %v3757, %v3922
    %3924 = vmatmul.f32.gmra.mxu0 %v3813
    %v3925 = vpop.f32.mrf.mxu0
    %v3926 = vadd.f32 %v3757, %v3925
    %3927 = vmatmul.f32.gmra.mxu0 %v3816
    %v3928 = vpop.f32.mrf.mxu0
    %v3929 = vadd.f32 %v3757, %v3928
    %3930 = vmatmul.f32.gmra.mxu0 %v3819
    %v3931 = vpop.f32.mrf.mxu0
    %v3932 = vadd.f32 %v3757, %v3931
    %3933 = vmatmul.f32.gmra.mxu0 %v3822
    %v3934 = vpop.f32.mrf.mxu0
    %v3935 = vadd.f32 %v3757, %v3934
    %3936 = vmatmul.f32.gmra.mxu0 %v3825
    %v3937 = vpop.f32.mrf.mxu0
    %v3938 = vadd.f32 %v3757, %v3937
    %3939 = vmatmul.f32.gmra.mxu0 %v3828
    %v3940 = vpop.f32.mrf.mxu0
    %v3941 = vadd.f32 %v3757, %v3940
    %3942 = vmatmul.f32.gmra.mxu0 %v3831
    %v3943 = vpop.f32.mrf.mxu0
    %v3944 = vadd.f32 %v3757, %v3943
    %3945 = vmatmul.f32.gmra.mxu0 %v3834
    %v3946 = vpop.f32.mrf.mxu0
    %v3947 = vadd.f32 %v3757, %v3946
    %3948 = vmatmul.f32.gmra.mxu0 %v3837
    %v3949 = vpop.f32.mrf.mxu0
    %v3950 = vadd.f32 %v3757, %v3949
    %3951 = vmatmul.f32.gmra.mxu0 %v3840
    %v3952 = vpop.f32.mrf.mxu0
    %v3953 = vadd.f32 %v3757, %v3952
    %3954 = vmatmul.f32.gmra.mxu0 %v3843
    %v3955 = vpop.f32.mrf.mxu0
    %v3956 = vadd.f32 %v3757, %v3955
    %3957 = vmatmul.f32.gmra.mxu0 %v3846
    %v3958 = vpop.f32.mrf.mxu0
    %v3959 = vadd.f32 %v3757, %v3958
    %3960 = vmatmul.f32.gmra.mxu0 %v3849
    %v3961 = vpop.f32.mrf.mxu0
    %v3962 = vadd.f32 %v3757, %v3961
    %3963 = vmatmul.f32.gmra.mxu0 %v3852
    %v3964 = vpop.f32.mrf.mxu0
    %v3965 = vadd.f32 %v3757, %v3964
    %3966 = vdwg.mxu0
    %v3967 = vmax.f32 %v3872, 0.0
    %v3968 = vmax.f32 %v3875, 0.0
    %v3969 = vmax.f32 %v3878, 0.0
    %v3970 = vmax.f32 %v3881, 0.0
    %v3971 = vmax.f32 %v3884, 0.0
    %v3972 = vmax.f32 %v3887, 0.0
    %v3973 = vmax.f32 %v3890, 0.0
    %v3974 = vmax.f32 %v3893, 0.0
    %v3975 = vmax.f32 %v3896, 0.0
    %v3976 = vmax.f32 %v3899, 0.0
    %v3977 = vmax.f32 %v3902, 0.0
    %v3978 = vmax.f32 %v3905, 0.0
    %v3979 = vmax.f32 %v3908, 0.0
    %v3980 = vmax.f32 %v3911, 0.0
    %v3981 = vmax.f32 %v3914, 0.0
    %v3982 = vmax.f32 %v3917, 0.0
    %v3983 = vmax.f32 %v3920, 0.0
    %v3984 = vmax.f32 %v3923, 0.0
    %v3985 = vmax.f32 %v3926, 0.0
    %v3986 = vmax.f32 %v3929, 0.0
    %v3987 = vmax.f32 %v3932, 0.0
    %v3988 = vmax.f32 %v3935, 0.0
    %v3989 = vmax.f32 %v3938, 0.0
    %v3990 = vmax.f32 %v3941, 0.0
    %v3991 = vmax.f32 %v3944, 0.0
    %v3992 = vmax.f32 %v3947, 0.0
    %v3993 = vmax.f32 %v3950, 0.0
    %v3994 = vmax.f32 %v3953, 0.0
    %v3995 = vmax.f32 %v3956, 0.0
    %v3996 = vmax.f32 %v3959, 0.0
    %v3997 = vmax.f32 %v3962, 0.0
    %v3998 = vmax.f32 %v3965, 0.0
    %v3999 = vld [vmem:[#allocation2 + $0x160] sm:$0xff]
    %v4000 = vld [vmem:[#allocation2 + $0x168] sm:$0xff]
    %v4001 = vld [vmem:[#allocation2 + $0x170] sm:$0xff]
    %v4002 = vld [vmem:[#allocation2 + $0x178] sm:$0xff]
    %v4003 = vld [vmem:[#allocation2 + $0x180] sm:$0x1]
    %v4004 = vperm.slane %v4003, 0
    %v4006 = vsel %vm488, %v3967, 0
    %v4009 = vsel %vm488, %v3968, 0
    %v4012 = vsel %vm488, %v3969, 0
    %v4015 = vsel %vm488, %v3970, 0
    %v4018 = vsel %vm488, %v3971, 0
    %v4021 = vsel %vm488, %v3972, 0
    %v4024 = vsel %vm488, %v3973, 0
    %v4027 = vsel %vm488, %v3974, 0
    %v4030 = vsel %vm488, %v3975, 0
    %v4033 = vsel %vm488, %v3976, 0
    %v4036 = vsel %vm488, %v3977, 0
    %v4039 = vsel %vm488, %v3978, 0
    %v4042 = vsel %vm488, %v3979, 0
    %v4045 = vsel %vm488, %v3980, 0
    %v4048 = vsel %vm488, %v3981, 0
    %v4051 = vsel %vm488, %v3982, 0
    %v4054 = vsel %vm488, %v3983, 0
    %v4057 = vsel %vm488, %v3984, 0
    %v4060 = vsel %vm488, %v3985, 0
    %v4063 = vsel %vm488, %v3986, 0
    %v4066 = vsel %vm488, %v3987, 0
    %v4069 = vsel %vm488, %v3988, 0
    %v4072 = vsel %vm488, %v3989, 0
    %v4075 = vsel %vm488, %v3990, 0
    %v4078 = vsel %vm488, %v3991, 0
    %v4081 = vsel %vm488, %v3992, 0
    %v4084 = vsel %vm488, %v3993, 0
    %v4087 = vsel %vm488, %v3994, 0
    %v4090 = vsel %vm488, %v3995, 0
    %v4093 = vsel %vm488, %v3996, 0
    %v4096 = vsel %vm488, %v3997, 0
    %v4099 = vsel %vm488, %v3998, 0
    %4101 = vmatpush.msra.mxu0 0.0
    %4102 = vmatpush.msra.mxu0 0.0
    %4103 = vmatpush.msra.mxu0 0.0
    %4104 = vmatpush.msra.mxu0 0.0
    %4105 = vmatpush.msra.mxu0 0.0
    %4106 = vmatpush.msra.mxu0 0.0
    %4107 = vmatpush.msra.mxu0 0.0
    %4108 = vmatpush.msra.mxu0 0.0
    %4109 = vmatpush.msra.mxu0 0.0
    %4110 = vmatpush.msra.mxu0 0.0
    %4111 = vmatpush.msra.mxu0 0.0
    %4112 = vmatpush.msra.mxu0 0.0
    %4113 = vmatpush.msra.mxu0 %v4002
    %4114 = vmatpush.msra.mxu0 %v4001
    %4115 = vmatpush.msra.mxu0 %v4000
    %4116 = vmatpush.msra.mxu0 %v3999
    %4117 = vmatmul.f32.gmra.mxu0 %v4006
    %v4118 = vpop.f32.mrf.mxu0
    %v4119 = vadd.f32 %v4004, %v4118
    %4120 = vmatmul.f32.gmra.mxu0 %v4009
    %v4121 = vpop.f32.mrf.mxu0
    %v4122 = vadd.f32 %v4004, %v4121
    %4123 = vmatmul.f32.gmra.mxu0 %v4012
    %v4124 = vpop.f32.mrf.mxu0
    %v4125 = vadd.f32 %v4004, %v4124
    %4126 = vmatmul.f32.gmra.mxu0 %v4015
    %v4127 = vpop.f32.mrf.mxu0
    %v4128 = vadd.f32 %v4004, %v4127
    %4129 = vmatmul.f32.gmra.mxu0 %v4018
    %v4130 = vpop.f32.mrf.mxu0
    %v4131 = vadd.f32 %v4004, %v4130
    %4132 = vmatmul.f32.gmra.mxu0 %v4021
    %v4133 = vpop.f32.mrf.mxu0
    %v4134 = vadd.f32 %v4004, %v4133
    %4135 = vmatmul.f32.gmra.mxu0 %v4024
    %v4136 = vpop.f32.mrf.mxu0
    %v4137 = vadd.f32 %v4004, %v4136
    %4138 = vmatmul.f32.gmra.mxu0 %v4027
    %v4139 = vpop.f32.mrf.mxu0
    %v4140 = vadd.f32 %v4004, %v4139
    %4141 = vmatmul.f32.gmra.mxu0 %v4030
    %v4142 = vpop.f32.mrf.mxu0
    %v4143 = vadd.f32 %v4004, %v4142
    %4144 = vmatmul.f32.gmra.mxu0 %v4033
    %v4145 = vpop.f32.mrf.mxu0
    %v4146 = vadd.f32 %v4004, %v4145
    %4147 = vmatmul.f32.gmra.mxu0 %v4036
    %v4148 = vpop.f32.mrf.mxu0
    %v4149 = vadd.f32 %v4004, %v4148
    %4150 = vmatmul.f32.gmra.mxu0 %v4039
    %v4151 = vpop.f32.mrf.mxu0
    %v4152 = vadd.f32 %v4004, %v4151
    %4153 = vmatmul.f32.gmra.mxu0 %v4042
    %v4154 = vpop.f32.mrf.mxu0
    %v4155 = vadd.f32 %v4004, %v4154
    %4156 = vmatmul.f32.gmra.mxu0 %v4045
    %v4157 = vpop.f32.mrf.mxu0
    %v4158 = vadd.f32 %v4004, %v4157
    %4159 = vmatmul.f32.gmra.mxu0 %v4048
    %v4160 = vpop.f32.mrf.mxu0
    %v4161 = vadd.f32 %v4004, %v4160
    %4162 = vmatmul.f32.gmra.mxu0 %v4051
    %v4163 = vpop.f32.mrf.mxu0
    %v4164 = vadd.f32 %v4004, %v4163
    %4165 = vmatmul.f32.gmra.mxu0 %v4054
    %v4166 = vpop.f32.mrf.mxu0
    %v4167 = vadd.f32 %v4004, %v4166
    %4168 = vmatmul.f32.gmra.mxu0 %v4057
    %v4169 = vpop.f32.mrf.mxu0
    %v4170 = vadd.f32 %v4004, %v4169
    %4171 = vmatmul.f32.gmra.mxu0 %v4060
    %v4172 = vpop.f32.mrf.mxu0
    %v4173 = vadd.f32 %v4004, %v4172
    %4174 = vmatmul.f32.gmra.mxu0 %v4063
    %v4175 = vpop.f32.mrf.mxu0
    %v4176 = vadd.f32 %v4004, %v4175
    %4177 = vmatmul.f32.gmra.mxu0 %v4066
    %v4178 = vpop.f32.mrf.mxu0
    %v4179 = vadd.f32 %v4004, %v4178
    %4180 = vmatmul.f32.gmra.mxu0 %v4069
    %v4181 = vpop.f32.mrf.mxu0
    %v4182 = vadd.f32 %v4004, %v4181
    %4183 = vmatmul.f32.gmra.mxu0 %v4072
    %v4184 = vpop.f32.mrf.mxu0
    %v4185 = vadd.f32 %v4004, %v4184
    %4186 = vmatmul.f32.gmra.mxu0 %v4075
    %v4187 = vpop.f32.mrf.mxu0
    %v4188 = vadd.f32 %v4004, %v4187
    %4189 = vmatmul.f32.gmra.mxu0 %v4078
    %v4190 = vpop.f32.mrf.mxu0
    %v4191 = vadd.f32 %v4004, %v4190
    %4192 = vmatmul.f32.gmra.mxu0 %v4081
    %v4193 = vpop.f32.mrf.mxu0
    %v4194 = vadd.f32 %v4004, %v4193
    %4195 = vmatmul.f32.gmra.mxu0 %v4084
    %v4196 = vpop.f32.mrf.mxu0
    %v4197 = vadd.f32 %v4004, %v4196
    %4198 = vmatmul.f32.gmra.mxu0 %v4087
    %v4199 = vpop.f32.mrf.mxu0
    %v4200 = vadd.f32 %v4004, %v4199
    %4201 = vmatmul.f32.gmra.mxu0 %v4090
    %v4202 = vpop.f32.mrf.mxu0
    %v4203 = vadd.f32 %v4004, %v4202
    %4204 = vmatmul.f32.gmra.mxu0 %v4093
    %v4205 = vpop.f32.mrf.mxu0
    %v4206 = vadd.f32 %v4004, %v4205
    %4207 = vmatmul.f32.gmra.mxu0 %v4096
    %v4208 = vpop.f32.mrf.mxu0
    %v4209 = vadd.f32 %v4004, %v4208
    %4210 = vmatmul.f32.gmra.mxu0 %v4099
    %v4211 = vpop.f32.mrf.mxu0
    %v4212 = vadd.f32 %v4004, %v4211
    %4213 = vdwg.mxu0
    %v4214 = vmax.f32 %v4119, 0.0
    %v4215 = vmax.f32 %v4122, 0.0
    %v4216 = vmax.f32 %v4125, 0.0
    %v4217 = vmax.f32 %v4128, 0.0
    %v4218 = vmax.f32 %v4131, 0.0
    %v4219 = vmax.f32 %v4134, 0.0
    %v4220 = vmax.f32 %v4137, 0.0
    %v4221 = vmax.f32 %v4140, 0.0
    %v4222 = vmax.f32 %v4143, 0.0
    %v4223 = vmax.f32 %v4146, 0.0
    %v4224 = vmax.f32 %v4149, 0.0
    %v4225 = vmax.f32 %v4152, 0.0
    %v4226 = vmax.f32 %v4155, 0.0
    %v4227 = vmax.f32 %v4158, 0.0
    %v4228 = vmax.f32 %v4161, 0.0
    %v4229 = vmax.f32 %v4164, 0.0
    %v4230 = vmax.f32 %v4167, 0.0
    %v4231 = vmax.f32 %v4170, 0.0
    %v4232 = vmax.f32 %v4173, 0.0
    %v4233 = vmax.f32 %v4176, 0.0
    %v4234 = vmax.f32 %v4179, 0.0
    %v4235 = vmax.f32 %v4182, 0.0
    %v4236 = vmax.f32 %v4185, 0.0
    %v4237 = vmax.f32 %v4188, 0.0
    %v4238 = vmax.f32 %v4191, 0.0
    %v4239 = vmax.f32 %v4194, 0.0
    %v4240 = vmax.f32 %v4197, 0.0
    %v4241 = vmax.f32 %v4200, 0.0
    %v4242 = vmax.f32 %v4203, 0.0
    %v4243 = vmax.f32 %v4206, 0.0
    %v4244 = vmax.f32 %v4209, 0.0
    %v4245 = vmax.f32 %v4212, 0.0
    %v4246 = vld [vmem:[#allocation2 + $0x188] sm:$0xff]
    %v4247 = vld [vmem:[#allocation2 + $0x190] sm:$0xff]
    %v4248 = vld [vmem:[#allocation2 + $0x198] sm:$0xff]
    %v4249 = vld [vmem:[#allocation2 + $0x1a0] sm:$0xff]
    %v4250 = vld [vmem:[#allocation2 + $0x1a8] sm:$0xff]
    %v4251 = vld [vmem:[#allocation2 + $0x1b0] sm:$0xff]
    %v4252 = vld [vmem:[#allocation2 + $0x1b8] sm:$0xff]
    %v4253 = vld [vmem:[#allocation2 + $0x1c0] sm:$0xff]
    %v4254 = vld [vmem:[#allocation2 + $0x1c8] sm:$0x1]
    %v4255 = vperm.slane %v4254, 0
    %v4257 = vsel %vm240, %v4214, 0
    %v4260 = vsel %vm240, %v4215, 0
    %v4263 = vsel %vm240, %v4216, 0
    %v4266 = vsel %vm240, %v4217, 0
    %v4269 = vsel %vm240, %v4218, 0
    %v4272 = vsel %vm240, %v4219, 0
    %v4275 = vsel %vm240, %v4220, 0
    %v4278 = vsel %vm240, %v4221, 0
    %v4281 = vsel %vm240, %v4222, 0
    %v4284 = vsel %vm240, %v4223, 0
    %v4287 = vsel %vm240, %v4224, 0
    %v4290 = vsel %vm240, %v4225, 0
    %v4293 = vsel %vm240, %v4226, 0
    %v4296 = vsel %vm240, %v4227, 0
    %v4299 = vsel %vm240, %v4228, 0
    %v4302 = vsel %vm240, %v4229, 0
    %v4305 = vsel %vm240, %v4230, 0
    %v4308 = vsel %vm240, %v4231, 0
    %v4311 = vsel %vm240, %v4232, 0
    %v4314 = vsel %vm240, %v4233, 0
    %v4317 = vsel %vm240, %v4234, 0
    %v4320 = vsel %vm240, %v4235, 0
    %v4323 = vsel %vm240, %v4236, 0
    %v4326 = vsel %vm240, %v4237, 0
    %v4329 = vsel %vm240, %v4238, 0
    %v4332 = vsel %vm240, %v4239, 0
    %v4335 = vsel %vm240, %v4240, 0
    %v4338 = vsel %vm240, %v4241, 0
    %v4341 = vsel %vm240, %v4242, 0
    %v4344 = vsel %vm240, %v4243, 0
    %v4347 = vsel %vm240, %v4244, 0
    %v4350 = vsel %vm240, %v4245, 0
    %4352 = vmatpush.msra.mxu0 0.0
    %4353 = vmatpush.msra.mxu0 0.0
    %4354 = vmatpush.msra.mxu0 0.0
    %4355 = vmatpush.msra.mxu0 0.0
    %4356 = vmatpush.msra.mxu0 0.0
    %4357 = vmatpush.msra.mxu0 0.0
    %4358 = vmatpush.msra.mxu0 0.0
    %4359 = vmatpush.msra.mxu0 0.0
    %4360 = vmatpush.msra.mxu0 %v4253
    %4361 = vmatpush.msra.mxu0 %v4252
    %4362 = vmatpush.msra.mxu0 %v4251
    %4363 = vmatpush.msra.mxu0 %v4250
    %4364 = vmatpush.msra.mxu0 %v4249
    %4365 = vmatpush.msra.mxu0 %v4248
    %4366 = vmatpush.msra.mxu0 %v4247
    %4367 = vmatpush.msra.mxu0 %v4246
    %4368 = vmatmul.f32.gmra.mxu0 %v4257
    %v4369 = vpop.f32.mrf.mxu0
    %v4370 = vadd.f32 %v4255, %v4369
    %4371 = vmatmul.f32.gmra.mxu0 %v4260
    %v4372 = vpop.f32.mrf.mxu0
    %v4373 = vadd.f32 %v4255, %v4372
    %4374 = vmatmul.f32.gmra.mxu0 %v4263
    %v4375 = vpop.f32.mrf.mxu0
    %v4376 = vadd.f32 %v4255, %v4375
    %4377 = vmatmul.f32.gmra.mxu0 %v4266
    %v4378 = vpop.f32.mrf.mxu0
    %v4379 = vadd.f32 %v4255, %v4378
    %4380 = vmatmul.f32.gmra.mxu0 %v4269
    %v4381 = vpop.f32.mrf.mxu0
    %v4382 = vadd.f32 %v4255, %v4381
    %4383 = vmatmul.f32.gmra.mxu0 %v4272
    %v4384 = vpop.f32.mrf.mxu0
    %v4385 = vadd.f32 %v4255, %v4384
    %4386 = vmatmul.f32.gmra.mxu0 %v4275
    %v4387 = vpop.f32.mrf.mxu0
    %v4388 = vadd.f32 %v4255, %v4387
    %4389 = vmatmul.f32.gmra.mxu0 %v4278
    %v4390 = vpop.f32.mrf.mxu0
    %v4391 = vadd.f32 %v4255, %v4390
    %4392 = vmatmul.f32.gmra.mxu0 %v4281
    %v4393 = vpop.f32.mrf.mxu0
    %v4394 = vadd.f32 %v4255, %v4393
    %4395 = vmatmul.f32.gmra.mxu0 %v4284
    %v4396 = vpop.f32.mrf.mxu0
    %v4397 = vadd.f32 %v4255, %v4396
    %4398 = vmatmul.f32.gmra.mxu0 %v4287
    %v4399 = vpop.f32.mrf.mxu0
    %v4400 = vadd.f32 %v4255, %v4399
    %4401 = vmatmul.f32.gmra.mxu0 %v4290
    %v4402 = vpop.f32.mrf.mxu0
    %v4403 = vadd.f32 %v4255, %v4402
    %4404 = vmatmul.f32.gmra.mxu0 %v4293
    %v4405 = vpop.f32.mrf.mxu0
    %v4406 = vadd.f32 %v4255, %v4405
    %4407 = vmatmul.f32.gmra.mxu0 %v4296
    %v4408 = vpop.f32.mrf.mxu0
    %v4409 = vadd.f32 %v4255, %v4408
    %4410 = vmatmul.f32.gmra.mxu0 %v4299
    %v4411 = vpop.f32.mrf.mxu0
    %v4412 = vadd.f32 %v4255, %v4411
    %4413 = vmatmul.f32.gmra.mxu0 %v4302
    %v4414 = vpop.f32.mrf.mxu0
    %v4415 = vadd.f32 %v4255, %v4414
    %4416 = vmatmul.f32.gmra.mxu0 %v4305
    %v4417 = vpop.f32.mrf.mxu0
    %v4418 = vadd.f32 %v4255, %v4417
    %4419 = vmatmul.f32.gmra.mxu0 %v4308
    %v4420 = vpop.f32.mrf.mxu0
    %v4421 = vadd.f32 %v4255, %v4420
    %4422 = vmatmul.f32.gmra.mxu0 %v4311
    %v4423 = vpop.f32.mrf.mxu0
    %v4424 = vadd.f32 %v4255, %v4423
    %4425 = vmatmul.f32.gmra.mxu0 %v4314
    %v4426 = vpop.f32.mrf.mxu0
    %v4427 = vadd.f32 %v4255, %v4426
    %4428 = vmatmul.f32.gmra.mxu0 %v4317
    %v4429 = vpop.f32.mrf.mxu0
    %v4430 = vadd.f32 %v4255, %v4429
    %4431 = vmatmul.f32.gmra.mxu0 %v4320
    %v4432 = vpop.f32.mrf.mxu0
    %v4433 = vadd.f32 %v4255, %v4432
    %4434 = vmatmul.f32.gmra.mxu0 %v4323
    %v4435 = vpop.f32.mrf.mxu0
    %v4436 = vadd.f32 %v4255, %v4435
    %4437 = vmatmul.f32.gmra.mxu0 %v4326
    %v4438 = vpop.f32.mrf.mxu0
    %v4439 = vadd.f32 %v4255, %v4438
    %4440 = vmatmul.f32.gmra.mxu0 %v4329
    %v4441 = vpop.f32.mrf.mxu0
    %v4442 = vadd.f32 %v4255, %v4441
    %4443 = vmatmul.f32.gmra.mxu0 %v4332
    %v4444 = vpop.f32.mrf.mxu0
    %v4445 = vadd.f32 %v4255, %v4444
    %4446 = vmatmul.f32.gmra.mxu0 %v4335
    %v4447 = vpop.f32.mrf.mxu0
    %v4448 = vadd.f32 %v4255, %v4447
    %4449 = vmatmul.f32.gmra.mxu0 %v4338
    %v4450 = vpop.f32.mrf.mxu0
    %v4451 = vadd.f32 %v4255, %v4450
    %4452 = vmatmul.f32.gmra.mxu0 %v4341
    %v4453 = vpop.f32.mrf.mxu0
    %v4454 = vadd.f32 %v4255, %v4453
    %4455 = vmatmul.f32.gmra.mxu0 %v4344
    %v4456 = vpop.f32.mrf.mxu0
    %v4457 = vadd.f32 %v4255, %v4456
    %4458 = vmatmul.f32.gmra.mxu0 %v4347
    %v4459 = vpop.f32.mrf.mxu0
    %v4460 = vadd.f32 %v4255, %v4459
    %4461 = vmatmul.f32.gmra.mxu0 %v4350
    %v4462 = vpop.f32.mrf.mxu0
    %v4463 = vadd.f32 %v4255, %v4462
    %4464 = vdwg.mxu0
    %v4465 = vmax.f32 %v4370, 0.0
    %v4466 = vmax.f32 %v4373, 0.0
    %v4467 = vmax.f32 %v4376, 0.0
    %v4468 = vmax.f32 %v4379, 0.0
    %v4469 = vmax.f32 %v4382, 0.0
    %v4470 = vmax.f32 %v4385, 0.0
    %v4471 = vmax.f32 %v4388, 0.0
    %v4472 = vmax.f32 %v4391, 0.0
    %v4473 = vmax.f32 %v4394, 0.0
    %v4474 = vmax.f32 %v4397, 0.0
    %v4475 = vmax.f32 %v4400, 0.0
    %v4476 = vmax.f32 %v4403, 0.0
    %v4477 = vmax.f32 %v4406, 0.0
    %v4478 = vmax.f32 %v4409, 0.0
    %v4479 = vmax.f32 %v4412, 0.0
    %v4480 = vmax.f32 %v4415, 0.0
    %v4481 = vmax.f32 %v4418, 0.0
    %v4482 = vmax.f32 %v4421, 0.0
    %v4483 = vmax.f32 %v4424, 0.0
    %v4484 = vmax.f32 %v4427, 0.0
    %v4485 = vmax.f32 %v4430, 0.0
    %v4486 = vmax.f32 %v4433, 0.0
    %v4487 = vmax.f32 %v4436, 0.0
    %v4488 = vmax.f32 %v4439, 0.0
    %v4489 = vmax.f32 %v4442, 0.0
    %v4490 = vmax.f32 %v4445, 0.0
    %v4491 = vmax.f32 %v4448, 0.0
    %v4492 = vmax.f32 %v4451, 0.0
    %v4493 = vmax.f32 %v4454, 0.0
    %v4494 = vmax.f32 %v4457, 0.0
    %v4495 = vmax.f32 %v4460, 0.0
    %v4496 = vmax.f32 %v4463, 0.0
    %v4497 = vld [vmem:[#allocation2 + $0x1d0] sm:$0xff]
    %v4498 = vld [vmem:[#allocation2 + $0x1d8] sm:$0xff]
    %v4499 = vld [vmem:[#allocation2 + $0x1e0] sm:$0xff]
    %v4500 = vld [vmem:[#allocation2 + $0x1e8] sm:$0xff]
    %v4501 = vld [vmem:[#allocation2 + $0x1f0] sm:$0xff]
    %v4502 = vld [vmem:[#allocation2 + $0x1f8] sm:$0xff]
    %v4503 = vld [vmem:[#allocation2 + $0x200] sm:$0xff]
    %v4504 = vld [vmem:[#allocation2 + $0x208] sm:$0xff]
    %v4505 = vld [vmem:[#allocation2 + $0x210] sm:$0xff]
    %v4506 = vld [vmem:[#allocation2 + $0x218] sm:$0xff]
    %v4507 = vld [vmem:[#allocation2 + $0x220] sm:$0xff]
    %v4508 = vld [vmem:[#allocation2 + $0x228] sm:$0xff]
    %v4509 = vld [vmem:[#allocation2 + $0x230] sm:$0xff]
    %v4510 = vld [vmem:[#allocation2 + $0x238] sm:$0xff]
    %v4511 = vld [vmem:[#allocation2 + $0x240] sm:$0xff]
    %v4512 = vld [vmem:[#allocation2 + $0x248] sm:$0xff]
    %v4513 = vld [vmem:[#allocation2 + $0x250] sm:$0x1]
    %v4514 = vperm.slane %v4513, 0
    %4515 = vmatpush.msra.mxu0 %v4512
    %4516 = vmatpush.msra.mxu0 %v4511
    %4517 = vmatpush.msra.mxu0 %v4510
    %4518 = vmatpush.msra.mxu0 %v4509
    %4519 = vmatpush.msra.mxu0 %v4508
    %4520 = vmatpush.msra.mxu0 %v4507
    %4521 = vmatpush.msra.mxu0 %v4506
    %4522 = vmatpush.msra.mxu0 %v4505
    %4523 = vmatpush.msra.mxu0 %v4504
    %4524 = vmatpush.msra.mxu0 %v4503
    %4525 = vmatpush.msra.mxu0 %v4502
    %4526 = vmatpush.msra.mxu0 %v4501
    %4527 = vmatpush.msra.mxu0 %v4500
    %4528 = vmatpush.msra.mxu0 %v4499
    %4529 = vmatpush.msra.mxu0 %v4498
    %4530 = vmatpush.msra.mxu0 %v4497
    %4531 = vmatmul.f32.gmra.mxu0 %v4465
    %v4532 = vpop.f32.mrf.mxu0
    %v4533 = vadd.f32 %v4514, %v4532
    %4534 = vmatmul.f32.gmra.mxu0 %v4466
    %v4535 = vpop.f32.mrf.mxu0
    %v4536 = vadd.f32 %v4514, %v4535
    %4537 = vmatmul.f32.gmra.mxu0 %v4467
    %v4538 = vpop.f32.mrf.mxu0
    %v4539 = vadd.f32 %v4514, %v4538
    %4540 = vmatmul.f32.gmra.mxu0 %v4468
    %v4541 = vpop.f32.mrf.mxu0
    %v4542 = vadd.f32 %v4514, %v4541
    %4543 = vmatmul.f32.gmra.mxu0 %v4469
    %v4544 = vpop.f32.mrf.mxu0
    %v4545 = vadd.f32 %v4514, %v4544
    %4546 = vmatmul.f32.gmra.mxu0 %v4470
    %v4547 = vpop.f32.mrf.mxu0
    %v4548 = vadd.f32 %v4514, %v4547
    %4549 = vmatmul.f32.gmra.mxu0 %v4471
    %v4550 = vpop.f32.mrf.mxu0
    %v4551 = vadd.f32 %v4514, %v4550
    %4552 = vmatmul.f32.gmra.mxu0 %v4472
    %v4553 = vpop.f32.mrf.mxu0
    %v4554 = vadd.f32 %v4514, %v4553
    %4555 = vmatmul.f32.gmra.mxu0 %v4473
    %v4556 = vpop.f32.mrf.mxu0
    %v4557 = vadd.f32 %v4514, %v4556
    %4558 = vmatmul.f32.gmra.mxu0 %v4474
    %v4559 = vpop.f32.mrf.mxu0
    %v4560 = vadd.f32 %v4514, %v4559
    %4561 = vmatmul.f32.gmra.mxu0 %v4475
    %v4562 = vpop.f32.mrf.mxu0
    %v4563 = vadd.f32 %v4514, %v4562
    %4564 = vmatmul.f32.gmra.mxu0 %v4476
    %v4565 = vpop.f32.mrf.mxu0
    %v4566 = vadd.f32 %v4514, %v4565
    %4567 = vmatmul.f32.gmra.mxu0 %v4477
    %v4568 = vpop.f32.mrf.mxu0
    %v4569 = vadd.f32 %v4514, %v4568
    %4570 = vmatmul.f32.gmra.mxu0 %v4478
    %v4571 = vpop.f32.mrf.mxu0
    %v4572 = vadd.f32 %v4514, %v4571
    %4573 = vmatmul.f32.gmra.mxu0 %v4479
    %v4574 = vpop.f32.mrf.mxu0
    %v4575 = vadd.f32 %v4514, %v4574
    %4576 = vmatmul.f32.gmra.mxu0 %v4480
    %v4577 = vpop.f32.mrf.mxu0
    %v4578 = vadd.f32 %v4514, %v4577
    %4579 = vmatmul.f32.gmra.mxu0 %v4481
    %v4580 = vpop.f32.mrf.mxu0
    %v4581 = vadd.f32 %v4514, %v4580
    %4582 = vmatmul.f32.gmra.mxu0 %v4482
    %v4583 = vpop.f32.mrf.mxu0
    %v4584 = vadd.f32 %v4514, %v4583
    %4585 = vmatmul.f32.gmra.mxu0 %v4483
    %v4586 = vpop.f32.mrf.mxu0
    %v4587 = vadd.f32 %v4514, %v4586
    %4588 = vmatmul.f32.gmra.mxu0 %v4484
    %v4589 = vpop.f32.mrf.mxu0
    %v4590 = vadd.f32 %v4514, %v4589
    %4591 = vmatmul.f32.gmra.mxu0 %v4485
    %v4592 = vpop.f32.mrf.mxu0
    %v4593 = vadd.f32 %v4514, %v4592
    %4594 = vmatmul.f32.gmra.mxu0 %v4486
    %v4595 = vpop.f32.mrf.mxu0
    %v4596 = vadd.f32 %v4514, %v4595
    %4597 = vmatmul.f32.gmra.mxu0 %v4487
    %v4598 = vpop.f32.mrf.mxu0
    %v4599 = vadd.f32 %v4514, %v4598
    %4600 = vmatmul.f32.gmra.mxu0 %v4488
    %v4601 = vpop.f32.mrf.mxu0
    %v4602 = vadd.f32 %v4514, %v4601
    %4603 = vmatmul.f32.gmra.mxu0 %v4489
    %v4604 = vpop.f32.mrf.mxu0
    %v4605 = vadd.f32 %v4514, %v4604
    %4606 = vmatmul.f32.gmra.mxu0 %v4490
    %v4607 = vpop.f32.mrf.mxu0
    %v4608 = vadd.f32 %v4514, %v4607
    %4609 = vmatmul.f32.gmra.mxu0 %v4491
    %v4610 = vpop.f32.mrf.mxu0
    %v4611 = vadd.f32 %v4514, %v4610
    %4612 = vmatmul.f32.gmra.mxu0 %v4492
    %v4613 = vpop.f32.mrf.mxu0
    %v4614 = vadd.f32 %v4514, %v4613
    %4615 = vmatmul.f32.gmra.mxu0 %v4493
    %v4616 = vpop.f32.mrf.mxu0
    %v4617 = vadd.f32 %v4514, %v4616
    %4618 = vmatmul.f32.gmra.mxu0 %v4494
    %v4619 = vpop.f32.mrf.mxu0
    %v4620 = vadd.f32 %v4514, %v4619
    %4621 = vmatmul.f32.gmra.mxu0 %v4495
    %v4622 = vpop.f32.mrf.mxu0
    %v4623 = vadd.f32 %v4514, %v4622
    %4624 = vmatmul.f32.gmra.mxu0 %v4496
    %v4625 = vpop.f32.mrf.mxu0
    %v4626 = vadd.f32 %v4514, %v4625
    %4627 = vdwg.mxu0
    %4628 = vst [vmem:[#allocation5] sm:$0xff] %v4533
    %4629 = vst [vmem:[#allocation5 + $0x8] sm:$0xff] %v4536
    %4630 = vst [vmem:[#allocation5 + $0x10] sm:$0xff] %v4539
    %4631 = vst [vmem:[#allocation5 + $0x18] sm:$0xff] %v4542
    %4632 = vst [vmem:[#allocation5 + $0x20] sm:$0xff] %v4545
    %4633 = vst [vmem:[#allocation5 + $0x28] sm:$0xff] %v4548
    %4634 = vst [vmem:[#allocation5 + $0x30] sm:$0xff] %v4551
    %4635 = vst [vmem:[#allocation5 + $0x38] sm:$0xff] %v4554
    %4636 = vst [vmem:[#allocation5 + $0x40] sm:$0xff] %v4557
    %4637 = vst [vmem:[#allocation5 + $0x48] sm:$0xff] %v4560
    %4638 = vst [vmem:[#allocation5 + $0x50] sm:$0xff] %v4563
    %4639 = vst [vmem:[#allocation5 + $0x58] sm:$0xff] %v4566
    %4640 = vst [vmem:[#allocation5 + $0x60] sm:$0xff] %v4569
    %4641 = vst [vmem:[#allocation5 + $0x68] sm:$0xff] %v4572
    %4642 = vst [vmem:[#allocation5 + $0x70] sm:$0xff] %v4575
    %4643 = vst [vmem:[#allocation5 + $0x78] sm:$0xff] %v4578
    %4644 = vst [vmem:[#allocation5 + $0x80] sm:$0xff] %v4581
    %4645 = vst [vmem:[#allocation5 + $0x88] sm:$0xff] %v4584
    %4646 = vst [vmem:[#allocation5 + $0x90] sm:$0xff] %v4587
    %4647 = vst [vmem:[#allocation5 + $0x98] sm:$0xff] %v4590
    %4648 = vst [vmem:[#allocation5 + $0xa0] sm:$0xff] %v4593
    %4649 = vst [vmem:[#allocation5 + $0xa8] sm:$0xff] %v4596
    %4650 = vst [vmem:[#allocation5 + $0xb0] sm:$0xff] %v4599
    %4651 = vst [vmem:[#allocation5 + $0xb8] sm:$0xff] %v4602
    %4652 = vst [vmem:[#allocation5 + $0xc0] sm:$0xff] %v4605
    %4653 = vst [vmem:[#allocation5 + $0xc8] sm:$0xff] %v4608
    %4654 = vst [vmem:[#allocation5 + $0xd0] sm:$0xff] %v4611
    %4655 = vst [vmem:[#allocation5 + $0xd8] sm:$0xff] %v4614
    %4656 = vst [vmem:[#allocation5 + $0xe0] sm:$0xff] %v4617
    %4657 = vst [vmem:[#allocation5 + $0xe8] sm:$0xff] %v4620
    %4658 = vst [vmem:[#allocation5 + $0xf0] sm:$0xff] %v4623
    %4659 = vst [vmem:[#allocation5 + $0xf8] sm:$0xff] %v4626
    // Predicated region
    $region18: #{tpu_custom_call.1} parent=1 // pred_check
      _
    $region19: #{tpu_custom_call.1} parent=1 // pred_check_branch
      %4661 = sbr.rel (0) target = $region21
    $region20: #{tpu_custom_call.1} parent=1 // pred_region
      %4663 = vsyncadd [#allocation4], 0
      %s4664 = sshll.u32 [#allocation5], 4
      %s4665 = int_to_ptr.vmem [resolvable:$true] %s4664
      %s4666 = sshll.u32 %s3, 4
      %s4667 = int_to_ptr.hbm [resolvable:$true] %s4666
      %4672 = dma.vmem_to_hbm [thread:$0]  %s4665, 4096, %s4667, [#allocation4], 128, 128, 8
    $region21: #{tpu_custom_call.1} parent=1 // pred_fallthru
      _
    // Predicated region
    $region22: #{tpu_custom_call.1} parent=1 // pred_check
      _
    $region23: #{tpu_custom_call.1} parent=1 // pred_check_branch
      %4674 = sbr.rel (0) target = $region25
    $region24: #{tpu_custom_call.1} parent=1 // pred_region
      %4676 = vsyncadd [#allocation7], 0
      %s4678 = sshll.u32 [#allocation6], 4
      %s4679 = int_to_ptr.vmem [resolvable:$true] %s4678
      %s4680 = sshll.u32 %s4, 4
      %s4681 = int_to_ptr.hbm [resolvable:$true] %s4680
      %4683 = dma.vmem_to_hbm [thread:$0]  %s4679, 16, %s4681, [#allocation7]
    $region25: #{tpu_custom_call.1} parent=1 // pred_fallthru
      _
    // Predicated region
    $region26: #{tpu_custom_call.1} parent=1 // pred_check
      _
    $region27: #{tpu_custom_call.1} parent=1 // pred_check_branch
      %4685 = sbr.rel (0) target = $region29
    $region28: #{tpu_custom_call.1} parent=1 // pred_region
      _
    $region29: #{tpu_custom_call.1} parent=1 // pred_fallthru
      _
    // Predicated region
    $region30: #{tpu_custom_call.1} parent=1 // pred_check
      _
    $region31: #{tpu_custom_call.1} parent=1 // pred_check_branch
      %4687 = sbr.rel (0) target = $region33
    $region32: #{tpu_custom_call.1} parent=1 // pred_region
      %4689 = dma.done [#allocation4], 4096
    $region33: #{tpu_custom_call.1} parent=1 // pred_fallthru
      _
    // Predicated region
    $region34: #{tpu_custom_call.1} parent=1 // pred_check
      _
    $region35: #{tpu_custom_call.1} parent=1 // pred_check_branch
      %4691 = sbr.rel (0) target = $region37
    $region36: #{tpu_custom_call.1} parent=1 // pred_region
      %4693 = dma.done [#allocation7], 16
    $region37: #{tpu_custom_call.1} parent=1 // pred_fallthru
      _
    // Predicated region
    $region38: #{tpu_custom_call.1} parent=1 // pred_check
      _
    $region39: #{tpu_custom_call.1} parent=1 // pred_check_branch
      %4695 = sbr.rel (0) target = $region41
    $region40: #{tpu_custom_call.1} parent=1 // pred_region
      _
    $region41: #{tpu_custom_call.1} parent=1 // pred_fallthru
      _
    %4696 = vsyncpa [#allocation3], 1
    %4697 = vsyncpa [#allocation4], 1
    %4698 = vsyncpa [#allocation7], 1

</llo_original>
